<compile_context>
chip_gen: v6e
topology: v6e:2x2x1
jax: 0.10.0
libtpu: 0.0.40
codegen_flags: <defaults>
</compile_context>

<pallas_src>
import functools

import jax
import jax.numpy as jnp
from jax.experimental import pallas as pl
from jax.experimental.pallas import tpu as pltpu


def _layer_norm(v, g, b, eps=1e-5):
    mu = jnp.mean(v, axis=-1, keepdims=True)
    var = jnp.mean((v - mu) ** 2, axis=-1, keepdims=True)
    return (v - mu) * jax.lax.rsqrt(var + eps) * g + b


def gt_decoder_layer_kernel(
    x_ref,                                              # (bt, S, E) f32
    wq_ref, bq_ref, wk_ref, bk_ref, wv_ref, bv_ref,     # (E,E)/(1,E)
    wo_ref, bo_ref,                                     # (E,E)/(1,E)
    ln1_g_ref, ln1_b_ref,                               # (1,E)
    w1_ref, b1_ref,                                     # (E,F)/(1,F)
    w2_ref, b2_ref,                                     # (F,E)/(1,E)
    ln2_g_ref, ln2_b_ref,                               # (1,E)
    out_ref,                                            # (bt, S, E) f32
    *, num_heads, head_dim, kv_chunk, ffn_chunk, approx_recip,
):
    bt, S, E = x_ref.shape
    M = bt * S
    F = w1_ref.shape[1]
    cdt = wq_ref.dtype          # bf16 in the perf path, f32 in reference mode

    # Fold (bt, S) -> M rows: zero-cost leading-dim view (S multiple of 8).
    x = x_ref[...].reshape(M, E)
    residual = x

    # ---------------- self-attention block (pre-LN) ----------------
    h = _layer_norm(x, ln1_g_ref[0], ln1_b_ref[0])
    h_c = h.astype(cdt)
    q = jnp.dot(h_c, wq_ref[...], preferred_element_type=jnp.float32) + bq_ref[0]
    k = jnp.dot(h_c, wk_ref[...], preferred_element_type=jnp.float32) + bk_ref[0]
    v = jnp.dot(h_c, wv_ref[...], preferred_element_type=jnp.float32) + bv_ref[0]
    q = q * (head_dim ** -0.5)                          # fairseq scales q

    def split_heads(t):
        # (M, E) -> (num_heads*bt, S, head_dim): per-head lane slice stacked on
        # a cheap leading batch axis (f32 path, proven lowering).
        parts = [
            t[:, hd * head_dim:(hd + 1) * head_dim].reshape(bt, S, head_dim)
            for hd in range(num_heads)
        ]
        return jnp.concatenate(parts, axis=0)

    qh = split_heads(q).astype(cdt)
    kh = split_heads(k).astype(cdt)
    vh = split_heads(v).astype(cdt)
    HB = num_heads * bt

    # Flash-style online softmax over K/V chunks: never materializes the full
    # (HB, S, S) score/prob tensors.
    n_kv = S // kv_chunk
    m_run = jnp.full((HB, S, 1), -jnp.inf, jnp.float32)
    l_run = jnp.zeros((HB, S, 1), jnp.float32)
    acc = jnp.zeros((HB, S, head_dim), jnp.float32)
    for c in range(n_kv):
        k_c = kh[:, c * kv_chunk:(c + 1) * kv_chunk, :]
        v_c = vh[:, c * kv_chunk:(c + 1) * kv_chunk, :]
        s = jnp.einsum('bqd,bkd->bqk', qh, k_c,
                       preferred_element_type=jnp.float32)
        m_new = jnp.maximum(m_run, jnp.max(s, axis=-1, keepdims=True))
        alpha = jnp.exp(m_run - m_new)
        p = jnp.exp(s - m_new)
        l_run = alpha * l_run + jnp.sum(p, axis=-1, keepdims=True)
        acc = alpha * acc + jnp.einsum('bqk,bkd->bqd', p.astype(cdt), v_c,
                                       preferred_element_type=jnp.float32)
        m_run = m_new
    o = acc * pl.reciprocal(l_run, approx=approx_recip)   # f32

    # Merge heads back: leading-dim slice per head + lane concat -> (M, E).
    attn = jnp.concatenate(
        [o[hd * bt:(hd + 1) * bt].reshape(M, head_dim)
         for hd in range(num_heads)],
        axis=-1,
    )
    attn = jnp.dot(attn.astype(cdt), wo_ref[...],
                   preferred_element_type=jnp.float32) + bo_ref[0]

    x1 = residual + attn                                # dropout = identity (eval)

    # ---------------- FFN block (pre-LN), F-chunked ----------------
    h2 = _layer_norm(x1, ln2_g_ref[0], ln2_b_ref[0]).astype(cdt)
    b1_full = b1_ref[0]
    n_f = F // ffn_chunk
    y = jnp.zeros((M, E), jnp.float32)
    for c in range(n_f):
        lo = c * ffn_chunk
        w1_c = w1_ref[:, lo:lo + ffn_chunk]
        f = jnp.dot(h2, w1_c, preferred_element_type=jnp.float32)
        f = f + b1_full[lo:lo + ffn_chunk]
        f = jnp.maximum(f, 0.0).astype(cdt)             # relu activation_fn
        y = y + jnp.dot(f, w2_ref[lo:lo + ffn_chunk, :],
                        preferred_element_type=jnp.float32)
    y = y + b2_ref[0]

    out_ref[...] = (x1 + y).reshape(bt, S, E)


def _pick_batch_tile(B, S, target_rows=512):
    """Divisor of B giving >= target_rows MXU rows, while keeping >= 2 grid
    steps when B >= 2 (so v7x's second TensorCore is not idle)."""
    cands = [d for d in range(1, B + 1) if B % d == 0]
    if B >= 2:
        cands = [d for d in cands if d <= B // 2]
    for d in cands:
        if d * S >= target_rows:
            return d
    return cands[-1]


def _vmem_limit_bytes():
    try:
        kind = jax.devices()[0].device_kind.lower()
    except Exception:
        kind = ""
    if "v7" in kind:
        return 56 * 1024 * 1024          # 64 MiB physical on v7x
    if any(t in kind for t in ("v4", "v5", "v6")):
        return 100 * 1024 * 1024         # 128 MiB physical
    return 56 * 1024 * 1024              # conservative default


def gt_decoder_layer_bse(x_bse, params, num_heads, *, batch_tile=None,
                         use_bf16=True, kv_chunk=None, ffn_chunk=None):
    """Core entry point with (batch, seq, embed) layout (no HBM transposes)."""
    B, S, E = x_bse.shape
    assert E % num_heads == 0
    head_dim = E // num_heads
    F = params["w1"].shape[1]

    bt = batch_tile or _pick_batch_tile(B, S)
    assert B % bt == 0
    kv_chunk = kv_chunk or min(S, 512)
    ffn_chunk = ffn_chunk or min(F, 2048)
    assert S % kv_chunk == 0 and F % ffn_chunk == 0

    wdt = jnp.bfloat16 if use_bf16 else jnp.float32

    def w(name):
        return params[name].astype(wdt)

    def vec2d(name):
        return params[name].reshape(1, -1).astype(jnp.float32)

    weight_args = [
        w("wq"), vec2d("bq"), w("wk"), vec2d("bk"), w("wv"), vec2d("bv"),
        w("wo"), vec2d("bo"),
        vec2d("ln1_g"), vec2d("ln1_b"),
        w("w1"), vec2d("b1"), w("w2"), vec2d("b2"),
        vec2d("ln2_g"), vec2d("ln2_b"),
    ]

    kernel = functools.partial(
        gt_decoder_layer_kernel, num_heads=num_heads, head_dim=head_dim,
        kv_chunk=kv_chunk, ffn_chunk=ffn_chunk, approx_recip=use_bf16)

    x_spec = pl.BlockSpec((bt, S, E), lambda b: (b, 0, 0))
    out_spec = pl.BlockSpec((bt, S, E), lambda b: (b, 0, 0))

    def build_weight_specs(single_buffer):
        # Full-array, constant-index weight blocks: DMA'd once, resident across
        # the whole grid.  Single-buffered so resident weight VMEM is not 2x.
        kw = dict(pipeline_mode=pl.Buffered(1)) if single_buffer else {}
        return [pl.BlockSpec(a.shape, lambda b: (0, 0), **kw)
                for a in weight_args]

    def run(single_buffer):
        return pl.pallas_call(
            kernel,
            grid=(B // bt,),
            in_specs=[x_spec] + build_weight_specs(single_buffer),
            out_specs=out_spec,
            out_shape=jax.ShapeDtypeStruct((B, S, E), jnp.float32),
            compiler_params=pltpu.CompilerParams(
                dimension_semantics=("parallel",),
                vmem_limit_bytes=_vmem_limit_bytes()),
        )(x_bse, *weight_args)

    try:
        return run(True)
    except Exception:
        # pl.Buffered(1) unsupported in this JAX build: fall back to default
        # (double-buffered) weight blocks; semantics are identical.
        return run(False)


def gt_decoder_layer(x_sbe, params, num_heads, **kwargs):
    """fairseq layout entry point: (seq, batch, embed) -> (seq, batch, embed).

    Keeps two wrapper transposes for layout compatibility; for layer stacks
    prefer gt_decoder_layer_bse and keep (B, S, E) between layers to avoid
    the two extra HBM passes."""
    x_bse = jnp.transpose(x_sbe, (1, 0, 2))
    out = gt_decoder_layer_bse(x_bse, params, num_heads, **kwargs)
    return jnp.transpose(out, (1, 0, 2))


def reference(x_sbe, params, num_heads):
    # Pure-JAX reference of the same forward pass (for correctness check).
    S, B, E = x_sbe.shape
    head_dim = E // num_heads

    def ln(v, g, b):
        mu = v.mean(-1, keepdims=True)
        var = ((v - mu) ** 2).mean(-1, keepdims=True)
        return (v - mu) / jnp.sqrt(var + 1e-5) * g + b

    x = x_sbe
    residual = x
    h = ln(x, params["ln1_g"], params["ln1_b"])
    q = (h @ params["wq"] + params["bq"]) * head_dim ** -0.5
    k = h @ params["wk"] + params["bk"]
    v = h @ params["wv"] + params["bv"]
    qh = q.reshape(S, B, num_heads, head_dim)
    kh = k.reshape(S, B, num_heads, head_dim)
    vh = v.reshape(S, B, num_heads, head_dim)
    s = jnp.einsum("qbhd,kbhd->bhqk", qh, kh)
    p = jax.nn.softmax(s, axis=-1)
    o = jnp.einsum("bhqk,kbhd->qbhd", p, vh).reshape(S, B, E)
    attn = o @ params["wo"] + params["bo"]
    x = residual + attn
    residual = x
    h = ln(x, params["ln2_g"], params["ln2_b"])
    f = jnp.maximum(h @ params["w1"] + params["b1"], 0.0)
    f = f @ params["w2"] + params["b2"]
    return residual + f


def make_params(key, E, F):
    ks = jax.random.split(key, 8)
    sc = 0.1
    return {
        "wq": sc * jax.random.normal(ks[0], (E, E), jnp.float32),
        "bq": jnp.zeros((E,), jnp.float32),
        "wk": sc * jax.random.normal(ks[1], (E, E), jnp.float32),
        "bk": jnp.zeros((E,), jnp.float32),
        "wv": sc * jax.random.normal(ks[2], (E, E), jnp.float32),
        "bv": jnp.zeros((E,), jnp.float32),
        "wo": sc * jax.random.normal(ks[3], (E, E), jnp.float32),
        "bo": 0.01 * jnp.ones((E,), jnp.float32),
        "ln1_g": jnp.ones((E,), jnp.float32),
        "ln1_b": jnp.zeros((E,), jnp.float32),
        "w1": sc * jax.random.normal(ks[4], (E, F), jnp.float32),
        "b1": 0.01 * jnp.ones((F,), jnp.float32),
        "w2": sc * jax.random.normal(ks[5], (F, E), jnp.float32),
        "b2": 0.01 * jnp.ones((E,), jnp.float32),
        "ln2_g": jnp.ones((E,), jnp.float32),
        "ln2_b": jnp.zeros((E,), jnp.float32),
    }


if __name__ == "__main__":
    SEQ, BATCH, EMBED, HEADS, FFN = 8, 4, 32, 4, 64
    key = jax.random.PRNGKey(0)
    kx, kp = jax.random.split(key)
    x = jax.random.normal(kx, (SEQ, BATCH, EMBED), jnp.float32)  # (seq, batch, embed)
    params = make_params(kp, EMBED, FFN)

    ref = reference(x, params, HEADS)

    # 1) f32 correctness mode: exact reciprocal, single KV/F chunk, tight tol.
    #    (default _pick_batch_tile -> bt=2, grid=2: exercises >=2 parallel steps)
    out_f32 = jax.block_until_ready(
        gt_decoder_layer(x, params, HEADS, use_bf16=False))
    assert out_f32.shape == (SEQ, BATCH, EMBED)
    assert jnp.allclose(out_f32, ref, atol=1e-4, rtol=1e-4), \
        "f32 mode mismatch vs JAX reference"

    # 2) performance mode: bf16 matmuls + approx reciprocal, and small KV/F
    #    chunk sizes chosen to exercise the multi-chunk (flash / F-tiled) paths.
    out_bf16 = jax.block_until_ready(
        gt_decoder_layer(x, params, HEADS, use_bf16=True,
                         kv_chunk=SEQ // 2, ffn_chunk=FFN // 2))
    assert out_bf16.shape == (SEQ, BATCH, EMBED)
    assert jnp.allclose(out_bf16, ref, atol=3e-2, rtol=3e-2), \
        "bf16 mode mismatch vs JAX reference"

    # TODO(synk): encoder-attention branch (build_encoder_attention raises
    # NotImplementedError in the reference module), incremental_state /
    # prev_*_state caching, self_attn_mask / key_padding_mask, and the returned
    # attention weights are not represented; dropout modules are identity (eval).
    print("KERNEL_OK")
</pallas_src>

<mosaic_0001>
module attributes {stable_mosaic.version = 11 : i64} {
  func.func @gt_decoder_layer_kernel(%arg0: i32, %arg1: memref<2x8x32xf32, #tpu.memory_space<vmem>>, %arg2: memref<32x32xf32, #tpu.memory_space<vmem>>, %arg3: memref<1x32xf32, #tpu.memory_space<vmem>>, %arg4: memref<32x32xf32, #tpu.memory_space<vmem>>, %arg5: memref<1x32xf32, #tpu.memory_space<vmem>>, %arg6: memref<32x32xf32, #tpu.memory_space<vmem>>, %arg7: memref<1x32xf32, #tpu.memory_space<vmem>>, %arg8: memref<32x32xf32, #tpu.memory_space<vmem>>, %arg9: memref<1x32xf32, #tpu.memory_space<vmem>>, %arg10: memref<1x32xf32, #tpu.memory_space<vmem>>, %arg11: memref<1x32xf32, #tpu.memory_space<vmem>>, %arg12: memref<32x64xf32, #tpu.memory_space<vmem>>, %arg13: memref<1x64xf32, #tpu.memory_space<vmem>>, %arg14: memref<64x32xf32, #tpu.memory_space<vmem>>, %arg15: memref<1x32xf32, #tpu.memory_space<vmem>>, %arg16: memref<1x32xf32, #tpu.memory_space<vmem>>, %arg17: memref<1x32xf32, #tpu.memory_space<vmem>>, %arg18: memref<2x8x32xf32, #tpu.memory_space<vmem>>) attributes {dimension_semantics = [#tpu.dimension_semantics<parallel>], iteration_bounds = array<i64: 2>, scalar_prefetch = 0 : i64, scratch_operands = 0 : i64, tpu.core_type = #tpu.core_type<tc>, window_params = [{transform_indices = @transform_0, window_bounds = array<i64: 2, 8, 32>}, {pipeline_mode = #tpu.pipeline_mode<synchronous>, transform_indices = @transform_1, window_bounds = array<i64: 32, 32>}, {pipeline_mode = #tpu.pipeline_mode<synchronous>, transform_indices = @transform_2, window_bounds = array<i64: 1, 32>}, {pipeline_mode = #tpu.pipeline_mode<synchronous>, transform_indices = @transform_3, window_bounds = array<i64: 32, 32>}, {pipeline_mode = #tpu.pipeline_mode<synchronous>, transform_indices = @transform_4, window_bounds = array<i64: 1, 32>}, {pipeline_mode = #tpu.pipeline_mode<synchronous>, transform_indices = @transform_5, window_bounds = array<i64: 32, 32>}, {pipeline_mode = #tpu.pipeline_mode<synchronous>, transform_indices = @transform_6, window_bounds = array<i64: 1, 32>}, {pipeline_mode = #tpu.pipeline_mode<synchronous>, transform_indices = @transform_7, window_bounds = array<i64: 32, 32>}, {pipeline_mode = #tpu.pipeline_mode<synchronous>, transform_indices = @transform_8, window_bounds = array<i64: 1, 32>}, {pipeline_mode = #tpu.pipeline_mode<synchronous>, transform_indices = @transform_9, window_bounds = array<i64: 1, 32>}, {pipeline_mode = #tpu.pipeline_mode<synchronous>, transform_indices = @transform_10, window_bounds = array<i64: 1, 32>}, {pipeline_mode = #tpu.pipeline_mode<synchronous>, transform_indices = @transform_11, window_bounds = array<i64: 32, 64>}, {pipeline_mode = #tpu.pipeline_mode<synchronous>, transform_indices = @transform_12, window_bounds = array<i64: 1, 64>}, {pipeline_mode = #tpu.pipeline_mode<synchronous>, transform_indices = @transform_13, window_bounds = array<i64: 64, 32>}, {pipeline_mode = #tpu.pipeline_mode<synchronous>, transform_indices = @transform_14, window_bounds = array<i64: 1, 32>}, {pipeline_mode = #tpu.pipeline_mode<synchronous>, transform_indices = @transform_15, window_bounds = array<i64: 1, 32>}, {pipeline_mode = #tpu.pipeline_mode<synchronous>, transform_indices = @transform_16, window_bounds = array<i64: 1, 32>}, {transform_indices = @transform_17, window_bounds = array<i64: 2, 8, 32>}]} {
    %c0 = arith.constant 0 : index
    %c0_0 = arith.constant 0 : index
    %c0_1 = arith.constant 0 : index
    %0 = vector.load %arg1[%c0, %c0_0, %c0_1] : memref<2x8x32xf32, #tpu.memory_space<vmem>>, vector<2x8x32xf32>
    %1 = vector.shape_cast %0 : vector<2x8x32xf32> to vector<16x32xf32>
    %c0_2 = arith.constant 0 : index
    %c0_3 = arith.constant 0 : index
    %2 = vector.load %arg10[%c0_2, %c0_3] : memref<1x32xf32, #tpu.memory_space<vmem>>, vector<1x32xf32>
    %3 = vector.shape_cast %2 : vector<1x32xf32> to vector<32xf32>
    %c0_4 = arith.constant 0 : index
    %c0_5 = arith.constant 0 : index
    %4 = vector.load %arg11[%c0_4, %c0_5] : memref<1x32xf32, #tpu.memory_space<vmem>>, vector<1x32xf32>
    %5 = vector.shape_cast %4 : vector<1x32xf32> to vector<32xf32>
    %cst = arith.constant dense<0.000000e+00> : vector<16xf32>
    %6 = vector.multi_reduction <add>, %1, %cst [1] : vector<16x32xf32> to vector<16xf32>
    %7 = vector.shape_cast %6 : vector<16xf32> to vector<16x1xf32>
    %cst_6 = arith.constant 3.200000e+01 : f32
    %8 = vector.broadcast %cst_6 : f32 to vector<16x1xf32>
    %9 = arith.divf %7, %8 : vector<16x1xf32>
    %10 = vector.broadcast %9 : vector<16x1xf32> to vector<16x32xf32>
    %11 = arith.subf %1, %10 : vector<16x32xf32>
    %12 = arith.mulf %11, %11 : vector<16x32xf32>
    %cst_7 = arith.constant dense<0.000000e+00> : vector<16xf32>
    %13 = vector.multi_reduction <add>, %12, %cst_7 [1] : vector<16x32xf32> to vector<16xf32>
    %14 = vector.shape_cast %13 : vector<16xf32> to vector<16x1xf32>
    %cst_8 = arith.constant 3.200000e+01 : f32
    %15 = vector.broadcast %cst_8 : f32 to vector<16x1xf32>
    %16 = arith.divf %14, %15 : vector<16x1xf32>
    %17 = vector.broadcast %9 : vector<16x1xf32> to vector<16x32xf32>
    %18 = arith.subf %1, %17 : vector<16x32xf32>
    %cst_9 = arith.constant 9.99999974E-6 : f32
    %19 = vector.broadcast %cst_9 : f32 to vector<16x1xf32>
    %20 = arith.addf %16, %19 : vector<16x1xf32>
    %21 = math.rsqrt %20 : vector<16x1xf32>
    %22 = vector.broadcast %21 : vector<16x1xf32> to vector<16x32xf32>
    %23 = arith.mulf %18, %22 : vector<16x32xf32>
    %24 = vector.shape_cast %3 : vector<32xf32> to vector<1x32xf32>
    %25 = vector.broadcast %24 : vector<1x32xf32> to vector<16x32xf32>
    %26 = arith.mulf %23, %25 : vector<16x32xf32>
    %27 = vector.shape_cast %5 : vector<32xf32> to vector<1x32xf32>
    %28 = vector.broadcast %27 : vector<1x32xf32> to vector<16x32xf32>
    %29 = arith.addf %26, %28 : vector<16x32xf32>
    %c0_10 = arith.constant 0 : index
    %c0_11 = arith.constant 0 : index
    %30 = vector.load %arg2[%c0_10, %c0_11] : memref<32x32xf32, #tpu.memory_space<vmem>>, vector<32x32xf32>
    %cst_12 = arith.constant dense<0.000000e+00> : vector<16x32xf32>
    %31 = tpu.matmul %29, %30, %cst_12 {dimension_numbers = #tpu.dot_dimension_numbers<[1], [0], [0], [1], [0, 0, 1, 1], [], []>} : vector<16x32xf32>, vector<32x32xf32>, vector<16x32xf32> -> vector<16x32xf32>
    %c0_13 = arith.constant 0 : index
    %c0_14 = arith.constant 0 : index
    %32 = vector.load %arg3[%c0_13, %c0_14] : memref<1x32xf32, #tpu.memory_space<vmem>>, vector<1x32xf32>
    %33 = vector.shape_cast %32 : vector<1x32xf32> to vector<32xf32>
    %34 = vector.shape_cast %33 : vector<32xf32> to vector<1x32xf32>
    %35 = vector.broadcast %34 : vector<1x32xf32> to vector<16x32xf32>
    %36 = arith.addf %31, %35 : vector<16x32xf32>
    %c0_15 = arith.constant 0 : index
    %c0_16 = arith.constant 0 : index
    %37 = vector.load %arg4[%c0_15, %c0_16] : memref<32x32xf32, #tpu.memory_space<vmem>>, vector<32x32xf32>
    %cst_17 = arith.constant dense<0.000000e+00> : vector<16x32xf32>
    %38 = tpu.matmul %29, %37, %cst_17 {dimension_numbers = #tpu.dot_dimension_numbers<[1], [0], [0], [1], [0, 0, 1, 1], [], []>} : vector<16x32xf32>, vector<32x32xf32>, vector<16x32xf32> -> vector<16x32xf32>
    %c0_18 = arith.constant 0 : index
    %c0_19 = arith.constant 0 : index
    %39 = vector.load %arg5[%c0_18, %c0_19] : memref<1x32xf32, #tpu.memory_space<vmem>>, vector<1x32xf32>
    %40 = vector.shape_cast %39 : vector<1x32xf32> to vector<32xf32>
    %41 = vector.shape_cast %40 : vector<32xf32> to vector<1x32xf32>
    %42 = vector.broadcast %41 : vector<1x32xf32> to vector<16x32xf32>
    %43 = arith.addf %38, %42 : vector<16x32xf32>
    %c0_20 = arith.constant 0 : index
    %c0_21 = arith.constant 0 : index
    %44 = vector.load %arg6[%c0_20, %c0_21] : memref<32x32xf32, #tpu.memory_space<vmem>>, vector<32x32xf32>
    %cst_22 = arith.constant dense<0.000000e+00> : vector<16x32xf32>
    %45 = tpu.matmul %29, %44, %cst_22 {dimension_numbers = #tpu.dot_dimension_numbers<[1], [0], [0], [1], [0, 0, 1, 1], [], []>} : vector<16x32xf32>, vector<32x32xf32>, vector<16x32xf32> -> vector<16x32xf32>
    %c0_23 = arith.constant 0 : index
    %c0_24 = arith.constant 0 : index
    %46 = vector.load %arg7[%c0_23, %c0_24] : memref<1x32xf32, #tpu.memory_space<vmem>>, vector<1x32xf32>
    %47 = vector.shape_cast %46 : vector<1x32xf32> to vector<32xf32>
    %48 = vector.shape_cast %47 : vector<32xf32> to vector<1x32xf32>
    %49 = vector.broadcast %48 : vector<1x32xf32> to vector<16x32xf32>
    %50 = arith.addf %45, %49 : vector<16x32xf32>
    %cst_25 = arith.constant 0.353553385 : f32
    %51 = vector.broadcast %cst_25 : f32 to vector<16x32xf32>
    %52 = arith.mulf %36, %51 : vector<16x32xf32>
    %53 = vector.extract_strided_slice %52 {offsets = [0, 0], sizes = [16, 8], strides = [1, 1]} : vector<16x32xf32> to vector<16x8xf32>
    %54 = vector.shape_cast %53 : vector<16x8xf32> to vector<2x8x8xf32>
    %55 = vector.extract_strided_slice %52 {offsets = [0, 8], sizes = [16, 8], strides = [1, 1]} : vector<16x32xf32> to vector<16x8xf32>
    %56 = vector.shape_cast %55 : vector<16x8xf32> to vector<2x8x8xf32>
    %57 = vector.extract_strided_slice %52 {offsets = [0, 16], sizes = [16, 8], strides = [1, 1]} : vector<16x32xf32> to vector<16x8xf32>
    %58 = vector.shape_cast %57 : vector<16x8xf32> to vector<2x8x8xf32>
    %59 = vector.extract_strided_slice %52 {offsets = [0, 24], sizes = [16, 8], strides = [1, 1]} : vector<16x32xf32> to vector<16x8xf32>
    %60 = vector.shape_cast %59 : vector<16x8xf32> to vector<2x8x8xf32>
    %61 = tpu.concatenate %54, %56, %58, %60 in 0 : vector<2x8x8xf32>, vector<2x8x8xf32>, vector<2x8x8xf32>, vector<2x8x8xf32> -> vector<8x8x8xf32>
    %62 = vector.extract_strided_slice %43 {offsets = [0, 0], sizes = [16, 8], strides = [1, 1]} : vector<16x32xf32> to vector<16x8xf32>
    %63 = vector.shape_cast %62 : vector<16x8xf32> to vector<2x8x8xf32>
    %64 = vector.extract_strided_slice %43 {offsets = [0, 8], sizes = [16, 8], strides = [1, 1]} : vector<16x32xf32> to vector<16x8xf32>
    %65 = vector.shape_cast %64 : vector<16x8xf32> to vector<2x8x8xf32>
    %66 = vector.extract_strided_slice %43 {offsets = [0, 16], sizes = [16, 8], strides = [1, 1]} : vector<16x32xf32> to vector<16x8xf32>
    %67 = vector.shape_cast %66 : vector<16x8xf32> to vector<2x8x8xf32>
    %68 = vector.extract_strided_slice %43 {offsets = [0, 24], sizes = [16, 8], strides = [1, 1]} : vector<16x32xf32> to vector<16x8xf32>
    %69 = vector.shape_cast %68 : vector<16x8xf32> to vector<2x8x8xf32>
    %70 = tpu.concatenate %63, %65, %67, %69 in 0 : vector<2x8x8xf32>, vector<2x8x8xf32>, vector<2x8x8xf32>, vector<2x8x8xf32> -> vector<8x8x8xf32>
    %71 = vector.extract_strided_slice %50 {offsets = [0, 0], sizes = [16, 8], strides = [1, 1]} : vector<16x32xf32> to vector<16x8xf32>
    %72 = vector.shape_cast %71 : vector<16x8xf32> to vector<2x8x8xf32>
    %73 = vector.extract_strided_slice %50 {offsets = [0, 8], sizes = [16, 8], strides = [1, 1]} : vector<16x32xf32> to vector<16x8xf32>
    %74 = vector.shape_cast %73 : vector<16x8xf32> to vector<2x8x8xf32>
    %75 = vector.extract_strided_slice %50 {offsets = [0, 16], sizes = [16, 8], strides = [1, 1]} : vector<16x32xf32> to vector<16x8xf32>
    %76 = vector.shape_cast %75 : vector<16x8xf32> to vector<2x8x8xf32>
    %77 = vector.extract_strided_slice %50 {offsets = [0, 24], sizes = [16, 8], strides = [1, 1]} : vector<16x32xf32> to vector<16x8xf32>
    %78 = vector.shape_cast %77 : vector<16x8xf32> to vector<2x8x8xf32>
    %79 = tpu.concatenate %72, %74, %76, %78 in 0 : vector<2x8x8xf32>, vector<2x8x8xf32>, vector<2x8x8xf32>, vector<2x8x8xf32> -> vector<8x8x8xf32>
    %cst_26 = arith.constant 0xFF800000 : f32
    %80 = vector.broadcast %cst_26 : f32 to vector<8x8x1xf32>
    %cst_27 = arith.constant 0.000000e+00 : f32
    %81 = vector.broadcast %cst_27 : f32 to vector<8x8x1xf32>
    %cst_28 = arith.constant 0.000000e+00 : f32
    %82 = vector.broadcast %cst_28 : f32 to vector<8x8x8xf32>
    "tpu.trace_start"() <{level = 10 : i32, message = "bqd,bkd->bqk"}> : () -> ()
    %cst_29 = arith.constant dense<0.000000e+00> : vector<8x8x8xf32>
    %83 = tpu.matmul %61, %70, %cst_29 {dimension_numbers = #tpu.dot_dimension_numbers<[2], [2], [1], [1], [0, 0, 0, 1, 1, 1], [0], [0]>} : vector<8x8x8xf32>, vector<8x8x8xf32>, vector<8x8x8xf32> -> vector<8x8x8xf32>
    "tpu.trace_stop"() : () -> ()
    %cst_30 = arith.constant dense<0xFF800000> : vector<8x8xf32>
    %84 = vector.multi_reduction <maximumf>, %83, %cst_30 [2] : vector<8x8x8xf32> to vector<8x8xf32>
    %85 = vector.shape_cast %84 : vector<8x8xf32> to vector<8x8x1xf32>
    %86 = arith.maximumf %80, %85 : vector<8x8x1xf32>
    %87 = arith.subf %80, %86 : vector<8x8x1xf32>
    %88 = math.exp %87 : vector<8x8x1xf32>
    %89 = vector.broadcast %86 : vector<8x8x1xf32> to vector<8x8x8xf32>
    %90 = arith.subf %83, %89 : vector<8x8x8xf32>
    %91 = math.exp %90 : vector<8x8x8xf32>
    %92 = arith.mulf %88, %81 : vector<8x8x1xf32>
    %cst_31 = arith.constant dense<0.000000e+00> : vector<8x8xf32>
    %93 = vector.multi_reduction <add>, %91, %cst_31 [2] : vector<8x8x8xf32> to vector<8x8xf32>
    %94 = vector.shape_cast %93 : vector<8x8xf32> to vector<8x8x1xf32>
    %95 = arith.addf %92, %94 : vector<8x8x1xf32>
    %96 = vector.broadcast %88 : vector<8x8x1xf32> to vector<8x8x8xf32>
    %97 = arith.mulf %96, %82 : vector<8x8x8xf32>
    "tpu.trace_start"() <{level = 10 : i32, message = "bqk,bkd->bqd"}> : () -> ()
    %cst_32 = arith.constant dense<0.000000e+00> : vector<8x8x8xf32>
    %98 = tpu.matmul %91, %79, %cst_32 {dimension_numbers = #tpu.dot_dimension_numbers<[2], [1], [1], [2], [0, 0, 0, 1, 1, 2], [0], [0]>} : vector<8x8x8xf32>, vector<8x8x8xf32>, vector<8x8x8xf32> -> vector<8x8x8xf32>
    "tpu.trace_stop"() : () -> ()
    %99 = arith.addf %97, %98 : vector<8x8x8xf32>
    %100 = tpu.reciprocal %95 : vector<8x8x1xf32> -> vector<8x8x1xf32>
    %101 = vector.broadcast %100 : vector<8x8x1xf32> to vector<8x8x8xf32>
    %102 = arith.mulf %99, %101 : vector<8x8x8xf32>
    %103 = vector.extract_strided_slice %102 {offsets = [0, 0, 0], sizes = [2, 8, 8], strides = [1, 1, 1]} : vector<8x8x8xf32> to vector<2x8x8xf32>
    %104 = vector.shape_cast %103 : vector<2x8x8xf32> to vector<16x8xf32>
    %105 = vector.extract_strided_slice %102 {offsets = [2, 0, 0], sizes = [2, 8, 8], strides = [1, 1, 1]} : vector<8x8x8xf32> to vector<2x8x8xf32>
    %106 = vector.shape_cast %105 : vector<2x8x8xf32> to vector<16x8xf32>
    %107 = vector.extract_strided_slice %102 {offsets = [4, 0, 0], sizes = [2, 8, 8], strides = [1, 1, 1]} : vector<8x8x8xf32> to vector<2x8x8xf32>
    %108 = vector.shape_cast %107 : vector<2x8x8xf32> to vector<16x8xf32>
    %109 = vector.extract_strided_slice %102 {offsets = [6, 0, 0], sizes = [2, 8, 8], strides = [1, 1, 1]} : vector<8x8x8xf32> to vector<2x8x8xf32>
    %110 = vector.shape_cast %109 : vector<2x8x8xf32> to vector<16x8xf32>
    %111 = tpu.concatenate %104, %106, %108, %110 in 1 : vector<16x8xf32>, vector<16x8xf32>, vector<16x8xf32>, vector<16x8xf32> -> vector<16x32xf32>
    %c0_33 = arith.constant 0 : index
    %c0_34 = arith.constant 0 : index
    %112 = vector.load %arg8[%c0_33, %c0_34] : memref<32x32xf32, #tpu.memory_space<vmem>>, vector<32x32xf32>
    %cst_35 = arith.constant dense<0.000000e+00> : vector<16x32xf32>
    %113 = tpu.matmul %111, %112, %cst_35 {dimension_numbers = #tpu.dot_dimension_numbers<[1], [0], [0], [1], [0, 0, 1, 1], [], []>} : vector<16x32xf32>, vector<32x32xf32>, vector<16x32xf32> -> vector<16x32xf32>
    %c0_36 = arith.constant 0 : index
    %c0_37 = arith.constant 0 : index
    %114 = vector.load %arg9[%c0_36, %c0_37] : memref<1x32xf32, #tpu.memory_space<vmem>>, vector<1x32xf32>
    %115 = vector.shape_cast %114 : vector<1x32xf32> to vector<32xf32>
    %116 = vector.shape_cast %115 : vector<32xf32> to vector<1x32xf32>
    %117 = vector.broadcast %116 : vector<1x32xf32> to vector<16x32xf32>
    %118 = arith.addf %113, %117 : vector<16x32xf32>
    %119 = arith.addf %1, %118 : vector<16x32xf32>
    %c0_38 = arith.constant 0 : index
    %c0_39 = arith.constant 0 : index
    %120 = vector.load %arg16[%c0_38, %c0_39] : memref<1x32xf32, #tpu.memory_space<vmem>>, vector<1x32xf32>
    %121 = vector.shape_cast %120 : vector<1x32xf32> to vector<32xf32>
    %c0_40 = arith.constant 0 : index
    %c0_41 = arith.constant 0 : index
    %122 = vector.load %arg17[%c0_40, %c0_41] : memref<1x32xf32, #tpu.memory_space<vmem>>, vector<1x32xf32>
    %123 = vector.shape_cast %122 : vector<1x32xf32> to vector<32xf32>
    %cst_42 = arith.constant dense<0.000000e+00> : vector<16xf32>
    %124 = vector.multi_reduction <add>, %119, %cst_42 [1] : vector<16x32xf32> to vector<16xf32>
    %125 = vector.shape_cast %124 : vector<16xf32> to vector<16x1xf32>
    %cst_43 = arith.constant 3.200000e+01 : f32
    %126 = vector.broadcast %cst_43 : f32 to vector<16x1xf32>
    %127 = arith.divf %125, %126 : vector<16x1xf32>
    %128 = vector.broadcast %127 : vector<16x1xf32> to vector<16x32xf32>
    %129 = arith.subf %119, %128 : vector<16x32xf32>
    %130 = arith.mulf %129, %129 : vector<16x32xf32>
    %cst_44 = arith.constant dense<0.000000e+00> : vector<16xf32>
    %131 = vector.multi_reduction <add>, %130, %cst_44 [1] : vector<16x32xf32> to vector<16xf32>
    %132 = vector.shape_cast %131 : vector<16xf32> to vector<16x1xf32>
    %cst_45 = arith.constant 3.200000e+01 : f32
    %133 = vector.broadcast %cst_45 : f32 to vector<16x1xf32>
    %134 = arith.divf %132, %133 : vector<16x1xf32>
    %135 = vector.broadcast %127 : vector<16x1xf32> to vector<16x32xf32>
    %136 = arith.subf %119, %135 : vector<16x32xf32>
    %cst_46 = arith.constant 9.99999974E-6 : f32
    %137 = vector.broadcast %cst_46 : f32 to vector<16x1xf32>
    %138 = arith.addf %134, %137 : vector<16x1xf32>
    %139 = math.rsqrt %138 : vector<16x1xf32>
    %140 = vector.broadcast %139 : vector<16x1xf32> to vector<16x32xf32>
    %141 = arith.mulf %136, %140 : vector<16x32xf32>
    %142 = vector.shape_cast %121 : vector<32xf32> to vector<1x32xf32>
    %143 = vector.broadcast %142 : vector<1x32xf32> to vector<16x32xf32>
    %144 = arith.mulf %141, %143 : vector<16x32xf32>
    %145 = vector.shape_cast %123 : vector<32xf32> to vector<1x32xf32>
    %146 = vector.broadcast %145 : vector<1x32xf32> to vector<16x32xf32>
    %147 = arith.addf %144, %146 : vector<16x32xf32>
    %c0_47 = arith.constant 0 : index
    %c0_48 = arith.constant 0 : index
    %148 = vector.load %arg13[%c0_47, %c0_48] : memref<1x64xf32, #tpu.memory_space<vmem>>, vector<1x64xf32>
    %149 = vector.shape_cast %148 : vector<1x64xf32> to vector<64xf32>
    %cst_49 = arith.constant 0.000000e+00 : f32
    %150 = vector.broadcast %cst_49 : f32 to vector<16x32xf32>
    %c0_50 = arith.constant 0 : index
    %c0_51 = arith.constant 0 : index
    %151 = vector.load %arg12[%c0_50, %c0_51] : memref<32x64xf32, #tpu.memory_space<vmem>>, vector<32x64xf32>
    %cst_52 = arith.constant dense<0.000000e+00> : vector<16x64xf32>
    %152 = tpu.matmul %147, %151, %cst_52 {dimension_numbers = #tpu.dot_dimension_numbers<[1], [0], [0], [1], [0, 0, 1, 1], [], []>} : vector<16x32xf32>, vector<32x64xf32>, vector<16x64xf32> -> vector<16x64xf32>
    %153 = vector.shape_cast %149 : vector<64xf32> to vector<1x64xf32>
    %154 = vector.broadcast %153 : vector<1x64xf32> to vector<16x64xf32>
    %155 = arith.addf %152, %154 : vector<16x64xf32>
    %cst_53 = arith.constant 0.000000e+00 : f32
    %156 = vector.broadcast %cst_53 : f32 to vector<16x64xf32>
    %157 = arith.maximumf %155, %156 : vector<16x64xf32>
    %c0_54 = arith.constant 0 : index
    %c0_55 = arith.constant 0 : index
    %158 = vector.load %arg14[%c0_54, %c0_55] : memref<64x32xf32, #tpu.memory_space<vmem>>, vector<64x32xf32>
    %cst_56 = arith.constant dense<0.000000e+00> : vector<16x32xf32>
    %159 = tpu.matmul %157, %158, %cst_56 {dimension_numbers = #tpu.dot_dimension_numbers<[1], [0], [0], [1], [0, 0, 1, 1], [], []>} : vector<16x64xf32>, vector<64x32xf32>, vector<16x32xf32> -> vector<16x32xf32>
    %160 = arith.addf %150, %159 : vector<16x32xf32>
    %c0_57 = arith.constant 0 : index
    %c0_58 = arith.constant 0 : index
    %161 = vector.load %arg15[%c0_57, %c0_58] : memref<1x32xf32, #tpu.memory_space<vmem>>, vector<1x32xf32>
    %162 = vector.shape_cast %161 : vector<1x32xf32> to vector<32xf32>
    %163 = vector.shape_cast %162 : vector<32xf32> to vector<1x32xf32>
    %164 = vector.broadcast %163 : vector<1x32xf32> to vector<16x32xf32>
    %165 = arith.addf %160, %164 : vector<16x32xf32>
    %166 = arith.addf %119, %165 : vector<16x32xf32>
    %167 = vector.shape_cast %166 : vector<16x32xf32> to vector<2x8x32xf32>
    %c0_59 = arith.constant 0 : index
    %c0_60 = arith.constant 0 : index
    %c0_61 = arith.constant 0 : index
    %168 = vector.load %arg18[%c0_59, %c0_60, %c0_61] : memref<2x8x32xf32, #tpu.memory_space<vmem>>, vector<2x8x32xf32>
    tpu.vector_store %arg18[%c0_59, %c0_60, %c0_61], %167 {strides = array<i32>} : memref<2x8x32xf32, #tpu.memory_space<vmem>>, vector<2x8x32xf32>,
    return
  }
  func.func @transform_0(%arg0: i32) -> (i32, i32, i32) {
    %c0_i32 = arith.constant 0 : i32
    %c0_i32_0 = arith.constant 0 : i32
    %c0_i32_1 = arith.constant 0 : i32
    return %arg0, %c0_i32, %c0_i32_0 : i32, i32, i32
  }
  func.func @transform_1(%arg0: i32) -> (i32, i32) {
    %c0_i32 = arith.constant 0 : i32
    %c0_i32_0 = arith.constant 0 : i32
    %c0_i32_1 = arith.constant 0 : i32
    return %c0_i32, %c0_i32_0 : i32, i32
  }
  func.func @transform_2(%arg0: i32) -> (i32, i32) {
    %c0_i32 = arith.constant 0 : i32
    %c0_i32_0 = arith.constant 0 : i32
    %c0_i32_1 = arith.constant 0 : i32
    return %c0_i32, %c0_i32_0 : i32, i32
  }
  func.func @transform_3(%arg0: i32) -> (i32, i32) {
    %c0_i32 = arith.constant 0 : i32
    %c0_i32_0 = arith.constant 0 : i32
    %c0_i32_1 = arith.constant 0 : i32
    return %c0_i32, %c0_i32_0 : i32, i32
  }
  func.func @transform_4(%arg0: i32) -> (i32, i32) {
    %c0_i32 = arith.constant 0 : i32
    %c0_i32_0 = arith.constant 0 : i32
    %c0_i32_1 = arith.constant 0 : i32
    return %c0_i32, %c0_i32_0 : i32, i32
  }
  func.func @transform_5(%arg0: i32) -> (i32, i32) {
    %c0_i32 = arith.constant 0 : i32
    %c0_i32_0 = arith.constant 0 : i32
    %c0_i32_1 = arith.constant 0 : i32
    return %c0_i32, %c0_i32_0 : i32, i32
  }
  func.func @transform_6(%arg0: i32) -> (i32, i32) {
    %c0_i32 = arith.constant 0 : i32
    %c0_i32_0 = arith.constant 0 : i32
    %c0_i32_1 = arith.constant 0 : i32
    return %c0_i32, %c0_i32_0 : i32, i32
  }
  func.func @transform_7(%arg0: i32) -> (i32, i32) {
    %c0_i32 = arith.constant 0 : i32
    %c0_i32_0 = arith.constant 0 : i32
    %c0_i32_1 = arith.constant 0 : i32
    return %c0_i32, %c0_i32_0 : i32, i32
  }
  func.func @transform_8(%arg0: i32) -> (i32, i32) {
    %c0_i32 = arith.constant 0 : i32
    %c0_i32_0 = arith.constant 0 : i32
    %c0_i32_1 = arith.constant 0 : i32
    return %c0_i32, %c0_i32_0 : i32, i32
  }
  func.func @transform_9(%arg0: i32) -> (i32, i32) {
    %c0_i32 = arith.constant 0 : i32
    %c0_i32_0 = arith.constant 0 : i32
    %c0_i32_1 = arith.constant 0 : i32
    return %c0_i32, %c0_i32_0 : i32, i32
  }
  func.func @transform_10(%arg0: i32) -> (i32, i32) {
    %c0_i32 = arith.constant 0 : i32
    %c0_i32_0 = arith.constant 0 : i32
    %c0_i32_1 = arith.constant 0 : i32
    return %c0_i32, %c0_i32_0 : i32, i32
  }
  func.func @transform_11(%arg0: i32) -> (i32, i32) {
    %c0_i32 = arith.constant 0 : i32
    %c0_i32_0 = arith.constant 0 : i32
    %c0_i32_1 = arith.constant 0 : i32
    return %c0_i32, %c0_i32_0 : i32, i32
  }
  func.func @transform_12(%arg0: i32) -> (i32, i32) {
    %c0_i32 = arith.constant 0 : i32
    %c0_i32_0 = arith.constant 0 : i32
    %c0_i32_1 = arith.constant 0 : i32
    return %c0_i32, %c0_i32_0 : i32, i32
  }
  func.func @transform_13(%arg0: i32) -> (i32, i32) {
    %c0_i32 = arith.constant 0 : i32
    %c0_i32_0 = arith.constant 0 : i32
    %c0_i32_1 = arith.constant 0 : i32
    return %c0_i32, %c0_i32_0 : i32, i32
  }
  func.func @transform_14(%arg0: i32) -> (i32, i32) {
    %c0_i32 = arith.constant 0 : i32
    %c0_i32_0 = arith.constant 0 : i32
    %c0_i32_1 = arith.constant 0 : i32
    return %c0_i32, %c0_i32_0 : i32, i32
  }
  func.func @transform_15(%arg0: i32) -> (i32, i32) {
    %c0_i32 = arith.constant 0 : i32
    %c0_i32_0 = arith.constant 0 : i32
    %c0_i32_1 = arith.constant 0 : i32
    return %c0_i32, %c0_i32_0 : i32, i32
  }
  func.func @transform_16(%arg0: i32) -> (i32, i32) {
    %c0_i32 = arith.constant 0 : i32
    %c0_i32_0 = arith.constant 0 : i32
    %c0_i32_1 = arith.constant 0 : i32
    return %c0_i32, %c0_i32_0 : i32, i32
  }
  func.func @transform_17(%arg0: i32) -> (i32, i32, i32) {
    %c0_i32 = arith.constant 0 : i32
    %c0_i32_0 = arith.constant 0 : i32
    %c0_i32_1 = arith.constant 0 : i32
    return %arg0, %c0_i32, %c0_i32_0 : i32, i32, i32
  }
}

module attributes {stable_mosaic.version = 11 : i64} {
  func.func @gt_decoder_layer_kernel(%arg0: i32, %arg1: memref<2x8x32xf32, #tpu.memory_space<vmem>>, %arg2: memref<32x32xf32, #tpu.memory_space<vmem>>, %arg3: memref<1x32xf32, #tpu.memory_space<vmem>>, %arg4: memref<32x32xf32, #tpu.memory_space<vmem>>, %arg5: memref<1x32xf32, #tpu.memory_space<vmem>>, %arg6: memref<32x32xf32, #tpu.memory_space<vmem>>, %arg7: memref<1x32xf32, #tpu.memory_space<vmem>>, %arg8: memref<32x32xf32, #tpu.memory_space<vmem>>, %arg9: memref<1x32xf32, #tpu.memory_space<vmem>>, %arg10: memref<1x32xf32, #tpu.memory_space<vmem>>, %arg11: memref<1x32xf32, #tpu.memory_space<vmem>>, %arg12: memref<32x64xf32, #tpu.memory_space<vmem>>, %arg13: memref<1x64xf32, #tpu.memory_space<vmem>>, %arg14: memref<64x32xf32, #tpu.memory_space<vmem>>, %arg15: memref<1x32xf32, #tpu.memory_space<vmem>>, %arg16: memref<1x32xf32, #tpu.memory_space<vmem>>, %arg17: memref<1x32xf32, #tpu.memory_space<vmem>>, %arg18: memref<2x8x32xf32, #tpu.memory_space<vmem>>) attributes {dimension_semantics = [#tpu.dimension_semantics<parallel>], iteration_bounds = array<i64: 2>, scalar_prefetch = 0 : i64, scratch_operands = 0 : i64, tpu.core_type = #tpu.core_type<tc>, window_params = [{transform_indices = @transform_0, window_bounds = array<i64: 2, 8, 32>}, {pipeline_mode = #tpu.pipeline_mode<synchronous>, transform_indices = @transform_1, window_bounds = array<i64: 32, 32>}, {pipeline_mode = #tpu.pipeline_mode<synchronous>, transform_indices = @transform_2, window_bounds = array<i64: 1, 32>}, {pipeline_mode = #tpu.pipeline_mode<synchronous>, transform_indices = @transform_3, window_bounds = array<i64: 32, 32>}, {pipeline_mode = #tpu.pipeline_mode<synchronous>, transform_indices = @transform_4, window_bounds = array<i64: 1, 32>}, {pipeline_mode = #tpu.pipeline_mode<synchronous>, transform_indices = @transform_5, window_bounds = array<i64: 32, 32>}, {pipeline_mode = #tpu.pipeline_mode<synchronous>, transform_indices = @transform_6, window_bounds = array<i64: 1, 32>}, {pipeline_mode = #tpu.pipeline_mode<synchronous>, transform_indices = @transform_7, window_bounds = array<i64: 32, 32>}, {pipeline_mode = #tpu.pipeline_mode<synchronous>, transform_indices = @transform_8, window_bounds = array<i64: 1, 32>}, {pipeline_mode = #tpu.pipeline_mode<synchronous>, transform_indices = @transform_9, window_bounds = array<i64: 1, 32>}, {pipeline_mode = #tpu.pipeline_mode<synchronous>, transform_indices = @transform_10, window_bounds = array<i64: 1, 32>}, {pipeline_mode = #tpu.pipeline_mode<synchronous>, transform_indices = @transform_11, window_bounds = array<i64: 32, 64>}, {pipeline_mode = #tpu.pipeline_mode<synchronous>, transform_indices = @transform_12, window_bounds = array<i64: 1, 64>}, {pipeline_mode = #tpu.pipeline_mode<synchronous>, transform_indices = @transform_13, window_bounds = array<i64: 64, 32>}, {pipeline_mode = #tpu.pipeline_mode<synchronous>, transform_indices = @transform_14, window_bounds = array<i64: 1, 32>}, {pipeline_mode = #tpu.pipeline_mode<synchronous>, transform_indices = @transform_15, window_bounds = array<i64: 1, 32>}, {pipeline_mode = #tpu.pipeline_mode<synchronous>, transform_indices = @transform_16, window_bounds = array<i64: 1, 32>}, {transform_indices = @transform_17, window_bounds = array<i64: 2, 8, 32>}]} {
    %c0 = arith.constant 0 : index
    %c0_0 = arith.constant 0 : index
    %c0_1 = arith.constant 0 : index
    %0 = vector.load %arg1[%c0, %c0_0, %c0_1] : memref<2x8x32xf32, #tpu.memory_space<vmem>>, vector<2x8x32xf32>
    %1 = vector.shape_cast %0 : vector<2x8x32xf32> to vector<16x32xf32>
    %c0_2 = arith.constant 0 : index
    %c0_3 = arith.constant 0 : index
    %2 = vector.load %arg10[%c0_2, %c0_3] : memref<1x32xf32, #tpu.memory_space<vmem>>, vector<1x32xf32>
    %3 = vector.shape_cast %2 : vector<1x32xf32> to vector<32xf32>
    %c0_4 = arith.constant 0 : index
    %c0_5 = arith.constant 0 : index
    %4 = vector.load %arg11[%c0_4, %c0_5] : memref<1x32xf32, #tpu.memory_space<vmem>>, vector<1x32xf32>
    %5 = vector.shape_cast %4 : vector<1x32xf32> to vector<32xf32>
    %cst = arith.constant dense<0.000000e+00> : vector<16xf32>
    %6 = vector.multi_reduction <add>, %1, %cst [1] : vector<16x32xf32> to vector<16xf32>
    %7 = vector.shape_cast %6 : vector<16xf32> to vector<16x1xf32>
    %cst_6 = arith.constant 3.200000e+01 : f32
    %8 = vector.broadcast %cst_6 : f32 to vector<16x1xf32>
    %9 = arith.divf %7, %8 : vector<16x1xf32>
    %10 = vector.broadcast %9 : vector<16x1xf32> to vector<16x32xf32>
    %11 = arith.subf %1, %10 : vector<16x32xf32>
    %12 = arith.mulf %11, %11 : vector<16x32xf32>
    %cst_7 = arith.constant dense<0.000000e+00> : vector<16xf32>
    %13 = vector.multi_reduction <add>, %12, %cst_7 [1] : vector<16x32xf32> to vector<16xf32>
    %14 = vector.shape_cast %13 : vector<16xf32> to vector<16x1xf32>
    %cst_8 = arith.constant 3.200000e+01 : f32
    %15 = vector.broadcast %cst_8 : f32 to vector<16x1xf32>
    %16 = arith.divf %14, %15 : vector<16x1xf32>
    %17 = vector.broadcast %9 : vector<16x1xf32> to vector<16x32xf32>
    %18 = arith.subf %1, %17 : vector<16x32xf32>
    %cst_9 = arith.constant 9.99999974E-6 : f32
    %19 = vector.broadcast %cst_9 : f32 to vector<16x1xf32>
    %20 = arith.addf %16, %19 : vector<16x1xf32>
    %21 = math.rsqrt %20 : vector<16x1xf32>
    %22 = vector.broadcast %21 : vector<16x1xf32> to vector<16x32xf32>
    %23 = arith.mulf %18, %22 : vector<16x32xf32>
    %24 = vector.shape_cast %3 : vector<32xf32> to vector<1x32xf32>
    %25 = vector.broadcast %24 : vector<1x32xf32> to vector<16x32xf32>
    %26 = arith.mulf %23, %25 : vector<16x32xf32>
    %27 = vector.shape_cast %5 : vector<32xf32> to vector<1x32xf32>
    %28 = vector.broadcast %27 : vector<1x32xf32> to vector<16x32xf32>
    %29 = arith.addf %26, %28 : vector<16x32xf32>
    %c0_10 = arith.constant 0 : index
    %c0_11 = arith.constant 0 : index
    %30 = vector.load %arg2[%c0_10, %c0_11] : memref<32x32xf32, #tpu.memory_space<vmem>>, vector<32x32xf32>
    %cst_12 = arith.constant dense<0.000000e+00> : vector<16x32xf32>
    %31 = tpu.matmul %29, %30, %cst_12 {dimension_numbers = #tpu.dot_dimension_numbers<[1], [0], [0], [1], [0, 0, 1, 1], [], []>} : vector<16x32xf32>, vector<32x32xf32>, vector<16x32xf32> -> vector<16x32xf32>
    %c0_13 = arith.constant 0 : index
    %c0_14 = arith.constant 0 : index
    %32 = vector.load %arg3[%c0_13, %c0_14] : memref<1x32xf32, #tpu.memory_space<vmem>>, vector<1x32xf32>
    %33 = vector.shape_cast %32 : vector<1x32xf32> to vector<32xf32>
    %34 = vector.shape_cast %33 : vector<32xf32> to vector<1x32xf32>
    %35 = vector.broadcast %34 : vector<1x32xf32> to vector<16x32xf32>
    %36 = arith.addf %31, %35 : vector<16x32xf32>
    %c0_15 = arith.constant 0 : index
    %c0_16 = arith.constant 0 : index
    %37 = vector.load %arg4[%c0_15, %c0_16] : memref<32x32xf32, #tpu.memory_space<vmem>>, vector<32x32xf32>
    %cst_17 = arith.constant dense<0.000000e+00> : vector<16x32xf32>
    %38 = tpu.matmul %29, %37, %cst_17 {dimension_numbers = #tpu.dot_dimension_numbers<[1], [0], [0], [1], [0, 0, 1, 1], [], []>} : vector<16x32xf32>, vector<32x32xf32>, vector<16x32xf32> -> vector<16x32xf32>
    %c0_18 = arith.constant 0 : index
    %c0_19 = arith.constant 0 : index
    %39 = vector.load %arg5[%c0_18, %c0_19] : memref<1x32xf32, #tpu.memory_space<vmem>>, vector<1x32xf32>
    %40 = vector.shape_cast %39 : vector<1x32xf32> to vector<32xf32>
    %41 = vector.shape_cast %40 : vector<32xf32> to vector<1x32xf32>
    %42 = vector.broadcast %41 : vector<1x32xf32> to vector<16x32xf32>
    %43 = arith.addf %38, %42 : vector<16x32xf32>
    %c0_20 = arith.constant 0 : index
    %c0_21 = arith.constant 0 : index
    %44 = vector.load %arg6[%c0_20, %c0_21] : memref<32x32xf32, #tpu.memory_space<vmem>>, vector<32x32xf32>
    %cst_22 = arith.constant dense<0.000000e+00> : vector<16x32xf32>
    %45 = tpu.matmul %29, %44, %cst_22 {dimension_numbers = #tpu.dot_dimension_numbers<[1], [0], [0], [1], [0, 0, 1, 1], [], []>} : vector<16x32xf32>, vector<32x32xf32>, vector<16x32xf32> -> vector<16x32xf32>
    %c0_23 = arith.constant 0 : index
    %c0_24 = arith.constant 0 : index
    %46 = vector.load %arg7[%c0_23, %c0_24] : memref<1x32xf32, #tpu.memory_space<vmem>>, vector<1x32xf32>
    %47 = vector.shape_cast %46 : vector<1x32xf32> to vector<32xf32>
    %48 = vector.shape_cast %47 : vector<32xf32> to vector<1x32xf32>
    %49 = vector.broadcast %48 : vector<1x32xf32> to vector<16x32xf32>
    %50 = arith.addf %45, %49 : vector<16x32xf32>
    %cst_25 = arith.constant 0.353553385 : f32
    %51 = vector.broadcast %cst_25 : f32 to vector<16x32xf32>
    %52 = arith.mulf %36, %51 : vector<16x32xf32>
    %53 = vector.extract_strided_slice %52 {offsets = [0, 0], sizes = [16, 8], strides = [1, 1]} : vector<16x32xf32> to vector<16x8xf32>
    %54 = vector.shape_cast %53 : vector<16x8xf32> to vector<2x8x8xf32>
    %55 = vector.extract_strided_slice %52 {offsets = [0, 8], sizes = [16, 8], strides = [1, 1]} : vector<16x32xf32> to vector<16x8xf32>
    %56 = vector.shape_cast %55 : vector<16x8xf32> to vector<2x8x8xf32>
    %57 = vector.extract_strided_slice %52 {offsets = [0, 16], sizes = [16, 8], strides = [1, 1]} : vector<16x32xf32> to vector<16x8xf32>
    %58 = vector.shape_cast %57 : vector<16x8xf32> to vector<2x8x8xf32>
    %59 = vector.extract_strided_slice %52 {offsets = [0, 24], sizes = [16, 8], strides = [1, 1]} : vector<16x32xf32> to vector<16x8xf32>
    %60 = vector.shape_cast %59 : vector<16x8xf32> to vector<2x8x8xf32>
    %61 = tpu.concatenate %54, %56, %58, %60 in 0 : vector<2x8x8xf32>, vector<2x8x8xf32>, vector<2x8x8xf32>, vector<2x8x8xf32> -> vector<8x8x8xf32>
    %62 = vector.extract_strided_slice %43 {offsets = [0, 0], sizes = [16, 8], strides = [1, 1]} : vector<16x32xf32> to vector<16x8xf32>
    %63 = vector.shape_cast %62 : vector<16x8xf32> to vector<2x8x8xf32>
    %64 = vector.extract_strided_slice %43 {offsets = [0, 8], sizes = [16, 8], strides = [1, 1]} : vector<16x32xf32> to vector<16x8xf32>
    %65 = vector.shape_cast %64 : vector<16x8xf32> to vector<2x8x8xf32>
    %66 = vector.extract_strided_slice %43 {offsets = [0, 16], sizes = [16, 8], strides = [1, 1]} : vector<16x32xf32> to vector<16x8xf32>
    %67 = vector.shape_cast %66 : vector<16x8xf32> to vector<2x8x8xf32>
    %68 = vector.extract_strided_slice %43 {offsets = [0, 24], sizes = [16, 8], strides = [1, 1]} : vector<16x32xf32> to vector<16x8xf32>
    %69 = vector.shape_cast %68 : vector<16x8xf32> to vector<2x8x8xf32>
    %70 = tpu.concatenate %63, %65, %67, %69 in 0 : vector<2x8x8xf32>, vector<2x8x8xf32>, vector<2x8x8xf32>, vector<2x8x8xf32> -> vector<8x8x8xf32>
    %71 = vector.extract_strided_slice %50 {offsets = [0, 0], sizes = [16, 8], strides = [1, 1]} : vector<16x32xf32> to vector<16x8xf32>
    %72 = vector.shape_cast %71 : vector<16x8xf32> to vector<2x8x8xf32>
    %73 = vector.extract_strided_slice %50 {offsets = [0, 8], sizes = [16, 8], strides = [1, 1]} : vector<16x32xf32> to vector<16x8xf32>
    %74 = vector.shape_cast %73 : vector<16x8xf32> to vector<2x8x8xf32>
    %75 = vector.extract_strided_slice %50 {offsets = [0, 16], sizes = [16, 8], strides = [1, 1]} : vector<16x32xf32> to vector<16x8xf32>
    %76 = vector.shape_cast %75 : vector<16x8xf32> to vector<2x8x8xf32>
    %77 = vector.extract_strided_slice %50 {offsets = [0, 24], sizes = [16, 8], strides = [1, 1]} : vector<16x32xf32> to vector<16x8xf32>
    %78 = vector.shape_cast %77 : vector<16x8xf32> to vector<2x8x8xf32>
    %79 = tpu.concatenate %72, %74, %76, %78 in 0 : vector<2x8x8xf32>, vector<2x8x8xf32>, vector<2x8x8xf32>, vector<2x8x8xf32> -> vector<8x8x8xf32>
    %cst_26 = arith.constant 0xFF800000 : f32
    %80 = vector.broadcast %cst_26 : f32 to vector<8x8x1xf32>
    %cst_27 = arith.constant 0.000000e+00 : f32
    %81 = vector.broadcast %cst_27 : f32 to vector<8x8x1xf32>
    %cst_28 = arith.constant 0.000000e+00 : f32
    %82 = vector.broadcast %cst_28 : f32 to vector<8x8x8xf32>
    "tpu.trace_start"() <{level = 10 : i32, message = "bqd,bkd->bqk"}> : () -> ()
    %cst_29 = arith.constant dense<0.000000e+00> : vector<8x8x8xf32>
    %83 = tpu.matmul %61, %70, %cst_29 {dimension_numbers = #tpu.dot_dimension_numbers<[2], [2], [1], [1], [0, 0, 0, 1, 1, 1], [0], [0]>} : vector<8x8x8xf32>, vector<8x8x8xf32>, vector<8x8x8xf32> -> vector<8x8x8xf32>
    "tpu.trace_stop"() : () -> ()
    %cst_30 = arith.constant dense<0xFF800000> : vector<8x8xf32>
    %84 = vector.multi_reduction <maximumf>, %83, %cst_30 [2] : vector<8x8x8xf32> to vector<8x8xf32>
    %85 = vector.shape_cast %84 : vector<8x8xf32> to vector<8x8x1xf32>
    %86 = arith.maximumf %80, %85 : vector<8x8x1xf32>
    %87 = arith.subf %80, %86 : vector<8x8x1xf32>
    %88 = math.exp %87 : vector<8x8x1xf32>
    %89 = vector.broadcast %86 : vector<8x8x1xf32> to vector<8x8x8xf32>
    %90 = arith.subf %83, %89 : vector<8x8x8xf32>
    %91 = math.exp %90 : vector<8x8x8xf32>
    %92 = arith.mulf %88, %81 : vector<8x8x1xf32>
    %cst_31 = arith.constant dense<0.000000e+00> : vector<8x8xf32>
    %93 = vector.multi_reduction <add>, %91, %cst_31 [2] : vector<8x8x8xf32> to vector<8x8xf32>
    %94 = vector.shape_cast %93 : vector<8x8xf32> to vector<8x8x1xf32>
    %95 = arith.addf %92, %94 : vector<8x8x1xf32>
    %96 = vector.broadcast %88 : vector<8x8x1xf32> to vector<8x8x8xf32>
    %97 = arith.mulf %96, %82 : vector<8x8x8xf32>
    "tpu.trace_start"() <{level = 10 : i32, message = "bqk,bkd->bqd"}> : () -> ()
    %cst_32 = arith.constant dense<0.000000e+00> : vector<8x8x8xf32>
    %98 = tpu.matmul %91, %79, %cst_32 {dimension_numbers = #tpu.dot_dimension_numbers<[2], [1], [1], [2], [0, 0, 0, 1, 1, 2], [0], [0]>} : vector<8x8x8xf32>, vector<8x8x8xf32>, vector<8x8x8xf32> -> vector<8x8x8xf32>
    "tpu.trace_stop"() : () -> ()
    %99 = arith.addf %97, %98 : vector<8x8x8xf32>
    %100 = tpu.reciprocal %95 : vector<8x8x1xf32> -> vector<8x8x1xf32>
    %101 = vector.broadcast %100 : vector<8x8x1xf32> to vector<8x8x8xf32>
    %102 = arith.mulf %99, %101 : vector<8x8x8xf32>
    %103 = vector.extract_strided_slice %102 {offsets = [0, 0, 0], sizes = [2, 8, 8], strides = [1, 1, 1]} : vector<8x8x8xf32> to vector<2x8x8xf32>
    %104 = vector.shape_cast %103 : vector<2x8x8xf32> to vector<16x8xf32>
    %105 = vector.extract_strided_slice %102 {offsets = [2, 0, 0], sizes = [2, 8, 8], strides = [1, 1, 1]} : vector<8x8x8xf32> to vector<2x8x8xf32>
    %106 = vector.shape_cast %105 : vector<2x8x8xf32> to vector<16x8xf32>
    %107 = vector.extract_strided_slice %102 {offsets = [4, 0, 0], sizes = [2, 8, 8], strides = [1, 1, 1]} : vector<8x8x8xf32> to vector<2x8x8xf32>
    %108 = vector.shape_cast %107 : vector<2x8x8xf32> to vector<16x8xf32>
    %109 = vector.extract_strided_slice %102 {offsets = [6, 0, 0], sizes = [2, 8, 8], strides = [1, 1, 1]} : vector<8x8x8xf32> to vector<2x8x8xf32>
    %110 = vector.shape_cast %109 : vector<2x8x8xf32> to vector<16x8xf32>
    %111 = tpu.concatenate %104, %106, %108, %110 in 1 : vector<16x8xf32>, vector<16x8xf32>, vector<16x8xf32>, vector<16x8xf32> -> vector<16x32xf32>
    %c0_33 = arith.constant 0 : index
    %c0_34 = arith.constant 0 : index
    %112 = vector.load %arg8[%c0_33, %c0_34] : memref<32x32xf32, #tpu.memory_space<vmem>>, vector<32x32xf32>
    %cst_35 = arith.constant dense<0.000000e+00> : vector<16x32xf32>
    %113 = tpu.matmul %111, %112, %cst_35 {dimension_numbers = #tpu.dot_dimension_numbers<[1], [0], [0], [1], [0, 0, 1, 1], [], []>} : vector<16x32xf32>, vector<32x32xf32>, vector<16x32xf32> -> vector<16x32xf32>
    %c0_36 = arith.constant 0 : index
    %c0_37 = arith.constant 0 : index
    %114 = vector.load %arg9[%c0_36, %c0_37] : memref<1x32xf32, #tpu.memory_space<vmem>>, vector<1x32xf32>
    %115 = vector.shape_cast %114 : vector<1x32xf32> to vector<32xf32>
    %116 = vector.shape_cast %115 : vector<32xf32> to vector<1x32xf32>
    %117 = vector.broadcast %116 : vector<1x32xf32> to vector<16x32xf32>
    %118 = arith.addf %113, %117 : vector<16x32xf32>
    %119 = arith.addf %1, %118 : vector<16x32xf32>
    %c0_38 = arith.constant 0 : index
    %c0_39 = arith.constant 0 : index
    %120 = vector.load %arg16[%c0_38, %c0_39] : memref<1x32xf32, #tpu.memory_space<vmem>>, vector<1x32xf32>
    %121 = vector.shape_cast %120 : vector<1x32xf32> to vector<32xf32>
    %c0_40 = arith.constant 0 : index
    %c0_41 = arith.constant 0 : index
    %122 = vector.load %arg17[%c0_40, %c0_41] : memref<1x32xf32, #tpu.memory_space<vmem>>, vector<1x32xf32>
    %123 = vector.shape_cast %122 : vector<1x32xf32> to vector<32xf32>
    %cst_42 = arith.constant dense<0.000000e+00> : vector<16xf32>
    %124 = vector.multi_reduction <add>, %119, %cst_42 [1] : vector<16x32xf32> to vector<16xf32>
    %125 = vector.shape_cast %124 : vector<16xf32> to vector<16x1xf32>
    %cst_43 = arith.constant 3.200000e+01 : f32
    %126 = vector.broadcast %cst_43 : f32 to vector<16x1xf32>
    %127 = arith.divf %125, %126 : vector<16x1xf32>
    %128 = vector.broadcast %127 : vector<16x1xf32> to vector<16x32xf32>
    %129 = arith.subf %119, %128 : vector<16x32xf32>
    %130 = arith.mulf %129, %129 : vector<16x32xf32>
    %cst_44 = arith.constant dense<0.000000e+00> : vector<16xf32>
    %131 = vector.multi_reduction <add>, %130, %cst_44 [1] : vector<16x32xf32> to vector<16xf32>
    %132 = vector.shape_cast %131 : vector<16xf32> to vector<16x1xf32>
    %cst_45 = arith.constant 3.200000e+01 : f32
    %133 = vector.broadcast %cst_45 : f32 to vector<16x1xf32>
    %134 = arith.divf %132, %133 : vector<16x1xf32>
    %135 = vector.broadcast %127 : vector<16x1xf32> to vector<16x32xf32>
    %136 = arith.subf %119, %135 : vector<16x32xf32>
    %cst_46 = arith.constant 9.99999974E-6 : f32
    %137 = vector.broadcast %cst_46 : f32 to vector<16x1xf32>
    %138 = arith.addf %134, %137 : vector<16x1xf32>
    %139 = math.rsqrt %138 : vector<16x1xf32>
    %140 = vector.broadcast %139 : vector<16x1xf32> to vector<16x32xf32>
    %141 = arith.mulf %136, %140 : vector<16x32xf32>
    %142 = vector.shape_cast %121 : vector<32xf32> to vector<1x32xf32>
    %143 = vector.broadcast %142 : vector<1x32xf32> to vector<16x32xf32>
    %144 = arith.mulf %141, %143 : vector<16x32xf32>
    %145 = vector.shape_cast %123 : vector<32xf32> to vector<1x32xf32>
    %146 = vector.broadcast %145 : vector<1x32xf32> to vector<16x32xf32>
    %147 = arith.addf %144, %146 : vector<16x32xf32>
    %c0_47 = arith.constant 0 : index
    %c0_48 = arith.constant 0 : index
    %148 = vector.load %arg13[%c0_47, %c0_48] : memref<1x64xf32, #tpu.memory_space<vmem>>, vector<1x64xf32>
    %149 = vector.shape_cast %148 : vector<1x64xf32> to vector<64xf32>
    %cst_49 = arith.constant 0.000000e+00 : f32
    %150 = vector.broadcast %cst_49 : f32 to vector<16x32xf32>
    %c0_50 = arith.constant 0 : index
    %c0_51 = arith.constant 0 : index
    %151 = vector.load %arg12[%c0_50, %c0_51] : memref<32x64xf32, #tpu.memory_space<vmem>>, vector<32x64xf32>
    %cst_52 = arith.constant dense<0.000000e+00> : vector<16x64xf32>
    %152 = tpu.matmul %147, %151, %cst_52 {dimension_numbers = #tpu.dot_dimension_numbers<[1], [0], [0], [1], [0, 0, 1, 1], [], []>} : vector<16x32xf32>, vector<32x64xf32>, vector<16x64xf32> -> vector<16x64xf32>
    %153 = vector.shape_cast %149 : vector<64xf32> to vector<1x64xf32>
    %154 = vector.broadcast %153 : vector<1x64xf32> to vector<16x64xf32>
    %155 = arith.addf %152, %154 : vector<16x64xf32>
    %cst_53 = arith.constant 0.000000e+00 : f32
    %156 = vector.broadcast %cst_53 : f32 to vector<16x64xf32>
    %157 = arith.maximumf %155, %156 : vector<16x64xf32>
    %c0_54 = arith.constant 0 : index
    %c0_55 = arith.constant 0 : index
    %158 = vector.load %arg14[%c0_54, %c0_55] : memref<64x32xf32, #tpu.memory_space<vmem>>, vector<64x32xf32>
    %cst_56 = arith.constant dense<0.000000e+00> : vector<16x32xf32>
    %159 = tpu.matmul %157, %158, %cst_56 {dimension_numbers = #tpu.dot_dimension_numbers<[1], [0], [0], [1], [0, 0, 1, 1], [], []>} : vector<16x64xf32>, vector<64x32xf32>, vector<16x32xf32> -> vector<16x32xf32>
    %160 = arith.addf %150, %159 : vector<16x32xf32>
    %c0_57 = arith.constant 0 : index
    %c0_58 = arith.constant 0 : index
    %161 = vector.load %arg15[%c0_57, %c0_58] : memref<1x32xf32, #tpu.memory_space<vmem>>, vector<1x32xf32>
    %162 = vector.shape_cast %161 : vector<1x32xf32> to vector<32xf32>
    %163 = vector.shape_cast %162 : vector<32xf32> to vector<1x32xf32>
    %164 = vector.broadcast %163 : vector<1x32xf32> to vector<16x32xf32>
    %165 = arith.addf %160, %164 : vector<16x32xf32>
    %166 = arith.addf %119, %165 : vector<16x32xf32>
    %167 = vector.shape_cast %166 : vector<16x32xf32> to vector<2x8x32xf32>
    %c0_59 = arith.constant 0 : index
    %c0_60 = arith.constant 0 : index
    %c0_61 = arith.constant 0 : index
    %168 = vector.load %arg18[%c0_59, %c0_60, %c0_61] : memref<2x8x32xf32, #tpu.memory_space<vmem>>, vector<2x8x32xf32>
    tpu.vector_store %arg18[%c0_59, %c0_60, %c0_61], %167 {strides = array<i32>} : memref<2x8x32xf32, #tpu.memory_space<vmem>>, vector<2x8x32xf32>,
    return
  }
  func.func @transform_0(%arg0: i32) -> (i32, i32, i32) {
    %c0_i32 = arith.constant 0 : i32
    %c0_i32_0 = arith.constant 0 : i32
    %c0_i32_1 = arith.constant 0 : i32
    return %arg0, %c0_i32, %c0_i32_0 : i32, i32, i32
  }
  func.func @transform_1(%arg0: i32) -> (i32, i32) {
    %c0_i32 = arith.constant 0 : i32
    %c0_i32_0 = arith.constant 0 : i32
    %c0_i32_1 = arith.constant 0 : i32
    return %c0_i32, %c0_i32_0 : i32, i32
  }
  func.func @transform_2(%arg0: i32) -> (i32, i32) {
    %c0_i32 = arith.constant 0 : i32
    %c0_i32_0 = arith.constant 0 : i32
    %c0_i32_1 = arith.constant 0 : i32
    return %c0_i32, %c0_i32_0 : i32, i32
  }
  func.func @transform_3(%arg0: i32) -> (i32, i32) {
    %c0_i32 = arith.constant 0 : i32
    %c0_i32_0 = arith.constant 0 : i32
    %c0_i32_1 = arith.constant 0 : i32
    return %c0_i32, %c0_i32_0 : i32, i32
  }
  func.func @transform_4(%arg0: i32) -> (i32, i32) {
    %c0_i32 = arith.constant 0 : i32
    %c0_i32_0 = arith.constant 0 : i32
    %c0_i32_1 = arith.constant 0 : i32
    return %c0_i32, %c0_i32_0 : i32, i32
  }
  func.func @transform_5(%arg0: i32) -> (i32, i32) {
    %c0_i32 = arith.constant 0 : i32
    %c0_i32_0 = arith.constant 0 : i32
    %c0_i32_1 = arith.constant 0 : i32
    return %c0_i32, %c0_i32_0 : i32, i32
  }
  func.func @transform_6(%arg0: i32) -> (i32, i32) {
    %c0_i32 = arith.constant 0 : i32
    %c0_i32_0 = arith.constant 0 : i32
    %c0_i32_1 = arith.constant 0 : i32
    return %c0_i32, %c0_i32_0 : i32, i32
  }
  func.func @transform_7(%arg0: i32) -> (i32, i32) {
    %c0_i32 = arith.constant 0 : i32
    %c0_i32_0 = arith.constant 0 : i32
    %c0_i32_1 = arith.constant 0 : i32
    return %c0_i32, %c0_i32_0 : i32, i32
  }
  func.func @transform_8(%arg0: i32) -> (i32, i32) {
    %c0_i32 = arith.constant 0 : i32
    %c0_i32_0 = arith.constant 0 : i32
    %c0_i32_1 = arith.constant 0 : i32
    return %c0_i32, %c0_i32_0 : i32, i32
  }
  func.func @transform_9(%arg0: i32) -> (i32, i32) {
    %c0_i32 = arith.constant 0 : i32
    %c0_i32_0 = arith.constant 0 : i32
    %c0_i32_1 = arith.constant 0 : i32
    return %c0_i32, %c0_i32_0 : i32, i32
  }
  func.func @transform_10(%arg0: i32) -> (i32, i32) {
    %c0_i32 = arith.constant 0 : i32
    %c0_i32_0 = arith.constant 0 : i32
    %c0_i32_1 = arith.constant 0 : i32
    return %c0_i32, %c0_i32_0 : i32, i32
  }
  func.func @transform_11(%arg0: i32) -> (i32, i32) {
    %c0_i32 = arith.constant 0 : i32
    %c0_i32_0 = arith.constant 0 : i32
    %c0_i32_1 = arith.constant 0 : i32
    return %c0_i32, %c0_i32_0 : i32, i32
  }
  func.func @transform_12(%arg0: i32) -> (i32, i32) {
    %c0_i32 = arith.constant 0 : i32
    %c0_i32_0 = arith.constant 0 : i32
    %c0_i32_1 = arith.constant 0 : i32
    return %c0_i32, %c0_i32_0 : i32, i32
  }
  func.func @transform_13(%arg0: i32) -> (i32, i32) {
    %c0_i32 = arith.constant 0 : i32
    %c0_i32_0 = arith.constant 0 : i32
    %c0_i32_1 = arith.constant 0 : i32
    return %c0_i32, %c0_i32_0 : i32, i32
  }
  func.func @transform_14(%arg0: i32) -> (i32, i32) {
    %c0_i32 = arith.constant 0 : i32
    %c0_i32_0 = arith.constant 0 : i32
    %c0_i32_1 = arith.constant 0 : i32
    return %c0_i32, %c0_i32_0 : i32, i32
  }
  func.func @transform_15(%arg0: i32) -> (i32, i32) {
    %c0_i32 = arith.constant 0 : i32
    %c0_i32_0 = arith.constant 0 : i32
    %c0_i32_1 = arith.constant 0 : i32
    return %c0_i32, %c0_i32_0 : i32, i32
  }
  func.func @transform_16(%arg0: i32) -> (i32, i32) {
    %c0_i32 = arith.constant 0 : i32
    %c0_i32_0 = arith.constant 0 : i32
    %c0_i32_1 = arith.constant 0 : i32
    return %c0_i32, %c0_i32_0 : i32, i32
  }
  func.func @transform_17(%arg0: i32) -> (i32, i32, i32) {
    %c0_i32 = arith.constant 0 : i32
    %c0_i32_0 = arith.constant 0 : i32
    %c0_i32_1 = arith.constant 0 : i32
    return %arg0, %c0_i32, %c0_i32_0 : i32, i32, i32
  }
}

</mosaic_0001>

<llo_original>
// kernel: tpu_custom_call.1
$region0: #{tpu_custom_call.1}
  #allocation0 [shape = 'u32[]', space=smem, size = 0x4, offset = 0x4, fixed_abs, tag = 'smem constant byte address 0x4 - core index']
  #allocation1 [shape = 'u32[144,128]{1,0:T(1,128)}', space=vmem, size = 0x12000, scoped, tag = 'internal scratch']
  %s0 = inlined_call_operand.vmem [shape: f32[4,8,32], index: 0, kind: input, shape index: {}]
  %s1 = inlined_call_operand.vmem [shape: f32[32,32], index: 1, kind: input, shape index: {}]
  %s2 = inlined_call_operand.vmem [shape: f32[1,32], index: 2, kind: input, shape index: {}]
  %s3 = inlined_call_operand.vmem [shape: f32[32,32], index: 3, kind: input, shape index: {}]
  %s4 = inlined_call_operand.vmem [shape: f32[1,32], index: 4, kind: input, shape index: {}]
  %s5 = inlined_call_operand.hbm [shape: f32[32,32], index: 5, kind: input, shape index: {}]
  %s6 = inlined_call_operand.vmem [shape: f32[1,32], index: 6, kind: input, shape index: {}]
  %s7 = inlined_call_operand.hbm [shape: f32[32,32], index: 7, kind: input, shape index: {}]
  %s8 = inlined_call_operand.vmem [shape: f32[1,32], index: 8, kind: input, shape index: {}]
  %s9 = inlined_call_operand.vmem [shape: f32[1,32], index: 9, kind: input, shape index: {}]
  %s10 = inlined_call_operand.vmem [shape: f32[1,32], index: 10, kind: input, shape index: {}]
  %s11 = inlined_call_operand.hbm [shape: f32[32,64], index: 11, kind: input, shape index: {}]
  %s12 = inlined_call_operand.vmem [shape: f32[1,64], index: 12, kind: input, shape index: {}]
  %s13 = inlined_call_operand.vmem [shape: f32[64,32], index: 13, kind: input, shape index: {}]
  %s14 = inlined_call_operand.vmem [shape: f32[1,32], index: 14, kind: input, shape index: {}]
  %s15 = inlined_call_operand.vmem [shape: f32[1,32], index: 15, kind: input, shape index: {}]
  %s16 = inlined_call_operand.vmem [shape: f32[1,32], index: 16, kind: input, shape index: {}]
  %s17 = inlined_call_operand.hbm [shape: f32[4,8,32], index: 17, kind: output, shape index: {}]
  %s18 = sld [smem:[#allocation0]]
  $region113: #{tpu_custom_call.1} parent=0
    _
  %s20 = ssub.s32 1, %s18
  %s21 = scalar_select 0, %s20, %s18
  $region1: #{tpu_custom_call.1} parent=0
    #allocation2 [shape = 'u8[16384]{0}', space=vmem, size = 0x4000, scoped, tag = 'input window, operand 5, single buffered']
    #allocation3 [shape = 's32[2]{0}', space=sflag, size = 0x8, scoped, tag = 'scoped memory for tpu_custom_call.1']
    #allocation4 [shape = 's32[2]{0}', space=sflag, size = 0x8, scoped, tag = 'scoped memory for tpu_custom_call.1']
    #allocation5 [shape = 'u8[16384]{0}', space=vmem, size = 0x4000, scoped, tag = 'input window, operand 7, single buffered']
    #allocation6 [shape = 's32[1]{0}', space=sflag, size = 0x4, scoped, tag = 'scoped memory for tpu_custom_call.1']
    #allocation7 [shape = 'u8[16384]{0}', space=vmem, size = 0x4000, scoped, tag = 'input window, operand 11, single buffered']
    #allocation8 [shape = 'u8[16384]{0}', space=vmem, size = 0x4000, scoped, tag = 'output window, operand 0']
    %22 = vsyncpa [#allocation3], 0
    %23 = vsyncpa [#allocation6], 0
    %24 = vsyncpa [#allocation4], 0
    %s25 = scalar_lea.sflag [#allocation4], 1
    %26 = vsyncpa %s25, 0
    loop: start=0, step=1, limit=4
    $region2: #{tpu_custom_call.1} parent=1 // loop_pre_header
      _
    $region3: #{tpu_custom_call.1} parent=1 // loop_header
      %s28 = sphi 0, %s32
      %p29 = scmp.ge.s32.totalorder %s28, 4
      %s38 = sphi 0, %s40
      %s41 = sphi 0, %s38
      %s42 = sphi 0, %s41
      %s58 = sphi 0, %s42
      %s62 = sphi 0, %s62
      %s64 = sphi 0, %s62
      %s65 = sphi 0, %s64
      %s79 = sphi 0, %s65
      %s83 = sphi 0, %s83
      %s85 = sphi 0, %s83
      %s86 = sphi 0, %s85
      %s100 = sphi 0, %s86
      %s104 = sphi 0, %s104
      %s106 = sphi 0, %s104
      %s107 = sphi 0, %s106
      %s121 = sphi 0, %s107
      %s125 = sphi 0, %s125
      %s127 = sphi 0, %s125
      %s128 = sphi 0, %s127
      %s142 = sphi 0, %s128
      %s146 = sphi 0, %s146
      %s148 = sphi 0, %s146
      %s149 = sphi 0, %s148
      %s163 = sphi 0, %s149
      %s167 = sphi 0, %s167
      %s169 = sphi 0, %s167
      %s170 = sphi 0, %s169
      %s184 = sphi 0, %s170
      %s188 = sphi 0, %s188
      %s190 = sphi 0, %s188
      %s191 = sphi 0, %s190
      %s205 = sphi 0, %s191
      %s209 = sphi 0, %s209
      %s211 = sphi 0, %s209
      %s212 = sphi 0, %s211
      %s226 = sphi 0, %s212
      %s230 = sphi 0, %s230
      %s232 = sphi 0, %s230
      %s233 = sphi 0, %s232
      %s247 = sphi 0, %s233
      %s251 = sphi 0, %s251
      %s253 = sphi 0, %s251
      %s254 = sphi 0, %s253
      %s268 = sphi 0, %s254
      %s272 = sphi 0, %s272
      %s274 = sphi 0, %s272
      %s275 = sphi 0, %s274
      %s289 = sphi 0, %s275
      %s293 = sphi 0, %s293
      %s295 = sphi 0, %s293
      %s296 = sphi 0, %s295
      %s310 = sphi 0, %s296
      %s314 = sphi 0, %s314
      %s316 = sphi 0, %s314
      %s317 = sphi 0, %s316
      %s331 = sphi 0, %s317
      %s335 = sphi 0, %s335
      %s337 = sphi 0, %s335
      %s338 = sphi 0, %s337
      %s352 = sphi 0, %s338
      %s356 = sphi 0, %s356
      %s358 = sphi 0, %s356
      %s359 = sphi 0, %s358
      %s373 = sphi 0, %s359
      %s377 = sphi 0, %s377
      %s379 = sphi 0, %s377
      %s380 = sphi 0, %s379
      %s394 = sphi 0, %s380
      %s400 = sphi 0, %s402
      %s403 = sphi 0, %s400
      %s404 = sphi 0, %s403
      %s420 = sphi 0, %s404
    $region4: #{tpu_custom_call.1} parent=1 // loop_header_branch
      %31 = sbr.rel (%p29) target = $region8
    $region5: #{tpu_custom_call.1} parent=1 // loop_body
      %s33 = ssub.s32 %s28, 1
      %s34 = ssub.s32 %s28, 2
      %s35 = sadd.s32 %s28, 1
      %s36 = ssub.s32 %s28, %s35
      %p37 = scmp.eq.s32.totalorder %s36, 0
      %s39 = sadd.s32 %s38, 1
      %s40 = scalar_select %p37, %s38, %s39
      %p43 = pneg %p37
      %p44 = scmp.eq.s32.totalorder %s28, 1
      %p45 = por %p43, %p44
      %p46 = scmp.ne.s32.totalorder %s38, %s41
      %p47 = scmp.eq.s32.totalorder %s28, 0
      %p48 = por %p46, %p47
      %p49 = scmp.ne.s32.totalorder %s38, %s41
      %p50 = scmp.eq.s32.totalorder %s33, 1
      %p51 = por %p49, %p50
      %p52 = scmp.ne.s32.totalorder %s41, %s42
      %p53 = scmp.eq.s32.totalorder %s33, 0
      %p54 = por %p52, %p53
      %p55 = scmp.ne.s32.totalorder %s41, %s42
      %p56 = scmp.eq.s32.totalorder %s34, 1
      %p57 = por %p55, %p56
      %p59 = scmp.ne.s32.totalorder %s42, %s58
      %p60 = scmp.eq.s32.totalorder %s34, 0
      %p61 = por %p59, %p60
      %s63 = sadd.s32 %s62, 1
      %p66 = scmp.eq.s32.totalorder %s28, 1
      %p67 = scmp.ne.s32.totalorder %s62, %s64
      %p68 = scmp.eq.s32.totalorder %s28, 0
      %p69 = por %p67, %p68
      %p70 = scmp.ne.s32.totalorder %s62, %s64
      %p71 = scmp.eq.s32.totalorder %s33, 1
      %p72 = por %p70, %p71
      %p73 = scmp.ne.s32.totalorder %s64, %s65
      %p74 = scmp.eq.s32.totalorder %s33, 0
      %p75 = por %p73, %p74
      %p76 = scmp.ne.s32.totalorder %s64, %s65
      %p77 = scmp.eq.s32.totalorder %s34, 1
      %p78 = por %p76, %p77
      %p80 = scmp.ne.s32.totalorder %s65, %s79
      %p81 = scmp.eq.s32.totalorder %s34, 0
      %p82 = por %p80, %p81
      %s84 = sadd.s32 %s83, 1
      %p87 = scmp.eq.s32.totalorder %s28, 1
      %p88 = scmp.ne.s32.totalorder %s83, %s85
      %p89 = scmp.eq.s32.totalorder %s28, 0
      %p90 = por %p88, %p89
      %p91 = scmp.ne.s32.totalorder %s83, %s85
      %p92 = scmp.eq.s32.totalorder %s33, 1
      %p93 = por %p91, %p92
      %p94 = scmp.ne.s32.totalorder %s85, %s86
      %p95 = scmp.eq.s32.totalorder %s33, 0
      %p96 = por %p94, %p95
      %p97 = scmp.ne.s32.totalorder %s85, %s86
      %p98 = scmp.eq.s32.totalorder %s34, 1
      %p99 = por %p97, %p98
      %p101 = scmp.ne.s32.totalorder %s86, %s100
      %p102 = scmp.eq.s32.totalorder %s34, 0
      %p103 = por %p101, %p102
      %s105 = sadd.s32 %s104, 1
      %p108 = scmp.eq.s32.totalorder %s28, 1
      %p109 = scmp.ne.s32.totalorder %s104, %s106
      %p110 = scmp.eq.s32.totalorder %s28, 0
      %p111 = por %p109, %p110
      %p112 = scmp.ne.s32.totalorder %s104, %s106
      %p113 = scmp.eq.s32.totalorder %s33, 1
      %p114 = por %p112, %p113
      %p115 = scmp.ne.s32.totalorder %s106, %s107
      %p116 = scmp.eq.s32.totalorder %s33, 0
      %p117 = por %p115, %p116
      %p118 = scmp.ne.s32.totalorder %s106, %s107
      %p119 = scmp.eq.s32.totalorder %s34, 1
      %p120 = por %p118, %p119
      %p122 = scmp.ne.s32.totalorder %s107, %s121
      %p123 = scmp.eq.s32.totalorder %s34, 0
      %p124 = por %p122, %p123
      %s126 = sadd.s32 %s125, 1
      %p129 = scmp.eq.s32.totalorder %s28, 1
      %p130 = scmp.ne.s32.totalorder %s125, %s127
      %p131 = scmp.eq.s32.totalorder %s28, 0
      %p132 = por %p130, %p131
      %p133 = scmp.ne.s32.totalorder %s125, %s127
      %p134 = scmp.eq.s32.totalorder %s33, 1
      %p135 = por %p133, %p134
      %p136 = scmp.ne.s32.totalorder %s127, %s128
      %p137 = scmp.eq.s32.totalorder %s33, 0
      %p138 = por %p136, %p137
      %p139 = scmp.ne.s32.totalorder %s127, %s128
      %p140 = scmp.eq.s32.totalorder %s34, 1
      %p141 = por %p139, %p140
      %p143 = scmp.ne.s32.totalorder %s128, %s142
      %p144 = scmp.eq.s32.totalorder %s34, 0
      %p145 = por %p143, %p144
      %s147 = sadd.s32 %s146, 1
      %p150 = scmp.eq.s32.totalorder %s28, 1
      %p151 = scmp.ne.s32.totalorder %s146, %s148
      %p152 = scmp.eq.s32.totalorder %s28, 0
      %p153 = por %p151, %p152
      %p154 = scmp.ne.s32.totalorder %s146, %s148
      %p155 = scmp.eq.s32.totalorder %s33, 1
      %p156 = por %p154, %p155
      %p157 = scmp.ne.s32.totalorder %s148, %s149
      %p158 = scmp.eq.s32.totalorder %s33, 0
      %p159 = por %p157, %p158
      %p160 = scmp.ne.s32.totalorder %s148, %s149
      %p161 = scmp.eq.s32.totalorder %s34, 1
      %p162 = por %p160, %p161
      %p164 = scmp.ne.s32.totalorder %s149, %s163
      %p165 = scmp.eq.s32.totalorder %s34, 0
      %p166 = por %p164, %p165
      %s168 = sadd.s32 %s167, 1
      %p171 = scmp.eq.s32.totalorder %s28, 1
      %p172 = scmp.ne.s32.totalorder %s167, %s169
      %p173 = scmp.eq.s32.totalorder %s28, 0
      %p174 = por %p172, %p173
      %p175 = scmp.ne.s32.totalorder %s167, %s169
      %p176 = scmp.eq.s32.totalorder %s33, 1
      %p177 = por %p175, %p176
      %p178 = scmp.ne.s32.totalorder %s169, %s170
      %p179 = scmp.eq.s32.totalorder %s33, 0
      %p180 = por %p178, %p179
      %p181 = scmp.ne.s32.totalorder %s169, %s170
      %p182 = scmp.eq.s32.totalorder %s34, 1
      %p183 = por %p181, %p182
      %p185 = scmp.ne.s32.totalorder %s170, %s184
      %p186 = scmp.eq.s32.totalorder %s34, 0
      %p187 = por %p185, %p186
      %s189 = sadd.s32 %s188, 1
      %p192 = scmp.eq.s32.totalorder %s28, 1
      %p193 = scmp.ne.s32.totalorder %s188, %s190
      %p194 = scmp.eq.s32.totalorder %s28, 0
      %p195 = por %p193, %p194
      %p196 = scmp.ne.s32.totalorder %s188, %s190
      %p197 = scmp.eq.s32.totalorder %s33, 1
      %p198 = por %p196, %p197
      %p199 = scmp.ne.s32.totalorder %s190, %s191
      %p200 = scmp.eq.s32.totalorder %s33, 0
      %p201 = por %p199, %p200
      %p202 = scmp.ne.s32.totalorder %s190, %s191
      %p203 = scmp.eq.s32.totalorder %s34, 1
      %p204 = por %p202, %p203
      %p206 = scmp.ne.s32.totalorder %s191, %s205
      %p207 = scmp.eq.s32.totalorder %s34, 0
      %p208 = por %p206, %p207
      %s210 = sadd.s32 %s209, 1
      %p213 = scmp.eq.s32.totalorder %s28, 1
      %p214 = scmp.ne.s32.totalorder %s209, %s211
      %p215 = scmp.eq.s32.totalorder %s28, 0
      %p216 = por %p214, %p215
      %p217 = scmp.ne.s32.totalorder %s209, %s211
      %p218 = scmp.eq.s32.totalorder %s33, 1
      %p219 = por %p217, %p218
      %p220 = scmp.ne.s32.totalorder %s211, %s212
      %p221 = scmp.eq.s32.totalorder %s33, 0
      %p222 = por %p220, %p221
      %p223 = scmp.ne.s32.totalorder %s211, %s212
      %p224 = scmp.eq.s32.totalorder %s34, 1
      %p225 = por %p223, %p224
      %p227 = scmp.ne.s32.totalorder %s212, %s226
      %p228 = scmp.eq.s32.totalorder %s34, 0
      %p229 = por %p227, %p228
      %s231 = sadd.s32 %s230, 1
      %p234 = scmp.eq.s32.totalorder %s28, 1
      %p235 = scmp.ne.s32.totalorder %s230, %s232
      %p236 = scmp.eq.s32.totalorder %s28, 0
      %p237 = por %p235, %p236
      %p238 = scmp.ne.s32.totalorder %s230, %s232
      %p239 = scmp.eq.s32.totalorder %s33, 1
      %p240 = por %p238, %p239
      %p241 = scmp.ne.s32.totalorder %s232, %s233
      %p242 = scmp.eq.s32.totalorder %s33, 0
      %p243 = por %p241, %p242
      %p244 = scmp.ne.s32.totalorder %s232, %s233
      %p245 = scmp.eq.s32.totalorder %s34, 1
      %p246 = por %p244, %p245
      %p248 = scmp.ne.s32.totalorder %s233, %s247
      %p249 = scmp.eq.s32.totalorder %s34, 0
      %p250 = por %p248, %p249
      %s252 = sadd.s32 %s251, 1
      %p255 = scmp.eq.s32.totalorder %s28, 1
      %p256 = scmp.ne.s32.totalorder %s251, %s253
      %p257 = scmp.eq.s32.totalorder %s28, 0
      %p258 = por %p256, %p257
      %p259 = scmp.ne.s32.totalorder %s251, %s253
      %p260 = scmp.eq.s32.totalorder %s33, 1
      %p261 = por %p259, %p260
      %p262 = scmp.ne.s32.totalorder %s253, %s254
      %p263 = scmp.eq.s32.totalorder %s33, 0
      %p264 = por %p262, %p263
      %p265 = scmp.ne.s32.totalorder %s253, %s254
      %p266 = scmp.eq.s32.totalorder %s34, 1
      %p267 = por %p265, %p266
      %p269 = scmp.ne.s32.totalorder %s254, %s268
      %p270 = scmp.eq.s32.totalorder %s34, 0
      %p271 = por %p269, %p270
      %s273 = sadd.s32 %s272, 1
      %p276 = scmp.eq.s32.totalorder %s28, 1
      %p277 = scmp.ne.s32.totalorder %s272, %s274
      %p278 = scmp.eq.s32.totalorder %s28, 0
      %p279 = por %p277, %p278
      %p280 = scmp.ne.s32.totalorder %s272, %s274
      %p281 = scmp.eq.s32.totalorder %s33, 1
      %p282 = por %p280, %p281
      %p283 = scmp.ne.s32.totalorder %s274, %s275
      %p284 = scmp.eq.s32.totalorder %s33, 0
      %p285 = por %p283, %p284
      %p286 = scmp.ne.s32.totalorder %s274, %s275
      %p287 = scmp.eq.s32.totalorder %s34, 1
      %p288 = por %p286, %p287
      %p290 = scmp.ne.s32.totalorder %s275, %s289
      %p291 = scmp.eq.s32.totalorder %s34, 0
      %p292 = por %p290, %p291
      %s294 = sadd.s32 %s293, 1
      %p297 = scmp.eq.s32.totalorder %s28, 1
      %p298 = scmp.ne.s32.totalorder %s293, %s295
      %p299 = scmp.eq.s32.totalorder %s28, 0
      %p300 = por %p298, %p299
      %p301 = scmp.ne.s32.totalorder %s293, %s295
      %p302 = scmp.eq.s32.totalorder %s33, 1
      %p303 = por %p301, %p302
      %p304 = scmp.ne.s32.totalorder %s295, %s296
      %p305 = scmp.eq.s32.totalorder %s33, 0
      %p306 = por %p304, %p305
      %p307 = scmp.ne.s32.totalorder %s295, %s296
      %p308 = scmp.eq.s32.totalorder %s34, 1
      %p309 = por %p307, %p308
      %p311 = scmp.ne.s32.totalorder %s296, %s310
      %p312 = scmp.eq.s32.totalorder %s34, 0
      %p313 = por %p311, %p312
      %s315 = sadd.s32 %s314, 1
      %p318 = scmp.eq.s32.totalorder %s28, 1
      %p319 = scmp.ne.s32.totalorder %s314, %s316
      %p320 = scmp.eq.s32.totalorder %s28, 0
      %p321 = por %p319, %p320
      %p322 = scmp.ne.s32.totalorder %s314, %s316
      %p323 = scmp.eq.s32.totalorder %s33, 1
      %p324 = por %p322, %p323
      %p325 = scmp.ne.s32.totalorder %s316, %s317
      %p326 = scmp.eq.s32.totalorder %s33, 0
      %p327 = por %p325, %p326
      %p328 = scmp.ne.s32.totalorder %s316, %s317
      %p329 = scmp.eq.s32.totalorder %s34, 1
      %p330 = por %p328, %p329
      %p332 = scmp.ne.s32.totalorder %s317, %s331
      %p333 = scmp.eq.s32.totalorder %s34, 0
      %p334 = por %p332, %p333
      %s336 = sadd.s32 %s335, 1
      %p339 = scmp.eq.s32.totalorder %s28, 1
      %p340 = scmp.ne.s32.totalorder %s335, %s337
      %p341 = scmp.eq.s32.totalorder %s28, 0
      %p342 = por %p340, %p341
      %p343 = scmp.ne.s32.totalorder %s335, %s337
      %p344 = scmp.eq.s32.totalorder %s33, 1
      %p345 = por %p343, %p344
      %p346 = scmp.ne.s32.totalorder %s337, %s338
      %p347 = scmp.eq.s32.totalorder %s33, 0
      %p348 = por %p346, %p347
      %p349 = scmp.ne.s32.totalorder %s337, %s338
      %p350 = scmp.eq.s32.totalorder %s34, 1
      %p351 = por %p349, %p350
      %p353 = scmp.ne.s32.totalorder %s338, %s352
      %p354 = scmp.eq.s32.totalorder %s34, 0
      %p355 = por %p353, %p354
      %s357 = sadd.s32 %s356, 1
      %p360 = scmp.eq.s32.totalorder %s28, 1
      %p361 = scmp.ne.s32.totalorder %s356, %s358
      %p362 = scmp.eq.s32.totalorder %s28, 0
      %p363 = por %p361, %p362
      %p364 = scmp.ne.s32.totalorder %s356, %s358
      %p365 = scmp.eq.s32.totalorder %s33, 1
      %p366 = por %p364, %p365
      %p367 = scmp.ne.s32.totalorder %s358, %s359
      %p368 = scmp.eq.s32.totalorder %s33, 0
      %p369 = por %p367, %p368
      %p370 = scmp.ne.s32.totalorder %s358, %s359
      %p371 = scmp.eq.s32.totalorder %s34, 1
      %p372 = por %p370, %p371
      %p374 = scmp.ne.s32.totalorder %s359, %s373
      %p375 = scmp.eq.s32.totalorder %s34, 0
      %p376 = por %p374, %p375
      %s378 = sadd.s32 %s377, 1
      %p381 = scmp.eq.s32.totalorder %s28, 1
      %p382 = scmp.ne.s32.totalorder %s377, %s379
      %p383 = scmp.eq.s32.totalorder %s28, 0
      %p384 = por %p382, %p383
      %p385 = scmp.ne.s32.totalorder %s377, %s379
      %p386 = scmp.eq.s32.totalorder %s33, 1
      %p387 = por %p385, %p386
      %p388 = scmp.ne.s32.totalorder %s379, %s380
      %p389 = scmp.eq.s32.totalorder %s33, 0
      %p390 = por %p388, %p389
      %p391 = scmp.ne.s32.totalorder %s379, %s380
      %p392 = scmp.eq.s32.totalorder %s34, 1
      %p393 = por %p391, %p392
      %p395 = scmp.ne.s32.totalorder %s380, %s394
      %p396 = scmp.eq.s32.totalorder %s34, 0
      %p397 = por %p395, %p396
      %s398 = ssub.s32 %s28, %s35
      %p399 = scmp.eq.s32.totalorder %s398, 0
      %s401 = sadd.s32 %s400, 1
      %s402 = scalar_select %p399, %s400, %s401
      %p405 = pneg %p399
      %p406 = scmp.eq.s32.totalorder %s28, 1
      %p407 = por %p405, %p406
      %p408 = scmp.ne.s32.totalorder %s400, %s403
      %p409 = scmp.eq.s32.totalorder %s28, 0
      %p410 = por %p408, %p409
      %p411 = scmp.ne.s32.totalorder %s400, %s403
      %p412 = scmp.eq.s32.totalorder %s33, 1
      %p413 = por %p411, %p412
      %p414 = scmp.ne.s32.totalorder %s403, %s404
      %p415 = scmp.eq.s32.totalorder %s33, 0
      %p416 = por %p414, %p415
      %p417 = scmp.ne.s32.totalorder %s403, %s404
      %p418 = scmp.eq.s32.totalorder %s34, 1
      %p419 = por %p417, %p418
      %p421 = scmp.ne.s32.totalorder %s404, %s420
      %p422 = scmp.eq.s32.totalorder %s34, 0
      %p423 = por %p421, %p422
      %p424 = scmp.le.s32.totalorder 1, %s28
      %p425 = scmp.lt.s32.totalorder %s28, 3
      %p426 = pnand %p424, %p425
      %p427 = pneg %p426
      // Predicated region
      $region9: #{tpu_custom_call.1} parent=5 // pred_check
        _
      $region10: #{tpu_custom_call.1} parent=5 // pred_check_branch
        %429 = sbr.rel (%p426) target = $region12
      $region11: #{tpu_custom_call.1} parent=5 // pred_region
        %s430 = ssub.s32 %s28, 1
        // Predicated region
        $region13: #{tpu_custom_call.1} parent=11 // pred_check
          %p431 = pneg %p75
        $region14: #{tpu_custom_call.1} parent=11 // pred_check_branch
          %433 = sbr.rel (%p431) target = $region16
        $region15: #{tpu_custom_call.1} parent=11 // pred_region
          _
        $region16: #{tpu_custom_call.1} parent=11 // pred_fallthru
          _
        // Predicated region
        $region17: #{tpu_custom_call.1} parent=11 // pred_check
          %p434 = pneg %p96
        $region18: #{tpu_custom_call.1} parent=11 // pred_check_branch
          %436 = sbr.rel (%p434) target = $region20
        $region19: #{tpu_custom_call.1} parent=11 // pred_region
          _
        $region20: #{tpu_custom_call.1} parent=11 // pred_fallthru
          _
        // Predicated region
        $region21: #{tpu_custom_call.1} parent=11 // pred_check
          %p437 = pneg %p117
        $region22: #{tpu_custom_call.1} parent=11 // pred_check_branch
          %439 = sbr.rel (%p437) target = $region24
        $region23: #{tpu_custom_call.1} parent=11 // pred_region
          _
        $region24: #{tpu_custom_call.1} parent=11 // pred_fallthru
          _
        // Predicated region
        $region25: #{tpu_custom_call.1} parent=11 // pred_check
          %p440 = pneg %p138
        $region26: #{tpu_custom_call.1} parent=11 // pred_check_branch
          %442 = sbr.rel (%p440) target = $region28
        $region27: #{tpu_custom_call.1} parent=11 // pred_region
          _
        $region28: #{tpu_custom_call.1} parent=11 // pred_fallthru
          _
        // Predicated region
        $region29: #{tpu_custom_call.1} parent=11 // pred_check
          %p443 = pneg %p159
        $region30: #{tpu_custom_call.1} parent=11 // pred_check_branch
          %445 = sbr.rel (%p443) target = $region32
        $region31: #{tpu_custom_call.1} parent=11 // pred_region
          %s447 = ssub.s32 512, 512
          %448 = vsyncadd [#allocation3], %s447
          %s449 = sshll.u32 [#allocation2], 4
          %s450 = int_to_ptr.vmem [resolvable:$true] %s449
          %455 = dma.hbm_to_vmem [thread:$0]  %s5, 512, %s450, [#allocation3], 128, 128, 8
        $region32: #{tpu_custom_call.1} parent=11 // pred_fallthru
          _
        // Predicated region
        $region33: #{tpu_custom_call.1} parent=11 // pred_check
          %p456 = pneg %p180
        $region34: #{tpu_custom_call.1} parent=11 // pred_check_branch
          %458 = sbr.rel (%p456) target = $region36
        $region35: #{tpu_custom_call.1} parent=11 // pred_region
          _
        $region36: #{tpu_custom_call.1} parent=11 // pred_fallthru
          _
        // Predicated region
        $region37: #{tpu_custom_call.1} parent=11 // pred_check
          %p459 = pneg %p201
        $region38: #{tpu_custom_call.1} parent=11 // pred_check_branch
          %461 = sbr.rel (%p459) target = $region40
        $region39: #{tpu_custom_call.1} parent=11 // pred_region
          %s463 = ssub.s32 512, 512
          %464 = vsyncadd [#allocation6], %s463
          %s465 = sshll.u32 [#allocation5], 4
          %s466 = int_to_ptr.vmem [resolvable:$true] %s465
          %471 = dma.hbm_to_vmem [thread:$0]  %s7, 512, %s466, [#allocation6], 128, 128, 8
        $region40: #{tpu_custom_call.1} parent=11 // pred_fallthru
          _
        // Predicated region
        $region41: #{tpu_custom_call.1} parent=11 // pred_check
          %p472 = pneg %p222
        $region42: #{tpu_custom_call.1} parent=11 // pred_check_branch
          %474 = sbr.rel (%p472) target = $region44
        $region43: #{tpu_custom_call.1} parent=11 // pred_region
          _
        $region44: #{tpu_custom_call.1} parent=11 // pred_fallthru
          _
        // Predicated region
        $region45: #{tpu_custom_call.1} parent=11 // pred_check
          %p475 = pneg %p243
        $region46: #{tpu_custom_call.1} parent=11 // pred_check_branch
          %477 = sbr.rel (%p475) target = $region48
        $region47: #{tpu_custom_call.1} parent=11 // pred_region
          _
        $region48: #{tpu_custom_call.1} parent=11 // pred_fallthru
          _
        // Predicated region
        $region49: #{tpu_custom_call.1} parent=11 // pred_check
          %p478 = pneg %p264
        $region50: #{tpu_custom_call.1} parent=11 // pred_check_branch
          %480 = sbr.rel (%p478) target = $region52
        $region51: #{tpu_custom_call.1} parent=11 // pred_region
          _
        $region52: #{tpu_custom_call.1} parent=11 // pred_fallthru
          _
        // Predicated region
        $region53: #{tpu_custom_call.1} parent=11 // pred_check
          %p481 = pneg %p285
        $region54: #{tpu_custom_call.1} parent=11 // pred_check_branch
          %483 = sbr.rel (%p481) target = $region56
        $region55: #{tpu_custom_call.1} parent=11 // pred_region
          %s485 = ssub.s32 512, 512
          %486 = vsyncadd [#allocation6], %s485
          %s487 = sshll.u32 [#allocation7], 4
          %s488 = int_to_ptr.vmem [resolvable:$true] %s487
          %493 = dma.hbm_to_vmem [thread:$0]  %s11, 512, %s488, [#allocation6], 128, 128, 8
        $region56: #{tpu_custom_call.1} parent=11 // pred_fallthru
          _
        // Predicated region
        $region57: #{tpu_custom_call.1} parent=11 // pred_check
          %p494 = pneg %p306
        $region58: #{tpu_custom_call.1} parent=11 // pred_check_branch
          %496 = sbr.rel (%p494) target = $region60
        $region59: #{tpu_custom_call.1} parent=11 // pred_region
          _
        $region60: #{tpu_custom_call.1} parent=11 // pred_fallthru
          _
        // Predicated region
        $region61: #{tpu_custom_call.1} parent=11 // pred_check
          %p497 = pneg %p327
        $region62: #{tpu_custom_call.1} parent=11 // pred_check_branch
          %499 = sbr.rel (%p497) target = $region64
        $region63: #{tpu_custom_call.1} parent=11 // pred_region
          _
        $region64: #{tpu_custom_call.1} parent=11 // pred_fallthru
          _
        // Predicated region
        $region65: #{tpu_custom_call.1} parent=11 // pred_check
          %p500 = pneg %p348
        $region66: #{tpu_custom_call.1} parent=11 // pred_check_branch
          %502 = sbr.rel (%p500) target = $region68
        $region67: #{tpu_custom_call.1} parent=11 // pred_region
          _
        $region68: #{tpu_custom_call.1} parent=11 // pred_fallthru
          _
        // Predicated region
        $region69: #{tpu_custom_call.1} parent=11 // pred_check
          %p503 = pneg %p369
        $region70: #{tpu_custom_call.1} parent=11 // pred_check_branch
          %505 = sbr.rel (%p503) target = $region72
        $region71: #{tpu_custom_call.1} parent=11 // pred_region
          _
        $region72: #{tpu_custom_call.1} parent=11 // pred_fallthru
          _
        // Predicated region
        $region73: #{tpu_custom_call.1} parent=11 // pred_check
          %p506 = pneg %p390
        $region74: #{tpu_custom_call.1} parent=11 // pred_check_branch
          %508 = sbr.rel (%p506) target = $region76
        $region75: #{tpu_custom_call.1} parent=11 // pred_region
          _
        $region76: #{tpu_custom_call.1} parent=11 // pred_fallthru
          _
      $region12: #{tpu_custom_call.1} parent=5 // pred_fallthru
        _
      %p509 = scmp.lt.s32.totalorder %s28, 2
      // Predicated region
      $region77: #{tpu_custom_call.1} parent=5 // pred_check
        %p510 = pneg %p509
      $region78: #{tpu_custom_call.1} parent=5 // pred_check_branch
        %512 = sbr.rel (%p510) target = $region80
      $region79: #{tpu_custom_call.1} parent=5 // pred_region
        // Predicated region
        $region81: #{tpu_custom_call.1} parent=79 // pred_check
          %p513 = pneg %p48
        $region82: #{tpu_custom_call.1} parent=79 // pred_check_branch
          %515 = sbr.rel (%p513) target = $region84
        $region83: #{tpu_custom_call.1} parent=79 // pred_region
          %s516 = smul.u32 2, %s28
          %p517 = scmp.lt.s32.totalorder %s516, 3
          %s518 = scalar_select %p517, %s516, 3
          %s519 = smul.addr %s518, 8
          %s520 = scalar_lea.vmem %s0, %s519
          %s521 = smul.u32 2, %s28
        $region84: #{tpu_custom_call.1} parent=79 // pred_fallthru
          _
      $region80: #{tpu_custom_call.1} parent=5 // pred_fallthru
        _
      %p522 = scmp.le.s32.totalorder 1, %s28
      %p523 = scmp.lt.s32.totalorder %s28, 3
      %p524 = pnand %p522, %p523
      %p525 = pneg %p524
      // Predicated region
      $region85: #{tpu_custom_call.1} parent=5 // pred_check
        _
      $region86: #{tpu_custom_call.1} parent=5 // pred_check_branch
        %527 = sbr.rel (%p524) target = $region88
      $region87: #{tpu_custom_call.1} parent=5 // pred_region
        %s528 = ssub.s32 %s28, 1
        // Predicated region
        $region89: #{tpu_custom_call.1} parent=87 // pred_check
          %p529 = pneg %p159
        $region90: #{tpu_custom_call.1} parent=87 // pred_check_branch
          %531 = sbr.rel (%p529) target = $region92
        $region91: #{tpu_custom_call.1} parent=87 // pred_region
          %532 = dma.done [#allocation3], 512
        $region92: #{tpu_custom_call.1} parent=87 // pred_fallthru
          _
        // Predicated region
        $region93: #{tpu_custom_call.1} parent=87 // pred_check
          %p533 = pneg %p201
        $region94: #{tpu_custom_call.1} parent=87 // pred_check_branch
          %535 = sbr.rel (%p533) target = $region96
        $region95: #{tpu_custom_call.1} parent=87 // pred_region
          %536 = dma.done [#allocation6], 512
        $region96: #{tpu_custom_call.1} parent=87 // pred_fallthru
          _
        // Predicated region
        $region97: #{tpu_custom_call.1} parent=87 // pred_check
          %p537 = pneg %p285
        $region98: #{tpu_custom_call.1} parent=87 // pred_check_branch
          %539 = sbr.rel (%p537) target = $region100
        $region99: #{tpu_custom_call.1} parent=87 // pred_region
          %540 = dma.done [#allocation6], 512
        $region100: #{tpu_custom_call.1} parent=87 // pred_fallthru
          _
        %s541 = smul.u32 2, %s33
        %p542 = scmp.lt.s32.totalorder %s541, 3
        %s543 = scalar_select %p542, %s541, 3
        %s544 = smul.addr %s543, 8
        %s545 = scalar_lea.vmem %s0, %s544
        %p546 = pneg %p54
        %p547 = pneg %p51
        %p548 = pneg %p75
        %p549 = pneg %p72
        %p550 = pneg %p96
        %p551 = pneg %p93
        %p552 = pneg %p117
        %p553 = pneg %p114
        %p554 = pneg %p138
        %p555 = pneg %p135
        %p556 = pneg %p159
        %p557 = pneg %p156
        %p558 = pneg %p180
        %p559 = pneg %p177
        %p560 = pneg %p201
        %p561 = pneg %p198
        %p562 = pneg %p222
        %p563 = pneg %p219
        %p564 = pneg %p243
        %p565 = pneg %p240
        %p566 = pneg %p264
        %p567 = pneg %p261
        %p568 = pneg %p285
        %p569 = pneg %p282
        %p570 = pneg %p306
        %p571 = pneg %p303
        %p572 = pneg %p327
        %p573 = pneg %p324
        %p574 = pneg %p348
        %p575 = pneg %p345
        %p576 = pneg %p369
        %p577 = pneg %p366
        %p578 = pneg %p390
        %p579 = pneg %p387
        %p580 = pneg %p416
        %p581 = pneg %p413
        %s582 = sand.u32 %s403, 1
        %s583 = scalar_lea.sflag [#allocation4], %s582
        %s584 = sand.u32 %s403, 1
        %s585 = smul.addr %s584, 16
        %s586 = scalar_lea.vmem [#allocation8], %s585
        %s587 = smul.u32 2, %s33
        %p588 = scmp.lt.s32.totalorder %s587, 3
        %s589 = scalar_select %p588, %s587, 3
        %s590 = smul.addr %s589, 8
        %s591 = scalar_lea.vmem %s0, %s590
        %s592 = smul.u32 2, %s33
        %s593 = smul.u32 2, %s33
        %v594 = vld [vmem:[%s591] sm:$0xff]
        %v595 = vld [vmem:[%s591 + $0x8] sm:$0xff]
        %v596 = vld [vmem:[%s9] sm:$0x1]
        %v597 = vld [vmem:[%s10] sm:$0x1]
        %vm598 = vcmask 261120
        %v599 = vsel %vm598, %v594, 0.0
        %600 = vadd.xlane.f32.xlu0 %v599
        %v601 = vpop.xlane.xlu0 %600
        %v602 = vsel %vm598, %v595, 0.0
        %603 = vadd.xlane.f32.xlu0 %v602
        %v604 = vpop.xlane.xlu0 %603
        %v605 = vrcp.pop 32.0
        %v606 = vmul.f32 %v601, %v605
        %v607 = vmul.f32 %v604, %v605
        %v608 = vsub.f32 %v594, %v606
        %v609 = vsub.f32 %v595, %v607
        %v610 = vmul.f32 %v608, %v608
        %v611 = vmul.f32 %v609, %v609
        %v612 = vsel %vm598, %v610, 0.0
        %613 = vadd.xlane.f32.xlu0 %v612
        %v614 = vpop.xlane.xlu0 %613
        %v615 = vsel %vm598, %v611, 0.0
        %616 = vadd.xlane.f32.xlu0 %v615
        %v617 = vpop.xlane.xlu0 %616
        %v618 = vmul.f32 %v614, %v605
        %v619 = vmul.f32 %v617, %v605
        %v620 = vadd.f32 %v618, 1e-05
        %v621 = vadd.f32 %v619, 1e-05
        %v622 = vrsqrt.pop %v620
        %v623 = vrsqrt.pop %v621
        %v624 = vmul.f32 %v608, %v622
        %v625 = vmul.f32 %v609, %v623
        %v627 = vlaneseq
        %v628 = vshrl.u32 %v627, 7
        %v629 = vsub.s32 0, %v628
        %v630 = vrot.slane %v596, %v629
        %v632 = vmul.f32 %v624, %v630
        %v633 = vmul.f32 %v625, %v630
        %v635 = vlaneseq
        %v636 = vshrl.u32 %v635, 7
        %v637 = vsub.s32 0, %v636
        %v638 = vrot.slane %v597, %v637
        %v640 = vadd.f32 %v632, %v638
        %v641 = vadd.f32 %v633, %v638
        %v642 = vld [vmem:[%s1] sm:$0xff]
        %v643 = vld [vmem:[%s1 + $0x8] sm:$0xff]
        %v644 = vld [vmem:[%s1 + $0x10] sm:$0xff]
        %v645 = vld [vmem:[%s1 + $0x18] sm:$0xff]
        %v646 = vld [vmem:[%s2] sm:$0x1]
        %v648 = vlaneseq
        %v649 = vshrl.u32 %v648, 7
        %v650 = vsub.s32 0, %v649
        %v651 = vrot.slane %v646, %v650
        %v654 = vsel %vm598, %v640, 0
        %v657 = vsel %vm598, %v641, 0
        %659 = vmatprep.subr.mxu0 0.0
        %660 = vmatpush1.msra.mxu0 0.0
        %661 = vmatprep.subr.mxu0 0.0
        %662 = vmatpush1.msra.mxu0 0.0
        %663 = vmatprep.subr.mxu0 0.0
        %664 = vmatpush1.msra.mxu0 0.0
        %665 = vmatprep.subr.mxu0 0.0
        %666 = vmatpush1.msra.mxu0 0.0
        %667 = vmatprep.subr.mxu0 0.0
        %668 = vmatpush1.msra.mxu0 0.0
        %669 = vmatprep.subr.mxu0 0.0
        %670 = vmatpush1.msra.mxu0 0.0
        %671 = vmatprep.subr.mxu0 0.0
        %672 = vmatpush1.msra.mxu0 0.0
        %673 = vmatprep.subr.mxu0 0.0
        %674 = vmatpush1.msra.mxu0 0.0
        %675 = vmatprep.subr.mxu0 0.0
        %676 = vmatpush1.msra.mxu0 0.0
        %677 = vmatprep.subr.mxu0 0.0
        %678 = vmatpush1.msra.mxu0 0.0
        %679 = vmatprep.subr.mxu0 0.0
        %680 = vmatpush1.msra.mxu0 0.0
        %681 = vmatprep.subr.mxu0 0.0
        %682 = vmatpush1.msra.mxu0 0.0
        %683 = vmatprep.subr.mxu0 0.0
        %684 = vmatpush1.msra.mxu0 %v645
        %685 = vmatprep.subr.mxu0 0.0
        %686 = vmatpush1.msra.mxu0 %v644
        %687 = vmatprep.subr.mxu0 0.0
        %688 = vmatpush1.msra.mxu0 %v643
        %689 = vmatprep.subr.mxu0 0.0
        %690 = vmatpush1.msra.mxu0 %v642
        %691 = vmatprep.subr.mxu0 0.0
        %692 = vmatpush2.msra.mxu0 0.0
        %693 = vmatprep.subr.mxu0 0.0
        %694 = vmatpush2.msra.mxu0 0.0
        %695 = vmatprep.subr.mxu0 0.0
        %696 = vmatpush2.msra.mxu0 0.0
        %697 = vmatprep.subr.mxu0 0.0
        %698 = vmatpush2.msra.mxu0 0.0
        %699 = vmatprep.subr.mxu0 0.0
        %700 = vmatpush2.msra.mxu0 0.0
        %701 = vmatprep.subr.mxu0 0.0
        %702 = vmatpush2.msra.mxu0 0.0
        %703 = vmatprep.subr.mxu0 0.0
        %704 = vmatpush2.msra.mxu0 0.0
        %705 = vmatprep.subr.mxu0 0.0
        %706 = vmatpush2.msra.mxu0 0.0
        %707 = vmatprep.subr.mxu0 0.0
        %708 = vmatpush2.msra.mxu0 0.0
        %709 = vmatprep.subr.mxu0 0.0
        %710 = vmatpush2.msra.mxu0 0.0
        %711 = vmatprep.subr.mxu0 0.0
        %712 = vmatpush2.msra.mxu0 0.0
        %713 = vmatprep.subr.mxu0 0.0
        %714 = vmatpush2.msra.mxu0 0.0
        %715 = vmatprep.subr.mxu0 0.0
        %716 = vmatpush2.msra.mxu0 0.0
        %717 = vmatprep.subr.mxu0 0.0
        %718 = vmatpush2.msra.mxu0 0.0
        %719 = vmatprep.subr.mxu0 0.0
        %720 = vmatpush2.msra.mxu0 0.0
        %721 = vmatprep.subr.mxu0 0.0
        %722 = vmatpush2.msra.mxu0 0.0
        %723 = vmatprep.mubr.f32.mxu0 0.0
        %724 = vmatmul.mubr.f32.gmra.mxu0 %v654
        %v725 = vpop.f32.mrf.mxu0
        %v726 = vadd.f32 %v651, %v725
        %v727 = vpop.f32.mrf.mxu0
        %728 = vmatprep.mubr.f32.mxu0 0.0
        %729 = vmatmul.mubr.f32.gmra.mxu0 %v657
        %v730 = vpop.f32.mrf.mxu0
        %v731 = vadd.f32 %v651, %v730
        %v732 = vpop.f32.mrf.mxu0
        %733 = vdwg.mxu0
        %v734 = vld [vmem:[%s3] sm:$0xff]
        %v735 = vld [vmem:[%s3 + $0x8] sm:$0xff]
        %v736 = vld [vmem:[%s3 + $0x10] sm:$0xff]
        %v737 = vld [vmem:[%s3 + $0x18] sm:$0xff]
        %v738 = vld [vmem:[%s4] sm:$0x1]
        %v740 = vlaneseq
        %v741 = vshrl.u32 %v740, 7
        %v742 = vsub.s32 0, %v741
        %v743 = vrot.slane %v738, %v742
        %745 = vmatprep.subr.mxu0 0.0
        %746 = vmatpush1.msra.mxu0 0.0
        %747 = vmatprep.subr.mxu0 0.0
        %748 = vmatpush1.msra.mxu0 0.0
        %749 = vmatprep.subr.mxu0 0.0
        %750 = vmatpush1.msra.mxu0 0.0
        %751 = vmatprep.subr.mxu0 0.0
        %752 = vmatpush1.msra.mxu0 0.0
        %753 = vmatprep.subr.mxu0 0.0
        %754 = vmatpush1.msra.mxu0 0.0
        %755 = vmatprep.subr.mxu0 0.0
        %756 = vmatpush1.msra.mxu0 0.0
        %757 = vmatprep.subr.mxu0 0.0
        %758 = vmatpush1.msra.mxu0 0.0
        %759 = vmatprep.subr.mxu0 0.0
        %760 = vmatpush1.msra.mxu0 0.0
        %761 = vmatprep.subr.mxu0 0.0
        %762 = vmatpush1.msra.mxu0 0.0
        %763 = vmatprep.subr.mxu0 0.0
        %764 = vmatpush1.msra.mxu0 0.0
        %765 = vmatprep.subr.mxu0 0.0
        %766 = vmatpush1.msra.mxu0 0.0
        %767 = vmatprep.subr.mxu0 0.0
        %768 = vmatpush1.msra.mxu0 0.0
        %769 = vmatprep.subr.mxu0 0.0
        %770 = vmatpush1.msra.mxu0 %v737
        %771 = vmatprep.subr.mxu0 0.0
        %772 = vmatpush1.msra.mxu0 %v736
        %773 = vmatprep.subr.mxu0 0.0
        %774 = vmatpush1.msra.mxu0 %v735
        %775 = vmatprep.subr.mxu0 0.0
        %776 = vmatpush1.msra.mxu0 %v734
        %777 = vmatprep.subr.mxu0 0.0
        %778 = vmatpush2.msra.mxu0 0.0
        %779 = vmatprep.subr.mxu0 0.0
        %780 = vmatpush2.msra.mxu0 0.0
        %781 = vmatprep.subr.mxu0 0.0
        %782 = vmatpush2.msra.mxu0 0.0
        %783 = vmatprep.subr.mxu0 0.0
        %784 = vmatpush2.msra.mxu0 0.0
        %785 = vmatprep.subr.mxu0 0.0
        %786 = vmatpush2.msra.mxu0 0.0
        %787 = vmatprep.subr.mxu0 0.0
        %788 = vmatpush2.msra.mxu0 0.0
        %789 = vmatprep.subr.mxu0 0.0
        %790 = vmatpush2.msra.mxu0 0.0
        %791 = vmatprep.subr.mxu0 0.0
        %792 = vmatpush2.msra.mxu0 0.0
        %793 = vmatprep.subr.mxu0 0.0
        %794 = vmatpush2.msra.mxu0 0.0
        %795 = vmatprep.subr.mxu0 0.0
        %796 = vmatpush2.msra.mxu0 0.0
        %797 = vmatprep.subr.mxu0 0.0
        %798 = vmatpush2.msra.mxu0 0.0
        %799 = vmatprep.subr.mxu0 0.0
        %800 = vmatpush2.msra.mxu0 0.0
        %801 = vmatprep.subr.mxu0 0.0
        %802 = vmatpush2.msra.mxu0 0.0
        %803 = vmatprep.subr.mxu0 0.0
        %804 = vmatpush2.msra.mxu0 0.0
        %805 = vmatprep.subr.mxu0 0.0
        %806 = vmatpush2.msra.mxu0 0.0
        %807 = vmatprep.subr.mxu0 0.0
        %808 = vmatpush2.msra.mxu0 0.0
        %809 = vmatprep.mubr.f32.mxu0 0.0
        %810 = vmatmul.mubr.f32.gmra.mxu0 %v654
        %v811 = vpop.f32.mrf.mxu0
        %v812 = vadd.f32 %v743, %v811
        %v813 = vpop.f32.mrf.mxu0
        %814 = vmatprep.mubr.f32.mxu0 0.0
        %815 = vmatmul.mubr.f32.gmra.mxu0 %v657
        %v816 = vpop.f32.mrf.mxu0
        %v817 = vadd.f32 %v743, %v816
        %v818 = vpop.f32.mrf.mxu0
        %819 = vdwg.mxu0
        %v820 = vld [vmem:[#allocation2] sm:$0xff]
        %v821 = vld [vmem:[#allocation2 + $0x8] sm:$0xff]
        %v822 = vld [vmem:[#allocation2 + $0x10] sm:$0xff]
        %v823 = vld [vmem:[#allocation2 + $0x18] sm:$0xff]
        %v824 = vld [vmem:[%s6] sm:$0x1]
        %v826 = vlaneseq
        %v827 = vshrl.u32 %v826, 7
        %v828 = vsub.s32 0, %v827
        %v829 = vrot.slane %v824, %v828
        %831 = vmatprep.subr.mxu0 0.0
        %832 = vmatpush1.msra.mxu0 0.0
        %833 = vmatprep.subr.mxu0 0.0
        %834 = vmatpush1.msra.mxu0 0.0
        %835 = vmatprep.subr.mxu0 0.0
        %836 = vmatpush1.msra.mxu0 0.0
        %837 = vmatprep.subr.mxu0 0.0
        %838 = vmatpush1.msra.mxu0 0.0
        %839 = vmatprep.subr.mxu0 0.0
        %840 = vmatpush1.msra.mxu0 0.0
        %841 = vmatprep.subr.mxu0 0.0
        %842 = vmatpush1.msra.mxu0 0.0
        %843 = vmatprep.subr.mxu0 0.0
        %844 = vmatpush1.msra.mxu0 0.0
        %845 = vmatprep.subr.mxu0 0.0
        %846 = vmatpush1.msra.mxu0 0.0
        %847 = vmatprep.subr.mxu0 0.0
        %848 = vmatpush1.msra.mxu0 0.0
        %849 = vmatprep.subr.mxu0 0.0
        %850 = vmatpush1.msra.mxu0 0.0
        %851 = vmatprep.subr.mxu0 0.0
        %852 = vmatpush1.msra.mxu0 0.0
        %853 = vmatprep.subr.mxu0 0.0
        %854 = vmatpush1.msra.mxu0 0.0
        %855 = vmatprep.subr.mxu0 0.0
        %856 = vmatpush1.msra.mxu0 %v823
        %857 = vmatprep.subr.mxu0 0.0
        %858 = vmatpush1.msra.mxu0 %v822
        %859 = vmatprep.subr.mxu0 0.0
        %860 = vmatpush1.msra.mxu0 %v821
        %861 = vmatprep.subr.mxu0 0.0
        %862 = vmatpush1.msra.mxu0 %v820
        %863 = vmatprep.subr.mxu0 0.0
        %864 = vmatpush2.msra.mxu0 0.0
        %865 = vmatprep.subr.mxu0 0.0
        %866 = vmatpush2.msra.mxu0 0.0
        %867 = vmatprep.subr.mxu0 0.0
        %868 = vmatpush2.msra.mxu0 0.0
        %869 = vmatprep.subr.mxu0 0.0
        %870 = vmatpush2.msra.mxu0 0.0
        %871 = vmatprep.subr.mxu0 0.0
        %872 = vmatpush2.msra.mxu0 0.0
        %873 = vmatprep.subr.mxu0 0.0
        %874 = vmatpush2.msra.mxu0 0.0
        %875 = vmatprep.subr.mxu0 0.0
        %876 = vmatpush2.msra.mxu0 0.0
        %877 = vmatprep.subr.mxu0 0.0
        %878 = vmatpush2.msra.mxu0 0.0
        %879 = vmatprep.subr.mxu0 0.0
        %880 = vmatpush2.msra.mxu0 0.0
        %881 = vmatprep.subr.mxu0 0.0
        %882 = vmatpush2.msra.mxu0 0.0
        %883 = vmatprep.subr.mxu0 0.0
        %884 = vmatpush2.msra.mxu0 0.0
        %885 = vmatprep.subr.mxu0 0.0
        %886 = vmatpush2.msra.mxu0 0.0
        %887 = vmatprep.subr.mxu0 0.0
        %888 = vmatpush2.msra.mxu0 0.0
        %889 = vmatprep.subr.mxu0 0.0
        %890 = vmatpush2.msra.mxu0 0.0
        %891 = vmatprep.subr.mxu0 0.0
        %892 = vmatpush2.msra.mxu0 0.0
        %893 = vmatprep.subr.mxu0 0.0
        %894 = vmatpush2.msra.mxu0 0.0
        %895 = vmatprep.mubr.f32.mxu0 0.0
        %896 = vmatmul.mubr.f32.gmra.mxu0 %v654
        %v897 = vpop.f32.mrf.mxu0
        %v898 = vadd.f32 %v829, %v897
        %v899 = vpop.f32.mrf.mxu0
        %900 = vmatprep.mubr.f32.mxu0 0.0
        %901 = vmatmul.mubr.f32.gmra.mxu0 %v657
        %v902 = vpop.f32.mrf.mxu0
        %v903 = vadd.f32 %v829, %v902
        %v904 = vpop.f32.mrf.mxu0
        %905 = vdwg.mxu0
        %v906 = vmul.f32 %v726, 0.35355338
        %v907 = vmul.f32 %v731, 0.35355338
        %910 = vrot.lane.b32.xlu0 %v906, 120
        %v911 = vpop.permute.xlu0 %910
        %912 = vrot.lane.b32.xlu0 %v907, 120
        %v913 = vpop.permute.xlu0 %912
        %914 = vrot.lane.b32.xlu0 %v906, 112
        %v915 = vpop.permute.xlu0 %914
        %916 = vrot.lane.b32.xlu0 %v907, 112
        %v917 = vpop.permute.xlu0 %916
        %918 = vrot.lane.b32.xlu0 %v906, 104
        %v919 = vpop.permute.xlu0 %918
        %920 = vrot.lane.b32.xlu0 %v907, 104
        %v921 = vpop.permute.xlu0 %920
        %924 = vrot.lane.b32.xlu0 %v812, 120
        %v925 = vpop.permute.xlu0 %924
        %926 = vrot.lane.b32.xlu0 %v817, 120
        %v927 = vpop.permute.xlu0 %926
        %928 = vrot.lane.b32.xlu0 %v812, 112
        %v929 = vpop.permute.xlu0 %928
        %930 = vrot.lane.b32.xlu0 %v817, 112
        %v931 = vpop.permute.xlu0 %930
        %932 = vrot.lane.b32.xlu0 %v812, 104
        %v933 = vpop.permute.xlu0 %932
        %934 = vrot.lane.b32.xlu0 %v817, 104
        %v935 = vpop.permute.xlu0 %934
        %938 = vrot.lane.b32.xlu0 %v898, 120
        %v939 = vpop.permute.xlu0 %938
        %940 = vrot.lane.b32.xlu0 %v903, 120
        %v941 = vpop.permute.xlu0 %940
        %944 = vrot.lane.b32.xlu0 %v898, 112
        %v945 = vpop.permute.xlu0 %944
        %946 = vrot.lane.b32.xlu0 %v903, 112
        %v947 = vpop.permute.xlu0 %946
        %950 = vrot.lane.b32.xlu0 %v898, 104
        %v951 = vpop.permute.xlu0 %950
        %952 = vrot.lane.b32.xlu0 %v903, 104
        %v953 = vpop.permute.xlu0 %952
        %vm956 = vcmask 64512
        %v957 = vsel %vm956, %v906, 0
        %v959 = vsel %vm956, %v812, 0
        %961 = vmatprep.subr.mxu0 0.0
        %962 = vmatpush1.xpose.msra.mxu0 0.0
        %963 = vmatprep.subr.mxu0 0.0
        %964 = vmatpush1.xpose.msra.mxu0 0.0
        %965 = vmatprep.subr.mxu0 0.0
        %966 = vmatpush1.xpose.msra.mxu0 0.0
        %967 = vmatprep.subr.mxu0 0.0
        %968 = vmatpush1.xpose.msra.mxu0 0.0
        %969 = vmatprep.subr.mxu0 0.0
        %970 = vmatpush1.xpose.msra.mxu0 0.0
        %971 = vmatprep.subr.mxu0 0.0
        %972 = vmatpush1.xpose.msra.mxu0 0.0
        %973 = vmatprep.subr.mxu0 0.0
        %974 = vmatpush1.xpose.msra.mxu0 0.0
        %975 = vmatprep.subr.mxu0 0.0
        %976 = vmatpush1.xpose.msra.mxu0 0.0
        %977 = vmatprep.subr.mxu0 0.0
        %978 = vmatpush1.xpose.msra.mxu0 0.0
        %979 = vmatprep.subr.mxu0 0.0
        %980 = vmatpush1.xpose.msra.mxu0 0.0
        %981 = vmatprep.subr.mxu0 0.0
        %982 = vmatpush1.xpose.msra.mxu0 0.0
        %983 = vmatprep.subr.mxu0 0.0
        %984 = vmatpush1.xpose.msra.mxu0 0.0
        %985 = vmatprep.subr.mxu0 0.0
        %986 = vmatpush1.xpose.msra.mxu0 0.0
        %987 = vmatprep.subr.mxu0 0.0
        %988 = vmatpush1.xpose.msra.mxu0 0.0
        %989 = vmatprep.subr.mxu0 0.0
        %990 = vmatpush1.xpose.msra.mxu0 0.0
        %991 = vmatprep.subr.mxu0 0.0
        %992 = vmatpush1.xpose.msra.mxu0 %v959
        %993 = vmatprep.subr.mxu0 0.0
        %994 = vmatpush2.xpose.msra.mxu0 0.0
        %995 = vmatprep.subr.mxu0 0.0
        %996 = vmatpush2.xpose.msra.mxu0 0.0
        %997 = vmatprep.subr.mxu0 0.0
        %998 = vmatpush2.xpose.msra.mxu0 0.0
        %999 = vmatprep.subr.mxu0 0.0
        %1000 = vmatpush2.xpose.msra.mxu0 0.0
        %1001 = vmatprep.subr.mxu0 0.0
        %1002 = vmatpush2.xpose.msra.mxu0 0.0
        %1003 = vmatprep.subr.mxu0 0.0
        %1004 = vmatpush2.xpose.msra.mxu0 0.0
        %1005 = vmatprep.subr.mxu0 0.0
        %1006 = vmatpush2.xpose.msra.mxu0 0.0
        %1007 = vmatprep.subr.mxu0 0.0
        %1008 = vmatpush2.xpose.msra.mxu0 0.0
        %1009 = vmatprep.subr.mxu0 0.0
        %1010 = vmatpush2.xpose.msra.mxu0 0.0
        %1011 = vmatprep.subr.mxu0 0.0
        %1012 = vmatpush2.xpose.msra.mxu0 0.0
        %1013 = vmatprep.subr.mxu0 0.0
        %1014 = vmatpush2.xpose.msra.mxu0 0.0
        %1015 = vmatprep.subr.mxu0 0.0
        %1016 = vmatpush2.xpose.msra.mxu0 0.0
        %1017 = vmatprep.subr.mxu0 0.0
        %1018 = vmatpush2.xpose.msra.mxu0 0.0
        %1019 = vmatprep.subr.mxu0 0.0
        %1020 = vmatpush2.xpose.msra.mxu0 0.0
        %1021 = vmatprep.subr.mxu0 0.0
        %1022 = vmatpush2.xpose.msra.mxu0 0.0
        %1023 = vmatprep.subr.mxu0 0.0
        %1024 = vmatpush2.xpose.msra.mxu0 0.0
        %1025 = vmatprep.mubr.f32.mxu0 0.0
        %1026 = vmatmul.mubr.f32.gmra.mxu0 %v957
        %v1027 = vpop.f32.mrf.mxu0
        %v1028 = vadd.f32 0.0, %v1027
        %v1029 = vpop.f32.mrf.mxu0
        %1030 = vdwg.mxu0
        %v1031 = vsel %vm956, %v907, 0
        %v1033 = vsel %vm956, %v817, 0
        %1035 = vmatprep.subr.mxu0 0.0
        %1036 = vmatpush1.xpose.msra.mxu0 0.0
        %1037 = vmatprep.subr.mxu0 0.0
        %1038 = vmatpush1.xpose.msra.mxu0 0.0
        %1039 = vmatprep.subr.mxu0 0.0
        %1040 = vmatpush1.xpose.msra.mxu0 0.0
        %1041 = vmatprep.subr.mxu0 0.0
        %1042 = vmatpush1.xpose.msra.mxu0 0.0
        %1043 = vmatprep.subr.mxu0 0.0
        %1044 = vmatpush1.xpose.msra.mxu0 0.0
        %1045 = vmatprep.subr.mxu0 0.0
        %1046 = vmatpush1.xpose.msra.mxu0 0.0
        %1047 = vmatprep.subr.mxu0 0.0
        %1048 = vmatpush1.xpose.msra.mxu0 0.0
        %1049 = vmatprep.subr.mxu0 0.0
        %1050 = vmatpush1.xpose.msra.mxu0 0.0
        %1051 = vmatprep.subr.mxu0 0.0
        %1052 = vmatpush1.xpose.msra.mxu0 0.0
        %1053 = vmatprep.subr.mxu0 0.0
        %1054 = vmatpush1.xpose.msra.mxu0 0.0
        %1055 = vmatprep.subr.mxu0 0.0
        %1056 = vmatpush1.xpose.msra.mxu0 0.0
        %1057 = vmatprep.subr.mxu0 0.0
        %1058 = vmatpush1.xpose.msra.mxu0 0.0
        %1059 = vmatprep.subr.mxu0 0.0
        %1060 = vmatpush1.xpose.msra.mxu0 0.0
        %1061 = vmatprep.subr.mxu0 0.0
        %1062 = vmatpush1.xpose.msra.mxu0 0.0
        %1063 = vmatprep.subr.mxu0 0.0
        %1064 = vmatpush1.xpose.msra.mxu0 0.0
        %1065 = vmatprep.subr.mxu0 0.0
        %1066 = vmatpush1.xpose.msra.mxu0 %v1033
        %1067 = vmatprep.subr.mxu0 0.0
        %1068 = vmatpush2.xpose.msra.mxu0 0.0
        %1069 = vmatprep.subr.mxu0 0.0
        %1070 = vmatpush2.xpose.msra.mxu0 0.0
        %1071 = vmatprep.subr.mxu0 0.0
        %1072 = vmatpush2.xpose.msra.mxu0 0.0
        %1073 = vmatprep.subr.mxu0 0.0
        %1074 = vmatpush2.xpose.msra.mxu0 0.0
        %1075 = vmatprep.subr.mxu0 0.0
        %1076 = vmatpush2.xpose.msra.mxu0 0.0
        %1077 = vmatprep.subr.mxu0 0.0
        %1078 = vmatpush2.xpose.msra.mxu0 0.0
        %1079 = vmatprep.subr.mxu0 0.0
        %1080 = vmatpush2.xpose.msra.mxu0 0.0
        %1081 = vmatprep.subr.mxu0 0.0
        %1082 = vmatpush2.xpose.msra.mxu0 0.0
        %1083 = vmatprep.subr.mxu0 0.0
        %1084 = vmatpush2.xpose.msra.mxu0 0.0
        %1085 = vmatprep.subr.mxu0 0.0
        %1086 = vmatpush2.xpose.msra.mxu0 0.0
        %1087 = vmatprep.subr.mxu0 0.0
        %1088 = vmatpush2.xpose.msra.mxu0 0.0
        %1089 = vmatprep.subr.mxu0 0.0
        %1090 = vmatpush2.xpose.msra.mxu0 0.0
        %1091 = vmatprep.subr.mxu0 0.0
        %1092 = vmatpush2.xpose.msra.mxu0 0.0
        %1093 = vmatprep.subr.mxu0 0.0
        %1094 = vmatpush2.xpose.msra.mxu0 0.0
        %1095 = vmatprep.subr.mxu0 0.0
        %1096 = vmatpush2.xpose.msra.mxu0 0.0
        %1097 = vmatprep.subr.mxu0 0.0
        %1098 = vmatpush2.xpose.msra.mxu0 0.0
        %1099 = vmatprep.mubr.f32.mxu0 0.0
        %1100 = vmatmul.mubr.f32.gmra.mxu0 %v1031
        %v1101 = vpop.f32.mrf.mxu0
        %v1102 = vadd.f32 0.0, %v1101
        %v1103 = vpop.f32.mrf.mxu0
        %1104 = vdwg.mxu0
        %v1105 = vsel %vm956, %v911, 0
        %v1107 = vsel %vm956, %v925, 0
        %1109 = vmatprep.subr.mxu0 0.0
        %1110 = vmatpush1.xpose.msra.mxu0 0.0
        %1111 = vmatprep.subr.mxu0 0.0
        %1112 = vmatpush1.xpose.msra.mxu0 0.0
        %1113 = vmatprep.subr.mxu0 0.0
        %1114 = vmatpush1.xpose.msra.mxu0 0.0
        %1115 = vmatprep.subr.mxu0 0.0
        %1116 = vmatpush1.xpose.msra.mxu0 0.0
        %1117 = vmatprep.subr.mxu0 0.0
        %1118 = vmatpush1.xpose.msra.mxu0 0.0
        %1119 = vmatprep.subr.mxu0 0.0
        %1120 = vmatpush1.xpose.msra.mxu0 0.0
        %1121 = vmatprep.subr.mxu0 0.0
        %1122 = vmatpush1.xpose.msra.mxu0 0.0
        %1123 = vmatprep.subr.mxu0 0.0
        %1124 = vmatpush1.xpose.msra.mxu0 0.0
        %1125 = vmatprep.subr.mxu0 0.0
        %1126 = vmatpush1.xpose.msra.mxu0 0.0
        %1127 = vmatprep.subr.mxu0 0.0
        %1128 = vmatpush1.xpose.msra.mxu0 0.0
        %1129 = vmatprep.subr.mxu0 0.0
        %1130 = vmatpush1.xpose.msra.mxu0 0.0
        %1131 = vmatprep.subr.mxu0 0.0
        %1132 = vmatpush1.xpose.msra.mxu0 0.0
        %1133 = vmatprep.subr.mxu0 0.0
        %1134 = vmatpush1.xpose.msra.mxu0 0.0
        %1135 = vmatprep.subr.mxu0 0.0
        %1136 = vmatpush1.xpose.msra.mxu0 0.0
        %1137 = vmatprep.subr.mxu0 0.0
        %1138 = vmatpush1.xpose.msra.mxu0 0.0
        %1139 = vmatprep.subr.mxu0 0.0
        %1140 = vmatpush1.xpose.msra.mxu0 %v1107
        %1141 = vmatprep.subr.mxu0 0.0
        %1142 = vmatpush2.xpose.msra.mxu0 0.0
        %1143 = vmatprep.subr.mxu0 0.0
        %1144 = vmatpush2.xpose.msra.mxu0 0.0
        %1145 = vmatprep.subr.mxu0 0.0
        %1146 = vmatpush2.xpose.msra.mxu0 0.0
        %1147 = vmatprep.subr.mxu0 0.0
        %1148 = vmatpush2.xpose.msra.mxu0 0.0
        %1149 = vmatprep.subr.mxu0 0.0
        %1150 = vmatpush2.xpose.msra.mxu0 0.0
        %1151 = vmatprep.subr.mxu0 0.0
        %1152 = vmatpush2.xpose.msra.mxu0 0.0
        %1153 = vmatprep.subr.mxu0 0.0
        %1154 = vmatpush2.xpose.msra.mxu0 0.0
        %1155 = vmatprep.subr.mxu0 0.0
        %1156 = vmatpush2.xpose.msra.mxu0 0.0
        %1157 = vmatprep.subr.mxu0 0.0
        %1158 = vmatpush2.xpose.msra.mxu0 0.0
        %1159 = vmatprep.subr.mxu0 0.0
        %1160 = vmatpush2.xpose.msra.mxu0 0.0
        %1161 = vmatprep.subr.mxu0 0.0
        %1162 = vmatpush2.xpose.msra.mxu0 0.0
        %1163 = vmatprep.subr.mxu0 0.0
        %1164 = vmatpush2.xpose.msra.mxu0 0.0
        %1165 = vmatprep.subr.mxu0 0.0
        %1166 = vmatpush2.xpose.msra.mxu0 0.0
        %1167 = vmatprep.subr.mxu0 0.0
        %1168 = vmatpush2.xpose.msra.mxu0 0.0
        %1169 = vmatprep.subr.mxu0 0.0
        %1170 = vmatpush2.xpose.msra.mxu0 0.0
        %1171 = vmatprep.subr.mxu0 0.0
        %1172 = vmatpush2.xpose.msra.mxu0 0.0
        %1173 = vmatprep.mubr.f32.mxu0 0.0
        %1174 = vmatmul.mubr.f32.gmra.mxu0 %v1105
        %v1175 = vpop.f32.mrf.mxu0
        %v1176 = vadd.f32 0.0, %v1175
        %v1177 = vpop.f32.mrf.mxu0
        %1178 = vdwg.mxu0
        %v1179 = vsel %vm956, %v913, 0
        %v1181 = vsel %vm956, %v927, 0
        %1183 = vmatprep.subr.mxu0 0.0
        %1184 = vmatpush1.xpose.msra.mxu0 0.0
        %1185 = vmatprep.subr.mxu0 0.0
        %1186 = vmatpush1.xpose.msra.mxu0 0.0
        %1187 = vmatprep.subr.mxu0 0.0
        %1188 = vmatpush1.xpose.msra.mxu0 0.0
        %1189 = vmatprep.subr.mxu0 0.0
        %1190 = vmatpush1.xpose.msra.mxu0 0.0
        %1191 = vmatprep.subr.mxu0 0.0
        %1192 = vmatpush1.xpose.msra.mxu0 0.0
        %1193 = vmatprep.subr.mxu0 0.0
        %1194 = vmatpush1.xpose.msra.mxu0 0.0
        %1195 = vmatprep.subr.mxu0 0.0
        %1196 = vmatpush1.xpose.msra.mxu0 0.0
        %1197 = vmatprep.subr.mxu0 0.0
        %1198 = vmatpush1.xpose.msra.mxu0 0.0
        %1199 = vmatprep.subr.mxu0 0.0
        %1200 = vmatpush1.xpose.msra.mxu0 0.0
        %1201 = vmatprep.subr.mxu0 0.0
        %1202 = vmatpush1.xpose.msra.mxu0 0.0
        %1203 = vmatprep.subr.mxu0 0.0
        %1204 = vmatpush1.xpose.msra.mxu0 0.0
        %1205 = vmatprep.subr.mxu0 0.0
        %1206 = vmatpush1.xpose.msra.mxu0 0.0
        %1207 = vmatprep.subr.mxu0 0.0
        %1208 = vmatpush1.xpose.msra.mxu0 0.0
        %1209 = vmatprep.subr.mxu0 0.0
        %1210 = vmatpush1.xpose.msra.mxu0 0.0
        %1211 = vmatprep.subr.mxu0 0.0
        %1212 = vmatpush1.xpose.msra.mxu0 0.0
        %1213 = vmatprep.subr.mxu0 0.0
        %1214 = vmatpush1.xpose.msra.mxu0 %v1181
        %1215 = vmatprep.subr.mxu0 0.0
        %1216 = vmatpush2.xpose.msra.mxu0 0.0
        %1217 = vmatprep.subr.mxu0 0.0
        %1218 = vmatpush2.xpose.msra.mxu0 0.0
        %1219 = vmatprep.subr.mxu0 0.0
        %1220 = vmatpush2.xpose.msra.mxu0 0.0
        %1221 = vmatprep.subr.mxu0 0.0
        %1222 = vmatpush2.xpose.msra.mxu0 0.0
        %1223 = vmatprep.subr.mxu0 0.0
        %1224 = vmatpush2.xpose.msra.mxu0 0.0
        %1225 = vmatprep.subr.mxu0 0.0
        %1226 = vmatpush2.xpose.msra.mxu0 0.0
        %1227 = vmatprep.subr.mxu0 0.0
        %1228 = vmatpush2.xpose.msra.mxu0 0.0
        %1229 = vmatprep.subr.mxu0 0.0
        %1230 = vmatpush2.xpose.msra.mxu0 0.0
        %1231 = vmatprep.subr.mxu0 0.0
        %1232 = vmatpush2.xpose.msra.mxu0 0.0
        %1233 = vmatprep.subr.mxu0 0.0
        %1234 = vmatpush2.xpose.msra.mxu0 0.0
        %1235 = vmatprep.subr.mxu0 0.0
        %1236 = vmatpush2.xpose.msra.mxu0 0.0
        %1237 = vmatprep.subr.mxu0 0.0
        %1238 = vmatpush2.xpose.msra.mxu0 0.0
        %1239 = vmatprep.subr.mxu0 0.0
        %1240 = vmatpush2.xpose.msra.mxu0 0.0
        %1241 = vmatprep.subr.mxu0 0.0
        %1242 = vmatpush2.xpose.msra.mxu0 0.0
        %1243 = vmatprep.subr.mxu0 0.0
        %1244 = vmatpush2.xpose.msra.mxu0 0.0
        %1245 = vmatprep.subr.mxu0 0.0
        %1246 = vmatpush2.xpose.msra.mxu0 0.0
        %1247 = vmatprep.mubr.f32.mxu0 0.0
        %1248 = vmatmul.mubr.f32.gmra.mxu0 %v1179
        %v1249 = vpop.f32.mrf.mxu0
        %v1250 = vadd.f32 0.0, %v1249
        %v1251 = vpop.f32.mrf.mxu0
        %1252 = vdwg.mxu0
        %v1253 = vsel %vm956, %v915, 0
        %v1255 = vsel %vm956, %v929, 0
        %1257 = vmatprep.subr.mxu0 0.0
        %1258 = vmatpush1.xpose.msra.mxu0 0.0
        %1259 = vmatprep.subr.mxu0 0.0
        %1260 = vmatpush1.xpose.msra.mxu0 0.0
        %1261 = vmatprep.subr.mxu0 0.0
        %1262 = vmatpush1.xpose.msra.mxu0 0.0
        %1263 = vmatprep.subr.mxu0 0.0
        %1264 = vmatpush1.xpose.msra.mxu0 0.0
        %1265 = vmatprep.subr.mxu0 0.0
        %1266 = vmatpush1.xpose.msra.mxu0 0.0
        %1267 = vmatprep.subr.mxu0 0.0
        %1268 = vmatpush1.xpose.msra.mxu0 0.0
        %1269 = vmatprep.subr.mxu0 0.0
        %1270 = vmatpush1.xpose.msra.mxu0 0.0
        %1271 = vmatprep.subr.mxu0 0.0
        %1272 = vmatpush1.xpose.msra.mxu0 0.0
        %1273 = vmatprep.subr.mxu0 0.0
        %1274 = vmatpush1.xpose.msra.mxu0 0.0
        %1275 = vmatprep.subr.mxu0 0.0
        %1276 = vmatpush1.xpose.msra.mxu0 0.0
        %1277 = vmatprep.subr.mxu0 0.0
        %1278 = vmatpush1.xpose.msra.mxu0 0.0
        %1279 = vmatprep.subr.mxu0 0.0
        %1280 = vmatpush1.xpose.msra.mxu0 0.0
        %1281 = vmatprep.subr.mxu0 0.0
        %1282 = vmatpush1.xpose.msra.mxu0 0.0
        %1283 = vmatprep.subr.mxu0 0.0
        %1284 = vmatpush1.xpose.msra.mxu0 0.0
        %1285 = vmatprep.subr.mxu0 0.0
        %1286 = vmatpush1.xpose.msra.mxu0 0.0
        %1287 = vmatprep.subr.mxu0 0.0
        %1288 = vmatpush1.xpose.msra.mxu0 %v1255
        %1289 = vmatprep.subr.mxu0 0.0
        %1290 = vmatpush2.xpose.msra.mxu0 0.0
        %1291 = vmatprep.subr.mxu0 0.0
        %1292 = vmatpush2.xpose.msra.mxu0 0.0
        %1293 = vmatprep.subr.mxu0 0.0
        %1294 = vmatpush2.xpose.msra.mxu0 0.0
        %1295 = vmatprep.subr.mxu0 0.0
        %1296 = vmatpush2.xpose.msra.mxu0 0.0
        %1297 = vmatprep.subr.mxu0 0.0
        %1298 = vmatpush2.xpose.msra.mxu0 0.0
        %1299 = vmatprep.subr.mxu0 0.0
        %1300 = vmatpush2.xpose.msra.mxu0 0.0
        %1301 = vmatprep.subr.mxu0 0.0
        %1302 = vmatpush2.xpose.msra.mxu0 0.0
        %1303 = vmatprep.subr.mxu0 0.0
        %1304 = vmatpush2.xpose.msra.mxu0 0.0
        %1305 = vmatprep.subr.mxu0 0.0
        %1306 = vmatpush2.xpose.msra.mxu0 0.0
        %1307 = vmatprep.subr.mxu0 0.0
        %1308 = vmatpush2.xpose.msra.mxu0 0.0
        %1309 = vmatprep.subr.mxu0 0.0
        %1310 = vmatpush2.xpose.msra.mxu0 0.0
        %1311 = vmatprep.subr.mxu0 0.0
        %1312 = vmatpush2.xpose.msra.mxu0 0.0
        %1313 = vmatprep.subr.mxu0 0.0
        %1314 = vmatpush2.xpose.msra.mxu0 0.0
        %1315 = vmatprep.subr.mxu0 0.0
        %1316 = vmatpush2.xpose.msra.mxu0 0.0
        %1317 = vmatprep.subr.mxu0 0.0
        %1318 = vmatpush2.xpose.msra.mxu0 0.0
        %1319 = vmatprep.subr.mxu0 0.0
        %1320 = vmatpush2.xpose.msra.mxu0 0.0
        %1321 = vmatprep.mubr.f32.mxu0 0.0
        %1322 = vmatmul.mubr.f32.gmra.mxu0 %v1253
        %v1323 = vpop.f32.mrf.mxu0
        %v1324 = vadd.f32 0.0, %v1323
        %v1325 = vpop.f32.mrf.mxu0
        %1326 = vdwg.mxu0
        %v1327 = vsel %vm956, %v917, 0
        %v1329 = vsel %vm956, %v931, 0
        %1331 = vmatprep.subr.mxu0 0.0
        %1332 = vmatpush1.xpose.msra.mxu0 0.0
        %1333 = vmatprep.subr.mxu0 0.0
        %1334 = vmatpush1.xpose.msra.mxu0 0.0
        %1335 = vmatprep.subr.mxu0 0.0
        %1336 = vmatpush1.xpose.msra.mxu0 0.0
        %1337 = vmatprep.subr.mxu0 0.0
        %1338 = vmatpush1.xpose.msra.mxu0 0.0
        %1339 = vmatprep.subr.mxu0 0.0
        %1340 = vmatpush1.xpose.msra.mxu0 0.0
        %1341 = vmatprep.subr.mxu0 0.0
        %1342 = vmatpush1.xpose.msra.mxu0 0.0
        %1343 = vmatprep.subr.mxu0 0.0
        %1344 = vmatpush1.xpose.msra.mxu0 0.0
        %1345 = vmatprep.subr.mxu0 0.0
        %1346 = vmatpush1.xpose.msra.mxu0 0.0
        %1347 = vmatprep.subr.mxu0 0.0
        %1348 = vmatpush1.xpose.msra.mxu0 0.0
        %1349 = vmatprep.subr.mxu0 0.0
        %1350 = vmatpush1.xpose.msra.mxu0 0.0
        %1351 = vmatprep.subr.mxu0 0.0
        %1352 = vmatpush1.xpose.msra.mxu0 0.0
        %1353 = vmatprep.subr.mxu0 0.0
        %1354 = vmatpush1.xpose.msra.mxu0 0.0
        %1355 = vmatprep.subr.mxu0 0.0
        %1356 = vmatpush1.xpose.msra.mxu0 0.0
        %1357 = vmatprep.subr.mxu0 0.0
        %1358 = vmatpush1.xpose.msra.mxu0 0.0
        %1359 = vmatprep.subr.mxu0 0.0
        %1360 = vmatpush1.xpose.msra.mxu0 0.0
        %1361 = vmatprep.subr.mxu0 0.0
        %1362 = vmatpush1.xpose.msra.mxu0 %v1329
        %1363 = vmatprep.subr.mxu0 0.0
        %1364 = vmatpush2.xpose.msra.mxu0 0.0
        %1365 = vmatprep.subr.mxu0 0.0
        %1366 = vmatpush2.xpose.msra.mxu0 0.0
        %1367 = vmatprep.subr.mxu0 0.0
        %1368 = vmatpush2.xpose.msra.mxu0 0.0
        %1369 = vmatprep.subr.mxu0 0.0
        %1370 = vmatpush2.xpose.msra.mxu0 0.0
        %1371 = vmatprep.subr.mxu0 0.0
        %1372 = vmatpush2.xpose.msra.mxu0 0.0
        %1373 = vmatprep.subr.mxu0 0.0
        %1374 = vmatpush2.xpose.msra.mxu0 0.0
        %1375 = vmatprep.subr.mxu0 0.0
        %1376 = vmatpush2.xpose.msra.mxu0 0.0
        %1377 = vmatprep.subr.mxu0 0.0
        %1378 = vmatpush2.xpose.msra.mxu0 0.0
        %1379 = vmatprep.subr.mxu0 0.0
        %1380 = vmatpush2.xpose.msra.mxu0 0.0
        %1381 = vmatprep.subr.mxu0 0.0
        %1382 = vmatpush2.xpose.msra.mxu0 0.0
        %1383 = vmatprep.subr.mxu0 0.0
        %1384 = vmatpush2.xpose.msra.mxu0 0.0
        %1385 = vmatprep.subr.mxu0 0.0
        %1386 = vmatpush2.xpose.msra.mxu0 0.0
        %1387 = vmatprep.subr.mxu0 0.0
        %1388 = vmatpush2.xpose.msra.mxu0 0.0
        %1389 = vmatprep.subr.mxu0 0.0
        %1390 = vmatpush2.xpose.msra.mxu0 0.0
        %1391 = vmatprep.subr.mxu0 0.0
        %1392 = vmatpush2.xpose.msra.mxu0 0.0
        %1393 = vmatprep.subr.mxu0 0.0
        %1394 = vmatpush2.xpose.msra.mxu0 0.0
        %1395 = vmatprep.mubr.f32.mxu0 0.0
        %1396 = vmatmul.mubr.f32.gmra.mxu0 %v1327
        %v1397 = vpop.f32.mrf.mxu0
        %v1398 = vadd.f32 0.0, %v1397
        %v1399 = vpop.f32.mrf.mxu0
        %1400 = vdwg.mxu0
        %v1401 = vsel %vm956, %v919, 0
        %v1403 = vsel %vm956, %v933, 0
        %1405 = vmatprep.subr.mxu0 0.0
        %1406 = vmatpush1.xpose.msra.mxu0 0.0
        %1407 = vmatprep.subr.mxu0 0.0
        %1408 = vmatpush1.xpose.msra.mxu0 0.0
        %1409 = vmatprep.subr.mxu0 0.0
        %1410 = vmatpush1.xpose.msra.mxu0 0.0
        %1411 = vmatprep.subr.mxu0 0.0
        %1412 = vmatpush1.xpose.msra.mxu0 0.0
        %1413 = vmatprep.subr.mxu0 0.0
        %1414 = vmatpush1.xpose.msra.mxu0 0.0
        %1415 = vmatprep.subr.mxu0 0.0
        %1416 = vmatpush1.xpose.msra.mxu0 0.0
        %1417 = vmatprep.subr.mxu0 0.0
        %1418 = vmatpush1.xpose.msra.mxu0 0.0
        %1419 = vmatprep.subr.mxu0 0.0
        %1420 = vmatpush1.xpose.msra.mxu0 0.0
        %1421 = vmatprep.subr.mxu0 0.0
        %1422 = vmatpush1.xpose.msra.mxu0 0.0
        %1423 = vmatprep.subr.mxu0 0.0
        %1424 = vmatpush1.xpose.msra.mxu0 0.0
        %1425 = vmatprep.subr.mxu0 0.0
        %1426 = vmatpush1.xpose.msra.mxu0 0.0
        %1427 = vmatprep.subr.mxu0 0.0
        %1428 = vmatpush1.xpose.msra.mxu0 0.0
        %1429 = vmatprep.subr.mxu0 0.0
        %1430 = vmatpush1.xpose.msra.mxu0 0.0
        %1431 = vmatprep.subr.mxu0 0.0
        %1432 = vmatpush1.xpose.msra.mxu0 0.0
        %1433 = vmatprep.subr.mxu0 0.0
        %1434 = vmatpush1.xpose.msra.mxu0 0.0
        %1435 = vmatprep.subr.mxu0 0.0
        %1436 = vmatpush1.xpose.msra.mxu0 %v1403
        %1437 = vmatprep.subr.mxu0 0.0
        %1438 = vmatpush2.xpose.msra.mxu0 0.0
        %1439 = vmatprep.subr.mxu0 0.0
        %1440 = vmatpush2.xpose.msra.mxu0 0.0
        %1441 = vmatprep.subr.mxu0 0.0
        %1442 = vmatpush2.xpose.msra.mxu0 0.0
        %1443 = vmatprep.subr.mxu0 0.0
        %1444 = vmatpush2.xpose.msra.mxu0 0.0
        %1445 = vmatprep.subr.mxu0 0.0
        %1446 = vmatpush2.xpose.msra.mxu0 0.0
        %1447 = vmatprep.subr.mxu0 0.0
        %1448 = vmatpush2.xpose.msra.mxu0 0.0
        %1449 = vmatprep.subr.mxu0 0.0
        %1450 = vmatpush2.xpose.msra.mxu0 0.0
        %1451 = vmatprep.subr.mxu0 0.0
        %1452 = vmatpush2.xpose.msra.mxu0 0.0
        %1453 = vmatprep.subr.mxu0 0.0
        %1454 = vmatpush2.xpose.msra.mxu0 0.0
        %1455 = vmatprep.subr.mxu0 0.0
        %1456 = vmatpush2.xpose.msra.mxu0 0.0
        %1457 = vmatprep.subr.mxu0 0.0
        %1458 = vmatpush2.xpose.msra.mxu0 0.0
        %1459 = vmatprep.subr.mxu0 0.0
        %1460 = vmatpush2.xpose.msra.mxu0 0.0
        %1461 = vmatprep.subr.mxu0 0.0
        %1462 = vmatpush2.xpose.msra.mxu0 0.0
        %1463 = vmatprep.subr.mxu0 0.0
        %1464 = vmatpush2.xpose.msra.mxu0 0.0
        %1465 = vmatprep.subr.mxu0 0.0
        %1466 = vmatpush2.xpose.msra.mxu0 0.0
        %1467 = vmatprep.subr.mxu0 0.0
        %1468 = vmatpush2.xpose.msra.mxu0 0.0
        %1469 = vmatprep.mubr.f32.mxu0 0.0
        %1470 = vmatmul.mubr.f32.gmra.mxu0 %v1401
        %v1471 = vpop.f32.mrf.mxu0
        %v1472 = vadd.f32 0.0, %v1471
        %v1473 = vpop.f32.mrf.mxu0
        %1474 = vdwg.mxu0
        %v1475 = vsel %vm956, %v921, 0
        %v1477 = vsel %vm956, %v935, 0
        %1479 = vmatprep.subr.mxu0 0.0
        %1480 = vmatpush1.xpose.msra.mxu0 0.0
        %1481 = vmatprep.subr.mxu0 0.0
        %1482 = vmatpush1.xpose.msra.mxu0 0.0
        %1483 = vmatprep.subr.mxu0 0.0
        %1484 = vmatpush1.xpose.msra.mxu0 0.0
        %1485 = vmatprep.subr.mxu0 0.0
        %1486 = vmatpush1.xpose.msra.mxu0 0.0
        %1487 = vmatprep.subr.mxu0 0.0
        %1488 = vmatpush1.xpose.msra.mxu0 0.0
        %1489 = vmatprep.subr.mxu0 0.0
        %1490 = vmatpush1.xpose.msra.mxu0 0.0
        %1491 = vmatprep.subr.mxu0 0.0
        %1492 = vmatpush1.xpose.msra.mxu0 0.0
        %1493 = vmatprep.subr.mxu0 0.0
        %1494 = vmatpush1.xpose.msra.mxu0 0.0
        %1495 = vmatprep.subr.mxu0 0.0
        %1496 = vmatpush1.xpose.msra.mxu0 0.0
        %1497 = vmatprep.subr.mxu0 0.0
        %1498 = vmatpush1.xpose.msra.mxu0 0.0
        %1499 = vmatprep.subr.mxu0 0.0
        %1500 = vmatpush1.xpose.msra.mxu0 0.0
        %1501 = vmatprep.subr.mxu0 0.0
        %1502 = vmatpush1.xpose.msra.mxu0 0.0
        %1503 = vmatprep.subr.mxu0 0.0
        %1504 = vmatpush1.xpose.msra.mxu0 0.0
        %1505 = vmatprep.subr.mxu0 0.0
        %1506 = vmatpush1.xpose.msra.mxu0 0.0
        %1507 = vmatprep.subr.mxu0 0.0
        %1508 = vmatpush1.xpose.msra.mxu0 0.0
        %1509 = vmatprep.subr.mxu0 0.0
        %1510 = vmatpush1.xpose.msra.mxu0 %v1477
        %1511 = vmatprep.subr.mxu0 0.0
        %1512 = vmatpush2.xpose.msra.mxu0 0.0
        %1513 = vmatprep.subr.mxu0 0.0
        %1514 = vmatpush2.xpose.msra.mxu0 0.0
        %1515 = vmatprep.subr.mxu0 0.0
        %1516 = vmatpush2.xpose.msra.mxu0 0.0
        %1517 = vmatprep.subr.mxu0 0.0
        %1518 = vmatpush2.xpose.msra.mxu0 0.0
        %1519 = vmatprep.subr.mxu0 0.0
        %1520 = vmatpush2.xpose.msra.mxu0 0.0
        %1521 = vmatprep.subr.mxu0 0.0
        %1522 = vmatpush2.xpose.msra.mxu0 0.0
        %1523 = vmatprep.subr.mxu0 0.0
        %1524 = vmatpush2.xpose.msra.mxu0 0.0
        %1525 = vmatprep.subr.mxu0 0.0
        %1526 = vmatpush2.xpose.msra.mxu0 0.0
        %1527 = vmatprep.subr.mxu0 0.0
        %1528 = vmatpush2.xpose.msra.mxu0 0.0
        %1529 = vmatprep.subr.mxu0 0.0
        %1530 = vmatpush2.xpose.msra.mxu0 0.0
        %1531 = vmatprep.subr.mxu0 0.0
        %1532 = vmatpush2.xpose.msra.mxu0 0.0
        %1533 = vmatprep.subr.mxu0 0.0
        %1534 = vmatpush2.xpose.msra.mxu0 0.0
        %1535 = vmatprep.subr.mxu0 0.0
        %1536 = vmatpush2.xpose.msra.mxu0 0.0
        %1537 = vmatprep.subr.mxu0 0.0
        %1538 = vmatpush2.xpose.msra.mxu0 0.0
        %1539 = vmatprep.subr.mxu0 0.0
        %1540 = vmatpush2.xpose.msra.mxu0 0.0
        %1541 = vmatprep.subr.mxu0 0.0
        %1542 = vmatpush2.xpose.msra.mxu0 0.0
        %1543 = vmatprep.mubr.f32.mxu0 0.0
        %1544 = vmatmul.mubr.f32.gmra.mxu0 %v1475
        %v1545 = vpop.f32.mrf.mxu0
        %v1546 = vadd.f32 0.0, %v1545
        %v1547 = vpop.f32.mrf.mxu0
        %1548 = vdwg.mxu0
        %v1549 = vsel %vm956, %v1028, -inf
        %1550 = vmax.xlane.f32.xlu0 %v1549
        %v1551 = vpop.xlane.xlu0 %1550
        %v1552 = vsel %vm956, %v1102, -inf
        %1553 = vmax.xlane.f32.xlu0 %v1552
        %v1554 = vpop.xlane.xlu0 %1553
        %v1555 = vsel %vm956, %v1176, -inf
        %1556 = vmax.xlane.f32.xlu0 %v1555
        %v1557 = vpop.xlane.xlu0 %1556
        %v1558 = vsel %vm956, %v1250, -inf
        %1559 = vmax.xlane.f32.xlu0 %v1558
        %v1560 = vpop.xlane.xlu0 %1559
        %v1561 = vsel %vm956, %v1324, -inf
        %1562 = vmax.xlane.f32.xlu0 %v1561
        %v1563 = vpop.xlane.xlu0 %1562
        %v1564 = vsel %vm956, %v1398, -inf
        %1565 = vmax.xlane.f32.xlu0 %v1564
        %v1566 = vpop.xlane.xlu0 %1565
        %v1567 = vsel %vm956, %v1472, -inf
        %1568 = vmax.xlane.f32.xlu0 %v1567
        %v1569 = vpop.xlane.xlu0 %1568
        %v1570 = vsel %vm956, %v1546, -inf
        %1571 = vmax.xlane.f32.xlu0 %v1570
        %v1572 = vpop.xlane.xlu0 %1571
        %v1573 = vsub.f32 -inf, %v1551
        %v1574 = vsub.f32 -inf, %v1554
        %v1575 = vsub.f32 -inf, %v1557
        %v1576 = vsub.f32 -inf, %v1560
        %v1577 = vsub.f32 -inf, %v1563
        %v1578 = vsub.f32 -inf, %v1566
        %v1579 = vsub.f32 -inf, %v1569
        %v1580 = vsub.f32 -inf, %v1572
        %v1581 = vmul.f32 %v1573, 1.442695
        %v1582 = vpow.pop %v1581
        %v1583 = vmul.f32 %v1574, 1.442695
        %v1584 = vpow.pop %v1583
        %v1585 = vmul.f32 %v1575, 1.442695
        %v1586 = vpow.pop %v1585
        %v1587 = vmul.f32 %v1576, 1.442695
        %v1588 = vpow.pop %v1587
        %v1589 = vmul.f32 %v1577, 1.442695
        %v1590 = vpow.pop %v1589
        %v1591 = vmul.f32 %v1578, 1.442695
        %v1592 = vpow.pop %v1591
        %v1593 = vmul.f32 %v1579, 1.442695
        %v1594 = vpow.pop %v1593
        %v1595 = vmul.f32 %v1580, 1.442695
        %v1596 = vpow.pop %v1595
        %v1597 = vsub.f32 %v1028, %v1551
        %v1598 = vsub.f32 %v1102, %v1554
        %v1599 = vsub.f32 %v1176, %v1557
        %v1600 = vsub.f32 %v1250, %v1560
        %v1601 = vsub.f32 %v1324, %v1563
        %v1602 = vsub.f32 %v1398, %v1566
        %v1603 = vsub.f32 %v1472, %v1569
        %v1604 = vsub.f32 %v1546, %v1572
        %v1605 = vmul.f32 %v1597, 1.442695
        %v1606 = vpow.pop %v1605
        %v1607 = vmul.f32 %v1598, 1.442695
        %v1608 = vpow.pop %v1607
        %v1609 = vmul.f32 %v1599, 1.442695
        %v1610 = vpow.pop %v1609
        %v1611 = vmul.f32 %v1600, 1.442695
        %v1612 = vpow.pop %v1611
        %v1613 = vmul.f32 %v1601, 1.442695
        %v1614 = vpow.pop %v1613
        %v1615 = vmul.f32 %v1602, 1.442695
        %v1616 = vpow.pop %v1615
        %v1617 = vmul.f32 %v1603, 1.442695
        %v1618 = vpow.pop %v1617
        %v1619 = vmul.f32 %v1604, 1.442695
        %v1620 = vpow.pop %v1619
        %v1621 = vmul.f32 %v1582, 0.0
        %v1622 = vmul.f32 %v1584, 0.0
        %v1623 = vmul.f32 %v1586, 0.0
        %v1624 = vmul.f32 %v1588, 0.0
        %v1625 = vmul.f32 %v1590, 0.0
        %v1626 = vmul.f32 %v1592, 0.0
        %v1627 = vmul.f32 %v1594, 0.0
        %v1628 = vmul.f32 %v1596, 0.0
        %v1629 = vsel %vm956, %v1606, 0.0
        %1630 = vadd.xlane.f32.xlu0 %v1629
        %v1631 = vpop.xlane.xlu0 %1630
        %v1632 = vsel %vm956, %v1608, 0.0
        %1633 = vadd.xlane.f32.xlu0 %v1632
        %v1634 = vpop.xlane.xlu0 %1633
        %v1635 = vsel %vm956, %v1610, 0.0
        %1636 = vadd.xlane.f32.xlu0 %v1635
        %v1637 = vpop.xlane.xlu0 %1636
        %v1638 = vsel %vm956, %v1612, 0.0
        %1639 = vadd.xlane.f32.xlu0 %v1638
        %v1640 = vpop.xlane.xlu0 %1639
        %v1641 = vsel %vm956, %v1614, 0.0
        %1642 = vadd.xlane.f32.xlu0 %v1641
        %v1643 = vpop.xlane.xlu0 %1642
        %v1644 = vsel %vm956, %v1616, 0.0
        %1645 = vadd.xlane.f32.xlu0 %v1644
        %v1646 = vpop.xlane.xlu0 %1645
        %v1647 = vsel %vm956, %v1618, 0.0
        %1648 = vadd.xlane.f32.xlu0 %v1647
        %v1649 = vpop.xlane.xlu0 %1648
        %v1650 = vsel %vm956, %v1620, 0.0
        %1651 = vadd.xlane.f32.xlu0 %v1650
        %v1652 = vpop.xlane.xlu0 %1651
        %v1653 = vadd.f32 %v1621, %v1631
        %v1654 = vadd.f32 %v1622, %v1634
        %v1655 = vadd.f32 %v1623, %v1637
        %v1656 = vadd.f32 %v1624, %v1640
        %v1657 = vadd.f32 %v1625, %v1643
        %v1658 = vadd.f32 %v1626, %v1646
        %v1659 = vadd.f32 %v1627, %v1649
        %v1660 = vadd.f32 %v1628, %v1652
        %v1662 = vsel %vm956, %v1606, 0
        %1664 = vmatprep.subr.mxu0 0.0
        %1665 = vmatpush1.msra.mxu0 0.0
        %1666 = vmatprep.subr.mxu0 0.0
        %1667 = vmatpush1.msra.mxu0 0.0
        %1668 = vmatprep.subr.mxu0 0.0
        %1669 = vmatpush1.msra.mxu0 0.0
        %1670 = vmatprep.subr.mxu0 0.0
        %1671 = vmatpush1.msra.mxu0 0.0
        %1672 = vmatprep.subr.mxu0 0.0
        %1673 = vmatpush1.msra.mxu0 0.0
        %1674 = vmatprep.subr.mxu0 0.0
        %1675 = vmatpush1.msra.mxu0 0.0
        %1676 = vmatprep.subr.mxu0 0.0
        %1677 = vmatpush1.msra.mxu0 0.0
        %1678 = vmatprep.subr.mxu0 0.0
        %1679 = vmatpush1.msra.mxu0 0.0
        %1680 = vmatprep.subr.mxu0 0.0
        %1681 = vmatpush1.msra.mxu0 0.0
        %1682 = vmatprep.subr.mxu0 0.0
        %1683 = vmatpush1.msra.mxu0 0.0
        %1684 = vmatprep.subr.mxu0 0.0
        %1685 = vmatpush1.msra.mxu0 0.0
        %1686 = vmatprep.subr.mxu0 0.0
        %1687 = vmatpush1.msra.mxu0 0.0
        %1688 = vmatprep.subr.mxu0 0.0
        %1689 = vmatpush1.msra.mxu0 0.0
        %1690 = vmatprep.subr.mxu0 0.0
        %1691 = vmatpush1.msra.mxu0 0.0
        %1692 = vmatprep.subr.mxu0 0.0
        %1693 = vmatpush1.msra.mxu0 0.0
        %1694 = vmatprep.subr.mxu0 0.0
        %1695 = vmatpush1.msra.mxu0 %v898
        %1696 = vmatprep.subr.mxu0 0.0
        %1697 = vmatpush2.msra.mxu0 0.0
        %1698 = vmatprep.subr.mxu0 0.0
        %1699 = vmatpush2.msra.mxu0 0.0
        %1700 = vmatprep.subr.mxu0 0.0
        %1701 = vmatpush2.msra.mxu0 0.0
        %1702 = vmatprep.subr.mxu0 0.0
        %1703 = vmatpush2.msra.mxu0 0.0
        %1704 = vmatprep.subr.mxu0 0.0
        %1705 = vmatpush2.msra.mxu0 0.0
        %1706 = vmatprep.subr.mxu0 0.0
        %1707 = vmatpush2.msra.mxu0 0.0
        %1708 = vmatprep.subr.mxu0 0.0
        %1709 = vmatpush2.msra.mxu0 0.0
        %1710 = vmatprep.subr.mxu0 0.0
        %1711 = vmatpush2.msra.mxu0 0.0
        %1712 = vmatprep.subr.mxu0 0.0
        %1713 = vmatpush2.msra.mxu0 0.0
        %1714 = vmatprep.subr.mxu0 0.0
        %1715 = vmatpush2.msra.mxu0 0.0
        %1716 = vmatprep.subr.mxu0 0.0
        %1717 = vmatpush2.msra.mxu0 0.0
        %1718 = vmatprep.subr.mxu0 0.0
        %1719 = vmatpush2.msra.mxu0 0.0
        %1720 = vmatprep.subr.mxu0 0.0
        %1721 = vmatpush2.msra.mxu0 0.0
        %1722 = vmatprep.subr.mxu0 0.0
        %1723 = vmatpush2.msra.mxu0 0.0
        %1724 = vmatprep.subr.mxu0 0.0
        %1725 = vmatpush2.msra.mxu0 0.0
        %1726 = vmatprep.subr.mxu0 0.0
        %1727 = vmatpush2.msra.mxu0 0.0
        %1728 = vmatprep.mubr.f32.mxu0 0.0
        %1729 = vmatmul.mubr.f32.gmra.mxu0 %v1662
        %v1730 = vpop.f32.mrf.mxu0
        %v1731 = vadd.f32 0.0, %v1730
        %v1732 = vpop.f32.mrf.mxu0
        %1733 = vdwg.mxu0
        %v1735 = vsel %vm956, %v1608, 0
        %1737 = vmatprep.subr.mxu0 0.0
        %1738 = vmatpush1.msra.mxu0 0.0
        %1739 = vmatprep.subr.mxu0 0.0
        %1740 = vmatpush1.msra.mxu0 0.0
        %1741 = vmatprep.subr.mxu0 0.0
        %1742 = vmatpush1.msra.mxu0 0.0
        %1743 = vmatprep.subr.mxu0 0.0
        %1744 = vmatpush1.msra.mxu0 0.0
        %1745 = vmatprep.subr.mxu0 0.0
        %1746 = vmatpush1.msra.mxu0 0.0
        %1747 = vmatprep.subr.mxu0 0.0
        %1748 = vmatpush1.msra.mxu0 0.0
        %1749 = vmatprep.subr.mxu0 0.0
        %1750 = vmatpush1.msra.mxu0 0.0
        %1751 = vmatprep.subr.mxu0 0.0
        %1752 = vmatpush1.msra.mxu0 0.0
        %1753 = vmatprep.subr.mxu0 0.0
        %1754 = vmatpush1.msra.mxu0 0.0
        %1755 = vmatprep.subr.mxu0 0.0
        %1756 = vmatpush1.msra.mxu0 0.0
        %1757 = vmatprep.subr.mxu0 0.0
        %1758 = vmatpush1.msra.mxu0 0.0
        %1759 = vmatprep.subr.mxu0 0.0
        %1760 = vmatpush1.msra.mxu0 0.0
        %1761 = vmatprep.subr.mxu0 0.0
        %1762 = vmatpush1.msra.mxu0 0.0
        %1763 = vmatprep.subr.mxu0 0.0
        %1764 = vmatpush1.msra.mxu0 0.0
        %1765 = vmatprep.subr.mxu0 0.0
        %1766 = vmatpush1.msra.mxu0 0.0
        %1767 = vmatprep.subr.mxu0 0.0
        %1768 = vmatpush1.msra.mxu0 %v903
        %1769 = vmatprep.subr.mxu0 0.0
        %1770 = vmatpush2.msra.mxu0 0.0
        %1771 = vmatprep.subr.mxu0 0.0
        %1772 = vmatpush2.msra.mxu0 0.0
        %1773 = vmatprep.subr.mxu0 0.0
        %1774 = vmatpush2.msra.mxu0 0.0
        %1775 = vmatprep.subr.mxu0 0.0
        %1776 = vmatpush2.msra.mxu0 0.0
        %1777 = vmatprep.subr.mxu0 0.0
        %1778 = vmatpush2.msra.mxu0 0.0
        %1779 = vmatprep.subr.mxu0 0.0
        %1780 = vmatpush2.msra.mxu0 0.0
        %1781 = vmatprep.subr.mxu0 0.0
        %1782 = vmatpush2.msra.mxu0 0.0
        %1783 = vmatprep.subr.mxu0 0.0
        %1784 = vmatpush2.msra.mxu0 0.0
        %1785 = vmatprep.subr.mxu0 0.0
        %1786 = vmatpush2.msra.mxu0 0.0
        %1787 = vmatprep.subr.mxu0 0.0
        %1788 = vmatpush2.msra.mxu0 0.0
        %1789 = vmatprep.subr.mxu0 0.0
        %1790 = vmatpush2.msra.mxu0 0.0
        %1791 = vmatprep.subr.mxu0 0.0
        %1792 = vmatpush2.msra.mxu0 0.0
        %1793 = vmatprep.subr.mxu0 0.0
        %1794 = vmatpush2.msra.mxu0 0.0
        %1795 = vmatprep.subr.mxu0 0.0
        %1796 = vmatpush2.msra.mxu0 0.0
        %1797 = vmatprep.subr.mxu0 0.0
        %1798 = vmatpush2.msra.mxu0 0.0
        %1799 = vmatprep.subr.mxu0 0.0
        %1800 = vmatpush2.msra.mxu0 0.0
        %1801 = vmatprep.mubr.f32.mxu0 0.0
        %1802 = vmatmul.mubr.f32.gmra.mxu0 %v1735
        %v1803 = vpop.f32.mrf.mxu0
        %v1804 = vadd.f32 0.0, %v1803
        %v1805 = vpop.f32.mrf.mxu0
        %1806 = vdwg.mxu0
        %v1808 = vsel %vm956, %v1610, 0
        %1810 = vmatprep.subr.mxu0 0.0
        %1811 = vmatpush1.msra.mxu0 0.0
        %1812 = vmatprep.subr.mxu0 0.0
        %1813 = vmatpush1.msra.mxu0 0.0
        %1814 = vmatprep.subr.mxu0 0.0
        %1815 = vmatpush1.msra.mxu0 0.0
        %1816 = vmatprep.subr.mxu0 0.0
        %1817 = vmatpush1.msra.mxu0 0.0
        %1818 = vmatprep.subr.mxu0 0.0
        %1819 = vmatpush1.msra.mxu0 0.0
        %1820 = vmatprep.subr.mxu0 0.0
        %1821 = vmatpush1.msra.mxu0 0.0
        %1822 = vmatprep.subr.mxu0 0.0
        %1823 = vmatpush1.msra.mxu0 0.0
        %1824 = vmatprep.subr.mxu0 0.0
        %1825 = vmatpush1.msra.mxu0 0.0
        %1826 = vmatprep.subr.mxu0 0.0
        %1827 = vmatpush1.msra.mxu0 0.0
        %1828 = vmatprep.subr.mxu0 0.0
        %1829 = vmatpush1.msra.mxu0 0.0
        %1830 = vmatprep.subr.mxu0 0.0
        %1831 = vmatpush1.msra.mxu0 0.0
        %1832 = vmatprep.subr.mxu0 0.0
        %1833 = vmatpush1.msra.mxu0 0.0
        %1834 = vmatprep.subr.mxu0 0.0
        %1835 = vmatpush1.msra.mxu0 0.0
        %1836 = vmatprep.subr.mxu0 0.0
        %1837 = vmatpush1.msra.mxu0 0.0
        %1838 = vmatprep.subr.mxu0 0.0
        %1839 = vmatpush1.msra.mxu0 0.0
        %1840 = vmatprep.subr.mxu0 0.0
        %1841 = vmatpush1.msra.mxu0 %v939
        %1842 = vmatprep.subr.mxu0 0.0
        %1843 = vmatpush2.msra.mxu0 0.0
        %1844 = vmatprep.subr.mxu0 0.0
        %1845 = vmatpush2.msra.mxu0 0.0
        %1846 = vmatprep.subr.mxu0 0.0
        %1847 = vmatpush2.msra.mxu0 0.0
        %1848 = vmatprep.subr.mxu0 0.0
        %1849 = vmatpush2.msra.mxu0 0.0
        %1850 = vmatprep.subr.mxu0 0.0
        %1851 = vmatpush2.msra.mxu0 0.0
        %1852 = vmatprep.subr.mxu0 0.0
        %1853 = vmatpush2.msra.mxu0 0.0
        %1854 = vmatprep.subr.mxu0 0.0
        %1855 = vmatpush2.msra.mxu0 0.0
        %1856 = vmatprep.subr.mxu0 0.0
        %1857 = vmatpush2.msra.mxu0 0.0
        %1858 = vmatprep.subr.mxu0 0.0
        %1859 = vmatpush2.msra.mxu0 0.0
        %1860 = vmatprep.subr.mxu0 0.0
        %1861 = vmatpush2.msra.mxu0 0.0
        %1862 = vmatprep.subr.mxu0 0.0
        %1863 = vmatpush2.msra.mxu0 0.0
        %1864 = vmatprep.subr.mxu0 0.0
        %1865 = vmatpush2.msra.mxu0 0.0
        %1866 = vmatprep.subr.mxu0 0.0
        %1867 = vmatpush2.msra.mxu0 0.0
        %1868 = vmatprep.subr.mxu0 0.0
        %1869 = vmatpush2.msra.mxu0 0.0
        %1870 = vmatprep.subr.mxu0 0.0
        %1871 = vmatpush2.msra.mxu0 0.0
        %1872 = vmatprep.subr.mxu0 0.0
        %1873 = vmatpush2.msra.mxu0 0.0
        %1874 = vmatprep.mubr.f32.mxu0 0.0
        %1875 = vmatmul.mubr.f32.gmra.mxu0 %v1808
        %v1876 = vpop.f32.mrf.mxu0
        %v1877 = vadd.f32 0.0, %v1876
        %v1878 = vpop.f32.mrf.mxu0
        %1879 = vdwg.mxu0
        %v1881 = vsel %vm956, %v1612, 0
        %1883 = vmatprep.subr.mxu0 0.0
        %1884 = vmatpush1.msra.mxu0 0.0
        %1885 = vmatprep.subr.mxu0 0.0
        %1886 = vmatpush1.msra.mxu0 0.0
        %1887 = vmatprep.subr.mxu0 0.0
        %1888 = vmatpush1.msra.mxu0 0.0
        %1889 = vmatprep.subr.mxu0 0.0
        %1890 = vmatpush1.msra.mxu0 0.0
        %1891 = vmatprep.subr.mxu0 0.0
        %1892 = vmatpush1.msra.mxu0 0.0
        %1893 = vmatprep.subr.mxu0 0.0
        %1894 = vmatpush1.msra.mxu0 0.0
        %1895 = vmatprep.subr.mxu0 0.0
        %1896 = vmatpush1.msra.mxu0 0.0
        %1897 = vmatprep.subr.mxu0 0.0
        %1898 = vmatpush1.msra.mxu0 0.0
        %1899 = vmatprep.subr.mxu0 0.0
        %1900 = vmatpush1.msra.mxu0 0.0
        %1901 = vmatprep.subr.mxu0 0.0
        %1902 = vmatpush1.msra.mxu0 0.0
        %1903 = vmatprep.subr.mxu0 0.0
        %1904 = vmatpush1.msra.mxu0 0.0
        %1905 = vmatprep.subr.mxu0 0.0
        %1906 = vmatpush1.msra.mxu0 0.0
        %1907 = vmatprep.subr.mxu0 0.0
        %1908 = vmatpush1.msra.mxu0 0.0
        %1909 = vmatprep.subr.mxu0 0.0
        %1910 = vmatpush1.msra.mxu0 0.0
        %1911 = vmatprep.subr.mxu0 0.0
        %1912 = vmatpush1.msra.mxu0 0.0
        %1913 = vmatprep.subr.mxu0 0.0
        %1914 = vmatpush1.msra.mxu0 %v941
        %1915 = vmatprep.subr.mxu0 0.0
        %1916 = vmatpush2.msra.mxu0 0.0
        %1917 = vmatprep.subr.mxu0 0.0
        %1918 = vmatpush2.msra.mxu0 0.0
        %1919 = vmatprep.subr.mxu0 0.0
        %1920 = vmatpush2.msra.mxu0 0.0
        %1921 = vmatprep.subr.mxu0 0.0
        %1922 = vmatpush2.msra.mxu0 0.0
        %1923 = vmatprep.subr.mxu0 0.0
        %1924 = vmatpush2.msra.mxu0 0.0
        %1925 = vmatprep.subr.mxu0 0.0
        %1926 = vmatpush2.msra.mxu0 0.0
        %1927 = vmatprep.subr.mxu0 0.0
        %1928 = vmatpush2.msra.mxu0 0.0
        %1929 = vmatprep.subr.mxu0 0.0
        %1930 = vmatpush2.msra.mxu0 0.0
        %1931 = vmatprep.subr.mxu0 0.0
        %1932 = vmatpush2.msra.mxu0 0.0
        %1933 = vmatprep.subr.mxu0 0.0
        %1934 = vmatpush2.msra.mxu0 0.0
        %1935 = vmatprep.subr.mxu0 0.0
        %1936 = vmatpush2.msra.mxu0 0.0
        %1937 = vmatprep.subr.mxu0 0.0
        %1938 = vmatpush2.msra.mxu0 0.0
        %1939 = vmatprep.subr.mxu0 0.0
        %1940 = vmatpush2.msra.mxu0 0.0
        %1941 = vmatprep.subr.mxu0 0.0
        %1942 = vmatpush2.msra.mxu0 0.0
        %1943 = vmatprep.subr.mxu0 0.0
        %1944 = vmatpush2.msra.mxu0 0.0
        %1945 = vmatprep.subr.mxu0 0.0
        %1946 = vmatpush2.msra.mxu0 0.0
        %1947 = vmatprep.mubr.f32.mxu0 0.0
        %1948 = vmatmul.mubr.f32.gmra.mxu0 %v1881
        %v1949 = vpop.f32.mrf.mxu0
        %v1950 = vadd.f32 0.0, %v1949
        %v1951 = vpop.f32.mrf.mxu0
        %1952 = vdwg.mxu0
        %v1954 = vsel %vm956, %v1614, 0
        %1956 = vmatprep.subr.mxu0 0.0
        %1957 = vmatpush1.msra.mxu0 0.0
        %1958 = vmatprep.subr.mxu0 0.0
        %1959 = vmatpush1.msra.mxu0 0.0
        %1960 = vmatprep.subr.mxu0 0.0
        %1961 = vmatpush1.msra.mxu0 0.0
        %1962 = vmatprep.subr.mxu0 0.0
        %1963 = vmatpush1.msra.mxu0 0.0
        %1964 = vmatprep.subr.mxu0 0.0
        %1965 = vmatpush1.msra.mxu0 0.0
        %1966 = vmatprep.subr.mxu0 0.0
        %1967 = vmatpush1.msra.mxu0 0.0
        %1968 = vmatprep.subr.mxu0 0.0
        %1969 = vmatpush1.msra.mxu0 0.0
        %1970 = vmatprep.subr.mxu0 0.0
        %1971 = vmatpush1.msra.mxu0 0.0
        %1972 = vmatprep.subr.mxu0 0.0
        %1973 = vmatpush1.msra.mxu0 0.0
        %1974 = vmatprep.subr.mxu0 0.0
        %1975 = vmatpush1.msra.mxu0 0.0
        %1976 = vmatprep.subr.mxu0 0.0
        %1977 = vmatpush1.msra.mxu0 0.0
        %1978 = vmatprep.subr.mxu0 0.0
        %1979 = vmatpush1.msra.mxu0 0.0
        %1980 = vmatprep.subr.mxu0 0.0
        %1981 = vmatpush1.msra.mxu0 0.0
        %1982 = vmatprep.subr.mxu0 0.0
        %1983 = vmatpush1.msra.mxu0 0.0
        %1984 = vmatprep.subr.mxu0 0.0
        %1985 = vmatpush1.msra.mxu0 0.0
        %1986 = vmatprep.subr.mxu0 0.0
        %1987 = vmatpush1.msra.mxu0 %v945
        %1988 = vmatprep.subr.mxu0 0.0
        %1989 = vmatpush2.msra.mxu0 0.0
        %1990 = vmatprep.subr.mxu0 0.0
        %1991 = vmatpush2.msra.mxu0 0.0
        %1992 = vmatprep.subr.mxu0 0.0
        %1993 = vmatpush2.msra.mxu0 0.0
        %1994 = vmatprep.subr.mxu0 0.0
        %1995 = vmatpush2.msra.mxu0 0.0
        %1996 = vmatprep.subr.mxu0 0.0
        %1997 = vmatpush2.msra.mxu0 0.0
        %1998 = vmatprep.subr.mxu0 0.0
        %1999 = vmatpush2.msra.mxu0 0.0
        %2000 = vmatprep.subr.mxu0 0.0
        %2001 = vmatpush2.msra.mxu0 0.0
        %2002 = vmatprep.subr.mxu0 0.0
        %2003 = vmatpush2.msra.mxu0 0.0
        %2004 = vmatprep.subr.mxu0 0.0
        %2005 = vmatpush2.msra.mxu0 0.0
        %2006 = vmatprep.subr.mxu0 0.0
        %2007 = vmatpush2.msra.mxu0 0.0
        %2008 = vmatprep.subr.mxu0 0.0
        %2009 = vmatpush2.msra.mxu0 0.0
        %2010 = vmatprep.subr.mxu0 0.0
        %2011 = vmatpush2.msra.mxu0 0.0
        %2012 = vmatprep.subr.mxu0 0.0
        %2013 = vmatpush2.msra.mxu0 0.0
        %2014 = vmatprep.subr.mxu0 0.0
        %2015 = vmatpush2.msra.mxu0 0.0
        %2016 = vmatprep.subr.mxu0 0.0
        %2017 = vmatpush2.msra.mxu0 0.0
        %2018 = vmatprep.subr.mxu0 0.0
        %2019 = vmatpush2.msra.mxu0 0.0
        %2020 = vmatprep.mubr.f32.mxu0 0.0
        %2021 = vmatmul.mubr.f32.gmra.mxu0 %v1954
        %v2022 = vpop.f32.mrf.mxu0
        %v2023 = vadd.f32 0.0, %v2022
        %v2024 = vpop.f32.mrf.mxu0
        %2025 = vdwg.mxu0
        %v2027 = vsel %vm956, %v1616, 0
        %2029 = vmatprep.subr.mxu0 0.0
        %2030 = vmatpush1.msra.mxu0 0.0
        %2031 = vmatprep.subr.mxu0 0.0
        %2032 = vmatpush1.msra.mxu0 0.0
        %2033 = vmatprep.subr.mxu0 0.0
        %2034 = vmatpush1.msra.mxu0 0.0
        %2035 = vmatprep.subr.mxu0 0.0
        %2036 = vmatpush1.msra.mxu0 0.0
        %2037 = vmatprep.subr.mxu0 0.0
        %2038 = vmatpush1.msra.mxu0 0.0
        %2039 = vmatprep.subr.mxu0 0.0
        %2040 = vmatpush1.msra.mxu0 0.0
        %2041 = vmatprep.subr.mxu0 0.0
        %2042 = vmatpush1.msra.mxu0 0.0
        %2043 = vmatprep.subr.mxu0 0.0
        %2044 = vmatpush1.msra.mxu0 0.0
        %2045 = vmatprep.subr.mxu0 0.0
        %2046 = vmatpush1.msra.mxu0 0.0
        %2047 = vmatprep.subr.mxu0 0.0
        %2048 = vmatpush1.msra.mxu0 0.0
        %2049 = vmatprep.subr.mxu0 0.0
        %2050 = vmatpush1.msra.mxu0 0.0
        %2051 = vmatprep.subr.mxu0 0.0
        %2052 = vmatpush1.msra.mxu0 0.0
        %2053 = vmatprep.subr.mxu0 0.0
        %2054 = vmatpush1.msra.mxu0 0.0
        %2055 = vmatprep.subr.mxu0 0.0
        %2056 = vmatpush1.msra.mxu0 0.0
        %2057 = vmatprep.subr.mxu0 0.0
        %2058 = vmatpush1.msra.mxu0 0.0
        %2059 = vmatprep.subr.mxu0 0.0
        %2060 = vmatpush1.msra.mxu0 %v947
        %2061 = vmatprep.subr.mxu0 0.0
        %2062 = vmatpush2.msra.mxu0 0.0
        %2063 = vmatprep.subr.mxu0 0.0
        %2064 = vmatpush2.msra.mxu0 0.0
        %2065 = vmatprep.subr.mxu0 0.0
        %2066 = vmatpush2.msra.mxu0 0.0
        %2067 = vmatprep.subr.mxu0 0.0
        %2068 = vmatpush2.msra.mxu0 0.0
        %2069 = vmatprep.subr.mxu0 0.0
        %2070 = vmatpush2.msra.mxu0 0.0
        %2071 = vmatprep.subr.mxu0 0.0
        %2072 = vmatpush2.msra.mxu0 0.0
        %2073 = vmatprep.subr.mxu0 0.0
        %2074 = vmatpush2.msra.mxu0 0.0
        %2075 = vmatprep.subr.mxu0 0.0
        %2076 = vmatpush2.msra.mxu0 0.0
        %2077 = vmatprep.subr.mxu0 0.0
        %2078 = vmatpush2.msra.mxu0 0.0
        %2079 = vmatprep.subr.mxu0 0.0
        %2080 = vmatpush2.msra.mxu0 0.0
        %2081 = vmatprep.subr.mxu0 0.0
        %2082 = vmatpush2.msra.mxu0 0.0
        %2083 = vmatprep.subr.mxu0 0.0
        %2084 = vmatpush2.msra.mxu0 0.0
        %2085 = vmatprep.subr.mxu0 0.0
        %2086 = vmatpush2.msra.mxu0 0.0
        %2087 = vmatprep.subr.mxu0 0.0
        %2088 = vmatpush2.msra.mxu0 0.0
        %2089 = vmatprep.subr.mxu0 0.0
        %2090 = vmatpush2.msra.mxu0 0.0
        %2091 = vmatprep.subr.mxu0 0.0
        %2092 = vmatpush2.msra.mxu0 0.0
        %2093 = vmatprep.mubr.f32.mxu0 0.0
        %2094 = vmatmul.mubr.f32.gmra.mxu0 %v2027
        %v2095 = vpop.f32.mrf.mxu0
        %v2096 = vadd.f32 0.0, %v2095
        %v2097 = vpop.f32.mrf.mxu0
        %2098 = vdwg.mxu0
        %v2100 = vsel %vm956, %v1618, 0
        %2102 = vmatprep.subr.mxu0 0.0
        %2103 = vmatpush1.msra.mxu0 0.0
        %2104 = vmatprep.subr.mxu0 0.0
        %2105 = vmatpush1.msra.mxu0 0.0
        %2106 = vmatprep.subr.mxu0 0.0
        %2107 = vmatpush1.msra.mxu0 0.0
        %2108 = vmatprep.subr.mxu0 0.0
        %2109 = vmatpush1.msra.mxu0 0.0
        %2110 = vmatprep.subr.mxu0 0.0
        %2111 = vmatpush1.msra.mxu0 0.0
        %2112 = vmatprep.subr.mxu0 0.0
        %2113 = vmatpush1.msra.mxu0 0.0
        %2114 = vmatprep.subr.mxu0 0.0
        %2115 = vmatpush1.msra.mxu0 0.0
        %2116 = vmatprep.subr.mxu0 0.0
        %2117 = vmatpush1.msra.mxu0 0.0
        %2118 = vmatprep.subr.mxu0 0.0
        %2119 = vmatpush1.msra.mxu0 0.0
        %2120 = vmatprep.subr.mxu0 0.0
        %2121 = vmatpush1.msra.mxu0 0.0
        %2122 = vmatprep.subr.mxu0 0.0
        %2123 = vmatpush1.msra.mxu0 0.0
        %2124 = vmatprep.subr.mxu0 0.0
        %2125 = vmatpush1.msra.mxu0 0.0
        %2126 = vmatprep.subr.mxu0 0.0
        %2127 = vmatpush1.msra.mxu0 0.0
        %2128 = vmatprep.subr.mxu0 0.0
        %2129 = vmatpush1.msra.mxu0 0.0
        %2130 = vmatprep.subr.mxu0 0.0
        %2131 = vmatpush1.msra.mxu0 0.0
        %2132 = vmatprep.subr.mxu0 0.0
        %2133 = vmatpush1.msra.mxu0 %v951
        %2134 = vmatprep.subr.mxu0 0.0
        %2135 = vmatpush2.msra.mxu0 0.0
        %2136 = vmatprep.subr.mxu0 0.0
        %2137 = vmatpush2.msra.mxu0 0.0
        %2138 = vmatprep.subr.mxu0 0.0
        %2139 = vmatpush2.msra.mxu0 0.0
        %2140 = vmatprep.subr.mxu0 0.0
        %2141 = vmatpush2.msra.mxu0 0.0
        %2142 = vmatprep.subr.mxu0 0.0
        %2143 = vmatpush2.msra.mxu0 0.0
        %2144 = vmatprep.subr.mxu0 0.0
        %2145 = vmatpush2.msra.mxu0 0.0
        %2146 = vmatprep.subr.mxu0 0.0
        %2147 = vmatpush2.msra.mxu0 0.0
        %2148 = vmatprep.subr.mxu0 0.0
        %2149 = vmatpush2.msra.mxu0 0.0
        %2150 = vmatprep.subr.mxu0 0.0
        %2151 = vmatpush2.msra.mxu0 0.0
        %2152 = vmatprep.subr.mxu0 0.0
        %2153 = vmatpush2.msra.mxu0 0.0
        %2154 = vmatprep.subr.mxu0 0.0
        %2155 = vmatpush2.msra.mxu0 0.0
        %2156 = vmatprep.subr.mxu0 0.0
        %2157 = vmatpush2.msra.mxu0 0.0
        %2158 = vmatprep.subr.mxu0 0.0
        %2159 = vmatpush2.msra.mxu0 0.0
        %2160 = vmatprep.subr.mxu0 0.0
        %2161 = vmatpush2.msra.mxu0 0.0
        %2162 = vmatprep.subr.mxu0 0.0
        %2163 = vmatpush2.msra.mxu0 0.0
        %2164 = vmatprep.subr.mxu0 0.0
        %2165 = vmatpush2.msra.mxu0 0.0
        %2166 = vmatprep.mubr.f32.mxu0 0.0
        %2167 = vmatmul.mubr.f32.gmra.mxu0 %v2100
        %v2168 = vpop.f32.mrf.mxu0
        %v2169 = vadd.f32 0.0, %v2168
        %v2170 = vpop.f32.mrf.mxu0
        %2171 = vdwg.mxu0
        %v2173 = vsel %vm956, %v1620, 0
        %2175 = vmatprep.subr.mxu0 0.0
        %2176 = vmatpush1.msra.mxu0 0.0
        %2177 = vmatprep.subr.mxu0 0.0
        %2178 = vmatpush1.msra.mxu0 0.0
        %2179 = vmatprep.subr.mxu0 0.0
        %2180 = vmatpush1.msra.mxu0 0.0
        %2181 = vmatprep.subr.mxu0 0.0
        %2182 = vmatpush1.msra.mxu0 0.0
        %2183 = vmatprep.subr.mxu0 0.0
        %2184 = vmatpush1.msra.mxu0 0.0
        %2185 = vmatprep.subr.mxu0 0.0
        %2186 = vmatpush1.msra.mxu0 0.0
        %2187 = vmatprep.subr.mxu0 0.0
        %2188 = vmatpush1.msra.mxu0 0.0
        %2189 = vmatprep.subr.mxu0 0.0
        %2190 = vmatpush1.msra.mxu0 0.0
        %2191 = vmatprep.subr.mxu0 0.0
        %2192 = vmatpush1.msra.mxu0 0.0
        %2193 = vmatprep.subr.mxu0 0.0
        %2194 = vmatpush1.msra.mxu0 0.0
        %2195 = vmatprep.subr.mxu0 0.0
        %2196 = vmatpush1.msra.mxu0 0.0
        %2197 = vmatprep.subr.mxu0 0.0
        %2198 = vmatpush1.msra.mxu0 0.0
        %2199 = vmatprep.subr.mxu0 0.0
        %2200 = vmatpush1.msra.mxu0 0.0
        %2201 = vmatprep.subr.mxu0 0.0
        %2202 = vmatpush1.msra.mxu0 0.0
        %2203 = vmatprep.subr.mxu0 0.0
        %2204 = vmatpush1.msra.mxu0 0.0
        %2205 = vmatprep.subr.mxu0 0.0
        %2206 = vmatpush1.msra.mxu0 %v953
        %2207 = vmatprep.subr.mxu0 0.0
        %2208 = vmatpush2.msra.mxu0 0.0
        %2209 = vmatprep.subr.mxu0 0.0
        %2210 = vmatpush2.msra.mxu0 0.0
        %2211 = vmatprep.subr.mxu0 0.0
        %2212 = vmatpush2.msra.mxu0 0.0
        %2213 = vmatprep.subr.mxu0 0.0
        %2214 = vmatpush2.msra.mxu0 0.0
        %2215 = vmatprep.subr.mxu0 0.0
        %2216 = vmatpush2.msra.mxu0 0.0
        %2217 = vmatprep.subr.mxu0 0.0
        %2218 = vmatpush2.msra.mxu0 0.0
        %2219 = vmatprep.subr.mxu0 0.0
        %2220 = vmatpush2.msra.mxu0 0.0
        %2221 = vmatprep.subr.mxu0 0.0
        %2222 = vmatpush2.msra.mxu0 0.0
        %2223 = vmatprep.subr.mxu0 0.0
        %2224 = vmatpush2.msra.mxu0 0.0
        %2225 = vmatprep.subr.mxu0 0.0
        %2226 = vmatpush2.msra.mxu0 0.0
        %2227 = vmatprep.subr.mxu0 0.0
        %2228 = vmatpush2.msra.mxu0 0.0
        %2229 = vmatprep.subr.mxu0 0.0
        %2230 = vmatpush2.msra.mxu0 0.0
        %2231 = vmatprep.subr.mxu0 0.0
        %2232 = vmatpush2.msra.mxu0 0.0
        %2233 = vmatprep.subr.mxu0 0.0
        %2234 = vmatpush2.msra.mxu0 0.0
        %2235 = vmatprep.subr.mxu0 0.0
        %2236 = vmatpush2.msra.mxu0 0.0
        %2237 = vmatprep.subr.mxu0 0.0
        %2238 = vmatpush2.msra.mxu0 0.0
        %2239 = vmatprep.mubr.f32.mxu0 0.0
        %2240 = vmatmul.mubr.f32.gmra.mxu0 %v2173
        %v2241 = vpop.f32.mrf.mxu0
        %v2242 = vadd.f32 0.0, %v2241
        %v2243 = vpop.f32.mrf.mxu0
        %2244 = vdwg.mxu0
        %v2245 = vadd.f32 %v1621, %v1731
        %v2246 = vadd.f32 %v1622, %v1804
        %v2247 = vadd.f32 %v1623, %v1877
        %v2248 = vadd.f32 %v1624, %v1950
        %v2249 = vadd.f32 %v1625, %v2023
        %v2250 = vadd.f32 %v1626, %v2096
        %v2251 = vadd.f32 %v1627, %v2169
        %v2252 = vadd.f32 %v1628, %v2242
        %v2253 = vrcp.pop %v1653
        %v2254 = vrcp.pop %v1654
        %v2255 = vrcp.pop %v1655
        %v2256 = vrcp.pop %v1656
        %v2257 = vrcp.pop %v1657
        %v2258 = vrcp.pop %v1658
        %v2259 = vrcp.pop %v1659
        %v2260 = vrcp.pop %v1660
        %v2261 = vmul.f32 %v2245, %v2253
        %v2262 = vmul.f32 %v2246, %v2254
        %v2263 = vmul.f32 %v2247, %v2255
        %v2264 = vmul.f32 %v2248, %v2256
        %v2265 = vmul.f32 %v2249, %v2257
        %v2266 = vmul.f32 %v2250, %v2258
        %v2267 = vmul.f32 %v2251, %v2259
        %v2268 = vmul.f32 %v2252, %v2260
        %2271 = vrot.lane.b32.xlu0 %v2263, 8
        %v2272 = vpop.permute.xlu0 %2271
        %2273 = vrot.lane.b32.xlu0 %v2264, 8
        %v2274 = vpop.permute.xlu0 %2273
        %2279 = vrot.lane.b32.xlu0 %v2265, 16
        %v2280 = vpop.permute.xlu0 %2279
        %2281 = vrot.lane.b32.xlu0 %v2266, 16
        %v2282 = vpop.permute.xlu0 %2281
        %2287 = vrot.lane.b32.xlu0 %v2267, 24
        %v2288 = vpop.permute.xlu0 %2287
        %2289 = vrot.lane.b32.xlu0 %v2268, 24
        %v2290 = vpop.permute.xlu0 %2289
        %v2293 = vsel %vm956, %v2261, %v2272
        %v2294 = vsel %vm956, %v2262, %v2274
        %vm2295 = vcmask 130048
        %v2296 = vsel %vm2295, %v2293, %v2280
        %v2297 = vsel %vm2295, %v2294, %v2282
        %vm2298 = vcmask 195584
        %v2299 = vsel %vm2298, %v2296, %v2288
        %v2300 = vsel %vm2298, %v2297, %v2290
        %v2301 = vld [vmem:[#allocation5] sm:$0xff]
        %v2302 = vld [vmem:[#allocation5 + $0x8] sm:$0xff]
        %v2303 = vld [vmem:[#allocation5 + $0x10] sm:$0xff]
        %v2304 = vld [vmem:[#allocation5 + $0x18] sm:$0xff]
        %v2305 = vld [vmem:[%s8] sm:$0x1]
        %v2307 = vlaneseq
        %v2308 = vshrl.u32 %v2307, 7
        %v2309 = vsub.s32 0, %v2308
        %v2310 = vrot.slane %v2305, %v2309
        %v2313 = vsel %vm598, %v2299, 0
        %v2316 = vsel %vm598, %v2300, 0
        %2318 = vmatprep.subr.mxu0 0.0
        %2319 = vmatpush1.msra.mxu0 0.0
        %2320 = vmatprep.subr.mxu0 0.0
        %2321 = vmatpush1.msra.mxu0 0.0
        %2322 = vmatprep.subr.mxu0 0.0
        %2323 = vmatpush1.msra.mxu0 0.0
        %2324 = vmatprep.subr.mxu0 0.0
        %2325 = vmatpush1.msra.mxu0 0.0
        %2326 = vmatprep.subr.mxu0 0.0
        %2327 = vmatpush1.msra.mxu0 0.0
        %2328 = vmatprep.subr.mxu0 0.0
        %2329 = vmatpush1.msra.mxu0 0.0
        %2330 = vmatprep.subr.mxu0 0.0
        %2331 = vmatpush1.msra.mxu0 0.0
        %2332 = vmatprep.subr.mxu0 0.0
        %2333 = vmatpush1.msra.mxu0 0.0
        %2334 = vmatprep.subr.mxu0 0.0
        %2335 = vmatpush1.msra.mxu0 0.0
        %2336 = vmatprep.subr.mxu0 0.0
        %2337 = vmatpush1.msra.mxu0 0.0
        %2338 = vmatprep.subr.mxu0 0.0
        %2339 = vmatpush1.msra.mxu0 0.0
        %2340 = vmatprep.subr.mxu0 0.0
        %2341 = vmatpush1.msra.mxu0 0.0
        %2342 = vmatprep.subr.mxu0 0.0
        %2343 = vmatpush1.msra.mxu0 %v2304
        %2344 = vmatprep.subr.mxu0 0.0
        %2345 = vmatpush1.msra.mxu0 %v2303
        %2346 = vmatprep.subr.mxu0 0.0
        %2347 = vmatpush1.msra.mxu0 %v2302
        %2348 = vmatprep.subr.mxu0 0.0
        %2349 = vmatpush1.msra.mxu0 %v2301
        %2350 = vmatprep.subr.mxu0 0.0
        %2351 = vmatpush2.msra.mxu0 0.0
        %2352 = vmatprep.subr.mxu0 0.0
        %2353 = vmatpush2.msra.mxu0 0.0
        %2354 = vmatprep.subr.mxu0 0.0
        %2355 = vmatpush2.msra.mxu0 0.0
        %2356 = vmatprep.subr.mxu0 0.0
        %2357 = vmatpush2.msra.mxu0 0.0
        %2358 = vmatprep.subr.mxu0 0.0
        %2359 = vmatpush2.msra.mxu0 0.0
        %2360 = vmatprep.subr.mxu0 0.0
        %2361 = vmatpush2.msra.mxu0 0.0
        %2362 = vmatprep.subr.mxu0 0.0
        %2363 = vmatpush2.msra.mxu0 0.0
        %2364 = vmatprep.subr.mxu0 0.0
        %2365 = vmatpush2.msra.mxu0 0.0
        %2366 = vmatprep.subr.mxu0 0.0
        %2367 = vmatpush2.msra.mxu0 0.0
        %2368 = vmatprep.subr.mxu0 0.0
        %2369 = vmatpush2.msra.mxu0 0.0
        %2370 = vmatprep.subr.mxu0 0.0
        %2371 = vmatpush2.msra.mxu0 0.0
        %2372 = vmatprep.subr.mxu0 0.0
        %2373 = vmatpush2.msra.mxu0 0.0
        %2374 = vmatprep.subr.mxu0 0.0
        %2375 = vmatpush2.msra.mxu0 0.0
        %2376 = vmatprep.subr.mxu0 0.0
        %2377 = vmatpush2.msra.mxu0 0.0
        %2378 = vmatprep.subr.mxu0 0.0
        %2379 = vmatpush2.msra.mxu0 0.0
        %2380 = vmatprep.subr.mxu0 0.0
        %2381 = vmatpush2.msra.mxu0 0.0
        %2382 = vmatprep.mubr.f32.mxu0 0.0
        %2383 = vmatmul.mubr.f32.gmra.mxu0 %v2313
        %v2384 = vpop.f32.mrf.mxu0
        %v2385 = vadd.f32 %v2310, %v2384
        %v2386 = vpop.f32.mrf.mxu0
        %2387 = vmatprep.mubr.f32.mxu0 0.0
        %2388 = vmatmul.mubr.f32.gmra.mxu0 %v2316
        %v2389 = vpop.f32.mrf.mxu0
        %v2390 = vadd.f32 %v2310, %v2389
        %v2391 = vpop.f32.mrf.mxu0
        %2392 = vdwg.mxu0
        %v2393 = vadd.f32 %v594, %v2385
        %v2394 = vadd.f32 %v595, %v2390
        %v2395 = vld [vmem:[%s15] sm:$0x1]
        %v2396 = vld [vmem:[%s16] sm:$0x1]
        %v2397 = vsel %vm598, %v2393, 0.0
        %2398 = vadd.xlane.f32.xlu0 %v2397
        %v2399 = vpop.xlane.xlu0 %2398
        %v2400 = vsel %vm598, %v2394, 0.0
        %2401 = vadd.xlane.f32.xlu0 %v2400
        %v2402 = vpop.xlane.xlu0 %2401
        %v2403 = vmul.f32 %v2399, %v605
        %v2404 = vmul.f32 %v2402, %v605
        %v2405 = vsub.f32 %v2393, %v2403
        %v2406 = vsub.f32 %v2394, %v2404
        %v2407 = vmul.f32 %v2405, %v2405
        %v2408 = vmul.f32 %v2406, %v2406
        %v2409 = vsel %vm598, %v2407, 0.0
        %2410 = vadd.xlane.f32.xlu0 %v2409
        %v2411 = vpop.xlane.xlu0 %2410
        %v2412 = vsel %vm598, %v2408, 0.0
        %2413 = vadd.xlane.f32.xlu0 %v2412
        %v2414 = vpop.xlane.xlu0 %2413
        %v2415 = vmul.f32 %v2411, %v605
        %v2416 = vmul.f32 %v2414, %v605
        %v2417 = vadd.f32 %v2415, 1e-05
        %v2418 = vadd.f32 %v2416, 1e-05
        %v2419 = vrsqrt.pop %v2417
        %v2420 = vrsqrt.pop %v2418
        %v2421 = vmul.f32 %v2405, %v2419
        %v2422 = vmul.f32 %v2406, %v2420
        %v2424 = vlaneseq
        %v2425 = vshrl.u32 %v2424, 7
        %v2426 = vsub.s32 0, %v2425
        %v2427 = vrot.slane %v2395, %v2426
        %v2429 = vmul.f32 %v2421, %v2427
        %v2430 = vmul.f32 %v2422, %v2427
        %v2432 = vlaneseq
        %v2433 = vshrl.u32 %v2432, 7
        %v2434 = vsub.s32 0, %v2433
        %v2435 = vrot.slane %v2396, %v2434
        %v2437 = vadd.f32 %v2429, %v2435
        %v2438 = vadd.f32 %v2430, %v2435
        %v2439 = vld [vmem:[%s12] sm:$0x1]
        %v2440 = vld [vmem:[#allocation7] sm:$0xff]
        %v2441 = vld [vmem:[#allocation7 + $0x8] sm:$0xff]
        %v2442 = vld [vmem:[#allocation7 + $0x10] sm:$0xff]
        %v2443 = vld [vmem:[#allocation7 + $0x18] sm:$0xff]
        %v2445 = vlaneseq
        %v2446 = vshrl.u32 %v2445, 7
        %v2447 = vsub.s32 0, %v2446
        %v2448 = vrot.slane %v2439, %v2447
        %v2451 = vsel %vm598, %v2437, 0
        %v2454 = vsel %vm598, %v2438, 0
        %2456 = vmatprep.subr.mxu0 0.0
        %2457 = vmatpush1.msra.mxu0 0.0
        %2458 = vmatprep.subr.mxu0 0.0
        %2459 = vmatpush1.msra.mxu0 0.0
        %2460 = vmatprep.subr.mxu0 0.0
        %2461 = vmatpush1.msra.mxu0 0.0
        %2462 = vmatprep.subr.mxu0 0.0
        %2463 = vmatpush1.msra.mxu0 0.0
        %2464 = vmatprep.subr.mxu0 0.0
        %2465 = vmatpush1.msra.mxu0 0.0
        %2466 = vmatprep.subr.mxu0 0.0
        %2467 = vmatpush1.msra.mxu0 0.0
        %2468 = vmatprep.subr.mxu0 0.0
        %2469 = vmatpush1.msra.mxu0 0.0
        %2470 = vmatprep.subr.mxu0 0.0
        %2471 = vmatpush1.msra.mxu0 0.0
        %2472 = vmatprep.subr.mxu0 0.0
        %2473 = vmatpush1.msra.mxu0 0.0
        %2474 = vmatprep.subr.mxu0 0.0
        %2475 = vmatpush1.msra.mxu0 0.0
        %2476 = vmatprep.subr.mxu0 0.0
        %2477 = vmatpush1.msra.mxu0 0.0
        %2478 = vmatprep.subr.mxu0 0.0
        %2479 = vmatpush1.msra.mxu0 0.0
        %2480 = vmatprep.subr.mxu0 0.0
        %2481 = vmatpush1.msra.mxu0 %v2443
        %2482 = vmatprep.subr.mxu0 0.0
        %2483 = vmatpush1.msra.mxu0 %v2442
        %2484 = vmatprep.subr.mxu0 0.0
        %2485 = vmatpush1.msra.mxu0 %v2441
        %2486 = vmatprep.subr.mxu0 0.0
        %2487 = vmatpush1.msra.mxu0 %v2440
        %2488 = vmatprep.subr.mxu0 0.0
        %2489 = vmatpush2.msra.mxu0 0.0
        %2490 = vmatprep.subr.mxu0 0.0
        %2491 = vmatpush2.msra.mxu0 0.0
        %2492 = vmatprep.subr.mxu0 0.0
        %2493 = vmatpush2.msra.mxu0 0.0
        %2494 = vmatprep.subr.mxu0 0.0
        %2495 = vmatpush2.msra.mxu0 0.0
        %2496 = vmatprep.subr.mxu0 0.0
        %2497 = vmatpush2.msra.mxu0 0.0
        %2498 = vmatprep.subr.mxu0 0.0
        %2499 = vmatpush2.msra.mxu0 0.0
        %2500 = vmatprep.subr.mxu0 0.0
        %2501 = vmatpush2.msra.mxu0 0.0
        %2502 = vmatprep.subr.mxu0 0.0
        %2503 = vmatpush2.msra.mxu0 0.0
        %2504 = vmatprep.subr.mxu0 0.0
        %2505 = vmatpush2.msra.mxu0 0.0
        %2506 = vmatprep.subr.mxu0 0.0
        %2507 = vmatpush2.msra.mxu0 0.0
        %2508 = vmatprep.subr.mxu0 0.0
        %2509 = vmatpush2.msra.mxu0 0.0
        %2510 = vmatprep.subr.mxu0 0.0
        %2511 = vmatpush2.msra.mxu0 0.0
        %2512 = vmatprep.subr.mxu0 0.0
        %2513 = vmatpush2.msra.mxu0 0.0
        %2514 = vmatprep.subr.mxu0 0.0
        %2515 = vmatpush2.msra.mxu0 0.0
        %2516 = vmatprep.subr.mxu0 0.0
        %2517 = vmatpush2.msra.mxu0 0.0
        %2518 = vmatprep.subr.mxu0 0.0
        %2519 = vmatpush2.msra.mxu0 0.0
        %2520 = vmatprep.mubr.f32.mxu0 0.0
        %2521 = vmatmul.mubr.f32.gmra.mxu0 %v2451
        %v2522 = vpop.f32.mrf.mxu0
        %v2523 = vadd.f32 %v2448, %v2522
        %v2524 = vpop.f32.mrf.mxu0
        %2525 = vmatprep.mubr.f32.mxu0 0.0
        %2526 = vmatmul.mubr.f32.gmra.mxu0 %v2454
        %v2527 = vpop.f32.mrf.mxu0
        %v2528 = vadd.f32 %v2448, %v2527
        %v2529 = vpop.f32.mrf.mxu0
        %2530 = vdwg.mxu0
        %v2531 = vmax.f32 %v2523, 0.0
        %v2532 = vmax.f32 %v2528, 0.0
        %v2533 = vld [vmem:[%s13] sm:$0xff]
        %v2534 = vld [vmem:[%s13 + $0x8] sm:$0xff]
        %v2535 = vld [vmem:[%s13 + $0x10] sm:$0xff]
        %v2536 = vld [vmem:[%s13 + $0x18] sm:$0xff]
        %v2537 = vld [vmem:[%s13 + $0x20] sm:$0xff]
        %v2538 = vld [vmem:[%s13 + $0x28] sm:$0xff]
        %v2539 = vld [vmem:[%s13 + $0x30] sm:$0xff]
        %v2540 = vld [vmem:[%s13 + $0x38] sm:$0xff]
        %v2541 = vld [vmem:[%s14] sm:$0x1]
        %v2543 = vlaneseq
        %v2544 = vshrl.u32 %v2543, 7
        %v2545 = vsub.s32 0, %v2544
        %v2546 = vrot.slane %v2541, %v2545
        %vm2548 = vcmask 523264
        %v2550 = vsel %vm2548, %v2531, 0
        %v2553 = vsel %vm2548, %v2532, 0
        %2555 = vmatprep.subr.mxu0 0.0
        %2556 = vmatpush1.msra.mxu0 0.0
        %2557 = vmatprep.subr.mxu0 0.0
        %2558 = vmatpush1.msra.mxu0 0.0
        %2559 = vmatprep.subr.mxu0 0.0
        %2560 = vmatpush1.msra.mxu0 0.0
        %2561 = vmatprep.subr.mxu0 0.0
        %2562 = vmatpush1.msra.mxu0 0.0
        %2563 = vmatprep.subr.mxu0 0.0
        %2564 = vmatpush1.msra.mxu0 0.0
        %2565 = vmatprep.subr.mxu0 0.0
        %2566 = vmatpush1.msra.mxu0 0.0
        %2567 = vmatprep.subr.mxu0 0.0
        %2568 = vmatpush1.msra.mxu0 0.0
        %2569 = vmatprep.subr.mxu0 0.0
        %2570 = vmatpush1.msra.mxu0 0.0
        %2571 = vmatprep.subr.mxu0 0.0
        %2572 = vmatpush1.msra.mxu0 %v2540
        %2573 = vmatprep.subr.mxu0 0.0
        %2574 = vmatpush1.msra.mxu0 %v2539
        %2575 = vmatprep.subr.mxu0 0.0
        %2576 = vmatpush1.msra.mxu0 %v2538
        %2577 = vmatprep.subr.mxu0 0.0
        %2578 = vmatpush1.msra.mxu0 %v2537
        %2579 = vmatprep.subr.mxu0 0.0
        %2580 = vmatpush1.msra.mxu0 %v2536
        %2581 = vmatprep.subr.mxu0 0.0
        %2582 = vmatpush1.msra.mxu0 %v2535
        %2583 = vmatprep.subr.mxu0 0.0
        %2584 = vmatpush1.msra.mxu0 %v2534
        %2585 = vmatprep.subr.mxu0 0.0
        %2586 = vmatpush1.msra.mxu0 %v2533
        %2587 = vmatprep.subr.mxu0 0.0
        %2588 = vmatpush2.msra.mxu0 0.0
        %2589 = vmatprep.subr.mxu0 0.0
        %2590 = vmatpush2.msra.mxu0 0.0
        %2591 = vmatprep.subr.mxu0 0.0
        %2592 = vmatpush2.msra.mxu0 0.0
        %2593 = vmatprep.subr.mxu0 0.0
        %2594 = vmatpush2.msra.mxu0 0.0
        %2595 = vmatprep.subr.mxu0 0.0
        %2596 = vmatpush2.msra.mxu0 0.0
        %2597 = vmatprep.subr.mxu0 0.0
        %2598 = vmatpush2.msra.mxu0 0.0
        %2599 = vmatprep.subr.mxu0 0.0
        %2600 = vmatpush2.msra.mxu0 0.0
        %2601 = vmatprep.subr.mxu0 0.0
        %2602 = vmatpush2.msra.mxu0 0.0
        %2603 = vmatprep.subr.mxu0 0.0
        %2604 = vmatpush2.msra.mxu0 0.0
        %2605 = vmatprep.subr.mxu0 0.0
        %2606 = vmatpush2.msra.mxu0 0.0
        %2607 = vmatprep.subr.mxu0 0.0
        %2608 = vmatpush2.msra.mxu0 0.0
        %2609 = vmatprep.subr.mxu0 0.0
        %2610 = vmatpush2.msra.mxu0 0.0
        %2611 = vmatprep.subr.mxu0 0.0
        %2612 = vmatpush2.msra.mxu0 0.0
        %2613 = vmatprep.subr.mxu0 0.0
        %2614 = vmatpush2.msra.mxu0 0.0
        %2615 = vmatprep.subr.mxu0 0.0
        %2616 = vmatpush2.msra.mxu0 0.0
        %2617 = vmatprep.subr.mxu0 0.0
        %2618 = vmatpush2.msra.mxu0 0.0
        %2619 = vmatprep.mubr.f32.mxu0 0.0
        %2620 = vmatmul.mubr.f32.gmra.mxu0 %v2550
        %v2621 = vpop.f32.mrf.mxu0
        %v2622 = vadd.f32 %v2546, %v2621
        %v2623 = vpop.f32.mrf.mxu0
        %2624 = vmatprep.mubr.f32.mxu0 0.0
        %2625 = vmatmul.mubr.f32.gmra.mxu0 %v2553
        %v2626 = vpop.f32.mrf.mxu0
        %v2627 = vadd.f32 %v2546, %v2626
        %v2628 = vpop.f32.mrf.mxu0
        %2629 = vdwg.mxu0
        %v2630 = vadd.f32 %v2393, %v2622
        %v2631 = vadd.f32 %v2394, %v2627
        %2632 = vst.msk [vmem:[%s586] sm:$0xff] %vm598, %v2630
        %2633 = vst.msk [vmem:[%s586 + $0x8] sm:$0xff] %vm598, %v2631
        %s2634 = sand.u32 %s403, 1
        %s2635 = scalar_lea.sflag [#allocation4], %s2634
        %s2636 = sand.u32 %s403, 1
        %s2637 = smul.addr %s2636, 16
        %s2638 = scalar_lea.vmem [#allocation8], %s2637
        // Predicated region
        $region101: #{tpu_custom_call.1} parent=87 // pred_check
          %p2639 = pneg %p413
        $region102: #{tpu_custom_call.1} parent=87 // pred_check_branch
          %2641 = sbr.rel (%p2639) target = $region104
        $region103: #{tpu_custom_call.1} parent=87 // pred_region
          %s2642 = smul.u32 2, %s33
          %s2644 = ssub.s32 256, 256
          %2645 = vsyncadd %s2635, %s2644
          %s2646 = smul.addr %s2642, 128
          %s2647 = scalar_lea.hbm %s17, %s2646
          %s2648 = sshll.u32 %s2638, 4
          %s2649 = int_to_ptr.vmem [resolvable:$true] %s2648
          %2654 = dma.vmem_to_hbm [thread:$0]  %s2649, 256, %s2647, %s2635, 128, 128, 8
        $region104: #{tpu_custom_call.1} parent=87 // pred_fallthru
          _
      $region88: #{tpu_custom_call.1} parent=5 // pred_fallthru
        _
      %p2655 = scmp.le.s32.totalorder 2, %s28
      // Predicated region
      $region105: #{tpu_custom_call.1} parent=5 // pred_check
        %p2656 = pneg %p2655
      $region106: #{tpu_custom_call.1} parent=5 // pred_check_branch
        %2658 = sbr.rel (%p2656) target = $region108
      $region107: #{tpu_custom_call.1} parent=5 // pred_region
        %s2659 = ssub.s32 %s28, 2
        // Predicated region
        $region109: #{tpu_custom_call.1} parent=107 // pred_check
          %p2660 = pneg %p419
        $region110: #{tpu_custom_call.1} parent=107 // pred_check_branch
          %2662 = sbr.rel (%p2660) target = $region112
        $region111: #{tpu_custom_call.1} parent=107 // pred_region
          %s2663 = sand.u32 %s404, 1
          %s2664 = scalar_lea.sflag [#allocation4], %s2663
          %s2665 = sand.u32 %s404, 1
          %s2666 = smul.addr %s2665, 16
          %s2667 = scalar_lea.vmem [#allocation8], %s2666
          %2668 = dma.done %s2664, 256
        $region112: #{tpu_custom_call.1} parent=107 // pred_fallthru
          _
      $region108: #{tpu_custom_call.1} parent=5 // pred_fallthru
        _
    $region6: #{tpu_custom_call.1} parent=1 // loop_footer
      %s32 = sadd.s32 1, %s28
    $region7: #{tpu_custom_call.1} parent=1 // loop_footer_branch
      %27 = sbr.rel target = $region3
    $region8: #{tpu_custom_call.1} parent=1 // loop_exit
      _
    %2669 = vsyncpa [#allocation3], 1
    %s2670 = scalar_lea.sflag [#allocation3], 1
    %2671 = vsyncpa %s2670, 1
    %2672 = vsyncpa [#allocation6], 1
    %2673 = vsyncpa [#allocation4], 1
    %s2674 = scalar_lea.sflag [#allocation4], 1
    %2675 = vsyncpa %s2674, 1

// kernel: tpu_custom_call.1
$region0: #{tpu_custom_call.1}
  #allocation0 [shape = 'u32[]', space=smem, size = 0x4, offset = 0x4, fixed_abs, tag = 'smem constant byte address 0x4 - core index']
  #allocation1 [shape = 'u32[144,128]{1,0:T(1,128)}', space=vmem, size = 0x12000, scoped, tag = 'internal scratch']
  %s0 = inlined_call_operand.vmem [shape: f32[4,8,32], index: 0, kind: input, shape index: {}]
  %s1 = inlined_call_operand.vmem [shape: f32[32,32], index: 1, kind: input, shape index: {}]
  %s2 = inlined_call_operand.vmem [shape: f32[1,32], index: 2, kind: input, shape index: {}]
  %s3 = inlined_call_operand.vmem [shape: f32[32,32], index: 3, kind: input, shape index: {}]
  %s4 = inlined_call_operand.vmem [shape: f32[1,32], index: 4, kind: input, shape index: {}]
  %s5 = inlined_call_operand.hbm [shape: f32[32,32], index: 5, kind: input, shape index: {}]
  %s6 = inlined_call_operand.vmem [shape: f32[1,32], index: 6, kind: input, shape index: {}]
  %s7 = inlined_call_operand.hbm [shape: f32[32,32], index: 7, kind: input, shape index: {}]
  %s8 = inlined_call_operand.vmem [shape: f32[1,32], index: 8, kind: input, shape index: {}]
  %s9 = inlined_call_operand.vmem [shape: f32[1,32], index: 9, kind: input, shape index: {}]
  %s10 = inlined_call_operand.vmem [shape: f32[1,32], index: 10, kind: input, shape index: {}]
  %s11 = inlined_call_operand.hbm [shape: f32[32,64], index: 11, kind: input, shape index: {}]
  %s12 = inlined_call_operand.vmem [shape: f32[1,64], index: 12, kind: input, shape index: {}]
  %s13 = inlined_call_operand.vmem [shape: f32[64,32], index: 13, kind: input, shape index: {}]
  %s14 = inlined_call_operand.vmem [shape: f32[1,32], index: 14, kind: input, shape index: {}]
  %s15 = inlined_call_operand.vmem [shape: f32[1,32], index: 15, kind: input, shape index: {}]
  %s16 = inlined_call_operand.vmem [shape: f32[1,32], index: 16, kind: input, shape index: {}]
  %s17 = inlined_call_operand.hbm [shape: f32[4,8,32], index: 17, kind: output, shape index: {}]
  %s18 = sld [smem:[#allocation0]]
  $region113: #{tpu_custom_call.1} parent=0
    _
  %s20 = ssub.s32 1, %s18
  %s21 = scalar_select 0, %s20, %s18
  $region1: #{tpu_custom_call.1} parent=0
    #allocation2 [shape = 'u8[16384]{0}', space=vmem, size = 0x4000, scoped, tag = 'input window, operand 5, single buffered']
    #allocation3 [shape = 's32[2]{0}', space=sflag, size = 0x8, scoped, tag = 'scoped memory for tpu_custom_call.1']
    #allocation4 [shape = 's32[2]{0}', space=sflag, size = 0x8, scoped, tag = 'scoped memory for tpu_custom_call.1']
    #allocation5 [shape = 'u8[16384]{0}', space=vmem, size = 0x4000, scoped, tag = 'input window, operand 7, single buffered']
    #allocation6 [shape = 's32[1]{0}', space=sflag, size = 0x4, scoped, tag = 'scoped memory for tpu_custom_call.1']
    #allocation7 [shape = 'u8[16384]{0}', space=vmem, size = 0x4000, scoped, tag = 'input window, operand 11, single buffered']
    #allocation8 [shape = 'u8[16384]{0}', space=vmem, size = 0x4000, scoped, tag = 'output window, operand 0']
    %22 = vsyncpa [#allocation3], 0
    %23 = vsyncpa [#allocation6], 0
    %24 = vsyncpa [#allocation4], 0
    %s25 = scalar_lea.sflag [#allocation4], 1
    %26 = vsyncpa %s25, 0
    loop: start=0, step=1, limit=4
    $region2: #{tpu_custom_call.1} parent=1 // loop_pre_header
      _
    $region3: #{tpu_custom_call.1} parent=1 // loop_header
      %s28 = sphi 0, %s32
      %p29 = scmp.ge.s32.totalorder %s28, 4
      %s38 = sphi 0, %s40
      %s41 = sphi 0, %s38
      %s42 = sphi 0, %s41
      %s58 = sphi 0, %s42
      %s62 = sphi 0, %s62
      %s64 = sphi 0, %s62
      %s65 = sphi 0, %s64
      %s79 = sphi 0, %s65
      %s83 = sphi 0, %s83
      %s85 = sphi 0, %s83
      %s86 = sphi 0, %s85
      %s100 = sphi 0, %s86
      %s104 = sphi 0, %s104
      %s106 = sphi 0, %s104
      %s107 = sphi 0, %s106
      %s121 = sphi 0, %s107
      %s125 = sphi 0, %s125
      %s127 = sphi 0, %s125
      %s128 = sphi 0, %s127
      %s142 = sphi 0, %s128
      %s146 = sphi 0, %s146
      %s148 = sphi 0, %s146
      %s149 = sphi 0, %s148
      %s163 = sphi 0, %s149
      %s167 = sphi 0, %s167
      %s169 = sphi 0, %s167
      %s170 = sphi 0, %s169
      %s184 = sphi 0, %s170
      %s188 = sphi 0, %s188
      %s190 = sphi 0, %s188
      %s191 = sphi 0, %s190
      %s205 = sphi 0, %s191
      %s209 = sphi 0, %s209
      %s211 = sphi 0, %s209
      %s212 = sphi 0, %s211
      %s226 = sphi 0, %s212
      %s230 = sphi 0, %s230
      %s232 = sphi 0, %s230
      %s233 = sphi 0, %s232
      %s247 = sphi 0, %s233
      %s251 = sphi 0, %s251
      %s253 = sphi 0, %s251
      %s254 = sphi 0, %s253
      %s268 = sphi 0, %s254
      %s272 = sphi 0, %s272
      %s274 = sphi 0, %s272
      %s275 = sphi 0, %s274
      %s289 = sphi 0, %s275
      %s293 = sphi 0, %s293
      %s295 = sphi 0, %s293
      %s296 = sphi 0, %s295
      %s310 = sphi 0, %s296
      %s314 = sphi 0, %s314
      %s316 = sphi 0, %s314
      %s317 = sphi 0, %s316
      %s331 = sphi 0, %s317
      %s335 = sphi 0, %s335
      %s337 = sphi 0, %s335
      %s338 = sphi 0, %s337
      %s352 = sphi 0, %s338
      %s356 = sphi 0, %s356
      %s358 = sphi 0, %s356
      %s359 = sphi 0, %s358
      %s373 = sphi 0, %s359
      %s377 = sphi 0, %s377
      %s379 = sphi 0, %s377
      %s380 = sphi 0, %s379
      %s394 = sphi 0, %s380
      %s400 = sphi 0, %s402
      %s403 = sphi 0, %s400
      %s404 = sphi 0, %s403
      %s420 = sphi 0, %s404
    $region4: #{tpu_custom_call.1} parent=1 // loop_header_branch
      %31 = sbr.rel (%p29) target = $region8
    $region5: #{tpu_custom_call.1} parent=1 // loop_body
      %s33 = ssub.s32 %s28, 1
      %s34 = ssub.s32 %s28, 2
      %s35 = sadd.s32 %s28, 1
      %s36 = ssub.s32 %s28, %s35
      %p37 = scmp.eq.s32.totalorder %s36, 0
      %s39 = sadd.s32 %s38, 1
      %s40 = scalar_select %p37, %s38, %s39
      %p43 = pneg %p37
      %p44 = scmp.eq.s32.totalorder %s28, 1
      %p45 = por %p43, %p44
      %p46 = scmp.ne.s32.totalorder %s38, %s41
      %p47 = scmp.eq.s32.totalorder %s28, 0
      %p48 = por %p46, %p47
      %p49 = scmp.ne.s32.totalorder %s38, %s41
      %p50 = scmp.eq.s32.totalorder %s33, 1
      %p51 = por %p49, %p50
      %p52 = scmp.ne.s32.totalorder %s41, %s42
      %p53 = scmp.eq.s32.totalorder %s33, 0
      %p54 = por %p52, %p53
      %p55 = scmp.ne.s32.totalorder %s41, %s42
      %p56 = scmp.eq.s32.totalorder %s34, 1
      %p57 = por %p55, %p56
      %p59 = scmp.ne.s32.totalorder %s42, %s58
      %p60 = scmp.eq.s32.totalorder %s34, 0
      %p61 = por %p59, %p60
      %s63 = sadd.s32 %s62, 1
      %p66 = scmp.eq.s32.totalorder %s28, 1
      %p67 = scmp.ne.s32.totalorder %s62, %s64
      %p68 = scmp.eq.s32.totalorder %s28, 0
      %p69 = por %p67, %p68
      %p70 = scmp.ne.s32.totalorder %s62, %s64
      %p71 = scmp.eq.s32.totalorder %s33, 1
      %p72 = por %p70, %p71
      %p73 = scmp.ne.s32.totalorder %s64, %s65
      %p74 = scmp.eq.s32.totalorder %s33, 0
      %p75 = por %p73, %p74
      %p76 = scmp.ne.s32.totalorder %s64, %s65
      %p77 = scmp.eq.s32.totalorder %s34, 1
      %p78 = por %p76, %p77
      %p80 = scmp.ne.s32.totalorder %s65, %s79
      %p81 = scmp.eq.s32.totalorder %s34, 0
      %p82 = por %p80, %p81
      %s84 = sadd.s32 %s83, 1
      %p87 = scmp.eq.s32.totalorder %s28, 1
      %p88 = scmp.ne.s32.totalorder %s83, %s85
      %p89 = scmp.eq.s32.totalorder %s28, 0
      %p90 = por %p88, %p89
      %p91 = scmp.ne.s32.totalorder %s83, %s85
      %p92 = scmp.eq.s32.totalorder %s33, 1
      %p93 = por %p91, %p92
      %p94 = scmp.ne.s32.totalorder %s85, %s86
      %p95 = scmp.eq.s32.totalorder %s33, 0
      %p96 = por %p94, %p95
      %p97 = scmp.ne.s32.totalorder %s85, %s86
      %p98 = scmp.eq.s32.totalorder %s34, 1
      %p99 = por %p97, %p98
      %p101 = scmp.ne.s32.totalorder %s86, %s100
      %p102 = scmp.eq.s32.totalorder %s34, 0
      %p103 = por %p101, %p102
      %s105 = sadd.s32 %s104, 1
      %p108 = scmp.eq.s32.totalorder %s28, 1
      %p109 = scmp.ne.s32.totalorder %s104, %s106
      %p110 = scmp.eq.s32.totalorder %s28, 0
      %p111 = por %p109, %p110
      %p112 = scmp.ne.s32.totalorder %s104, %s106
      %p113 = scmp.eq.s32.totalorder %s33, 1
      %p114 = por %p112, %p113
      %p115 = scmp.ne.s32.totalorder %s106, %s107
      %p116 = scmp.eq.s32.totalorder %s33, 0
      %p117 = por %p115, %p116
      %p118 = scmp.ne.s32.totalorder %s106, %s107
      %p119 = scmp.eq.s32.totalorder %s34, 1
      %p120 = por %p118, %p119
      %p122 = scmp.ne.s32.totalorder %s107, %s121
      %p123 = scmp.eq.s32.totalorder %s34, 0
      %p124 = por %p122, %p123
      %s126 = sadd.s32 %s125, 1
      %p129 = scmp.eq.s32.totalorder %s28, 1
      %p130 = scmp.ne.s32.totalorder %s125, %s127
      %p131 = scmp.eq.s32.totalorder %s28, 0
      %p132 = por %p130, %p131
      %p133 = scmp.ne.s32.totalorder %s125, %s127
      %p134 = scmp.eq.s32.totalorder %s33, 1
      %p135 = por %p133, %p134
      %p136 = scmp.ne.s32.totalorder %s127, %s128
      %p137 = scmp.eq.s32.totalorder %s33, 0
      %p138 = por %p136, %p137
      %p139 = scmp.ne.s32.totalorder %s127, %s128
      %p140 = scmp.eq.s32.totalorder %s34, 1
      %p141 = por %p139, %p140
      %p143 = scmp.ne.s32.totalorder %s128, %s142
      %p144 = scmp.eq.s32.totalorder %s34, 0
      %p145 = por %p143, %p144
      %s147 = sadd.s32 %s146, 1
      %p150 = scmp.eq.s32.totalorder %s28, 1
      %p151 = scmp.ne.s32.totalorder %s146, %s148
      %p152 = scmp.eq.s32.totalorder %s28, 0
      %p153 = por %p151, %p152
      %p154 = scmp.ne.s32.totalorder %s146, %s148
      %p155 = scmp.eq.s32.totalorder %s33, 1
      %p156 = por %p154, %p155
      %p157 = scmp.ne.s32.totalorder %s148, %s149
      %p158 = scmp.eq.s32.totalorder %s33, 0
      %p159 = por %p157, %p158
      %p160 = scmp.ne.s32.totalorder %s148, %s149
      %p161 = scmp.eq.s32.totalorder %s34, 1
      %p162 = por %p160, %p161
      %p164 = scmp.ne.s32.totalorder %s149, %s163
      %p165 = scmp.eq.s32.totalorder %s34, 0
      %p166 = por %p164, %p165
      %s168 = sadd.s32 %s167, 1
      %p171 = scmp.eq.s32.totalorder %s28, 1
      %p172 = scmp.ne.s32.totalorder %s167, %s169
      %p173 = scmp.eq.s32.totalorder %s28, 0
      %p174 = por %p172, %p173
      %p175 = scmp.ne.s32.totalorder %s167, %s169
      %p176 = scmp.eq.s32.totalorder %s33, 1
      %p177 = por %p175, %p176
      %p178 = scmp.ne.s32.totalorder %s169, %s170
      %p179 = scmp.eq.s32.totalorder %s33, 0
      %p180 = por %p178, %p179
      %p181 = scmp.ne.s32.totalorder %s169, %s170
      %p182 = scmp.eq.s32.totalorder %s34, 1
      %p183 = por %p181, %p182
      %p185 = scmp.ne.s32.totalorder %s170, %s184
      %p186 = scmp.eq.s32.totalorder %s34, 0
      %p187 = por %p185, %p186
      %s189 = sadd.s32 %s188, 1
      %p192 = scmp.eq.s32.totalorder %s28, 1
      %p193 = scmp.ne.s32.totalorder %s188, %s190
      %p194 = scmp.eq.s32.totalorder %s28, 0
      %p195 = por %p193, %p194
      %p196 = scmp.ne.s32.totalorder %s188, %s190
      %p197 = scmp.eq.s32.totalorder %s33, 1
      %p198 = por %p196, %p197
      %p199 = scmp.ne.s32.totalorder %s190, %s191
      %p200 = scmp.eq.s32.totalorder %s33, 0
      %p201 = por %p199, %p200
      %p202 = scmp.ne.s32.totalorder %s190, %s191
      %p203 = scmp.eq.s32.totalorder %s34, 1
      %p204 = por %p202, %p203
      %p206 = scmp.ne.s32.totalorder %s191, %s205
      %p207 = scmp.eq.s32.totalorder %s34, 0
      %p208 = por %p206, %p207
      %s210 = sadd.s32 %s209, 1
      %p213 = scmp.eq.s32.totalorder %s28, 1
      %p214 = scmp.ne.s32.totalorder %s209, %s211
      %p215 = scmp.eq.s32.totalorder %s28, 0
      %p216 = por %p214, %p215
      %p217 = scmp.ne.s32.totalorder %s209, %s211
      %p218 = scmp.eq.s32.totalorder %s33, 1
      %p219 = por %p217, %p218
      %p220 = scmp.ne.s32.totalorder %s211, %s212
      %p221 = scmp.eq.s32.totalorder %s33, 0
      %p222 = por %p220, %p221
      %p223 = scmp.ne.s32.totalorder %s211, %s212
      %p224 = scmp.eq.s32.totalorder %s34, 1
      %p225 = por %p223, %p224
      %p227 = scmp.ne.s32.totalorder %s212, %s226
      %p228 = scmp.eq.s32.totalorder %s34, 0
      %p229 = por %p227, %p228
      %s231 = sadd.s32 %s230, 1
      %p234 = scmp.eq.s32.totalorder %s28, 1
      %p235 = scmp.ne.s32.totalorder %s230, %s232
      %p236 = scmp.eq.s32.totalorder %s28, 0
      %p237 = por %p235, %p236
      %p238 = scmp.ne.s32.totalorder %s230, %s232
      %p239 = scmp.eq.s32.totalorder %s33, 1
      %p240 = por %p238, %p239
      %p241 = scmp.ne.s32.totalorder %s232, %s233
      %p242 = scmp.eq.s32.totalorder %s33, 0
      %p243 = por %p241, %p242
      %p244 = scmp.ne.s32.totalorder %s232, %s233
      %p245 = scmp.eq.s32.totalorder %s34, 1
      %p246 = por %p244, %p245
      %p248 = scmp.ne.s32.totalorder %s233, %s247
      %p249 = scmp.eq.s32.totalorder %s34, 0
      %p250 = por %p248, %p249
      %s252 = sadd.s32 %s251, 1
      %p255 = scmp.eq.s32.totalorder %s28, 1
      %p256 = scmp.ne.s32.totalorder %s251, %s253
      %p257 = scmp.eq.s32.totalorder %s28, 0
      %p258 = por %p256, %p257
      %p259 = scmp.ne.s32.totalorder %s251, %s253
      %p260 = scmp.eq.s32.totalorder %s33, 1
      %p261 = por %p259, %p260
      %p262 = scmp.ne.s32.totalorder %s253, %s254
      %p263 = scmp.eq.s32.totalorder %s33, 0
      %p264 = por %p262, %p263
      %p265 = scmp.ne.s32.totalorder %s253, %s254
      %p266 = scmp.eq.s32.totalorder %s34, 1
      %p267 = por %p265, %p266
      %p269 = scmp.ne.s32.totalorder %s254, %s268
      %p270 = scmp.eq.s32.totalorder %s34, 0
      %p271 = por %p269, %p270
      %s273 = sadd.s32 %s272, 1
      %p276 = scmp.eq.s32.totalorder %s28, 1
      %p277 = scmp.ne.s32.totalorder %s272, %s274
      %p278 = scmp.eq.s32.totalorder %s28, 0
      %p279 = por %p277, %p278
      %p280 = scmp.ne.s32.totalorder %s272, %s274
      %p281 = scmp.eq.s32.totalorder %s33, 1
      %p282 = por %p280, %p281
      %p283 = scmp.ne.s32.totalorder %s274, %s275
      %p284 = scmp.eq.s32.totalorder %s33, 0
      %p285 = por %p283, %p284
      %p286 = scmp.ne.s32.totalorder %s274, %s275
      %p287 = scmp.eq.s32.totalorder %s34, 1
      %p288 = por %p286, %p287
      %p290 = scmp.ne.s32.totalorder %s275, %s289
      %p291 = scmp.eq.s32.totalorder %s34, 0
      %p292 = por %p290, %p291
      %s294 = sadd.s32 %s293, 1
      %p297 = scmp.eq.s32.totalorder %s28, 1
      %p298 = scmp.ne.s32.totalorder %s293, %s295
      %p299 = scmp.eq.s32.totalorder %s28, 0
      %p300 = por %p298, %p299
      %p301 = scmp.ne.s32.totalorder %s293, %s295
      %p302 = scmp.eq.s32.totalorder %s33, 1
      %p303 = por %p301, %p302
      %p304 = scmp.ne.s32.totalorder %s295, %s296
      %p305 = scmp.eq.s32.totalorder %s33, 0
      %p306 = por %p304, %p305
      %p307 = scmp.ne.s32.totalorder %s295, %s296
      %p308 = scmp.eq.s32.totalorder %s34, 1
      %p309 = por %p307, %p308
      %p311 = scmp.ne.s32.totalorder %s296, %s310
      %p312 = scmp.eq.s32.totalorder %s34, 0
      %p313 = por %p311, %p312
      %s315 = sadd.s32 %s314, 1
      %p318 = scmp.eq.s32.totalorder %s28, 1
      %p319 = scmp.ne.s32.totalorder %s314, %s316
      %p320 = scmp.eq.s32.totalorder %s28, 0
      %p321 = por %p319, %p320
      %p322 = scmp.ne.s32.totalorder %s314, %s316
      %p323 = scmp.eq.s32.totalorder %s33, 1
      %p324 = por %p322, %p323
      %p325 = scmp.ne.s32.totalorder %s316, %s317
      %p326 = scmp.eq.s32.totalorder %s33, 0
      %p327 = por %p325, %p326
      %p328 = scmp.ne.s32.totalorder %s316, %s317
      %p329 = scmp.eq.s32.totalorder %s34, 1
      %p330 = por %p328, %p329
      %p332 = scmp.ne.s32.totalorder %s317, %s331
      %p333 = scmp.eq.s32.totalorder %s34, 0
      %p334 = por %p332, %p333
      %s336 = sadd.s32 %s335, 1
      %p339 = scmp.eq.s32.totalorder %s28, 1
      %p340 = scmp.ne.s32.totalorder %s335, %s337
      %p341 = scmp.eq.s32.totalorder %s28, 0
      %p342 = por %p340, %p341
      %p343 = scmp.ne.s32.totalorder %s335, %s337
      %p344 = scmp.eq.s32.totalorder %s33, 1
      %p345 = por %p343, %p344
      %p346 = scmp.ne.s32.totalorder %s337, %s338
      %p347 = scmp.eq.s32.totalorder %s33, 0
      %p348 = por %p346, %p347
      %p349 = scmp.ne.s32.totalorder %s337, %s338
      %p350 = scmp.eq.s32.totalorder %s34, 1
      %p351 = por %p349, %p350
      %p353 = scmp.ne.s32.totalorder %s338, %s352
      %p354 = scmp.eq.s32.totalorder %s34, 0
      %p355 = por %p353, %p354
      %s357 = sadd.s32 %s356, 1
      %p360 = scmp.eq.s32.totalorder %s28, 1
      %p361 = scmp.ne.s32.totalorder %s356, %s358
      %p362 = scmp.eq.s32.totalorder %s28, 0
      %p363 = por %p361, %p362
      %p364 = scmp.ne.s32.totalorder %s356, %s358
      %p365 = scmp.eq.s32.totalorder %s33, 1
      %p366 = por %p364, %p365
      %p367 = scmp.ne.s32.totalorder %s358, %s359
      %p368 = scmp.eq.s32.totalorder %s33, 0
      %p369 = por %p367, %p368
      %p370 = scmp.ne.s32.totalorder %s358, %s359
      %p371 = scmp.eq.s32.totalorder %s34, 1
      %p372 = por %p370, %p371
      %p374 = scmp.ne.s32.totalorder %s359, %s373
      %p375 = scmp.eq.s32.totalorder %s34, 0
      %p376 = por %p374, %p375
      %s378 = sadd.s32 %s377, 1
      %p381 = scmp.eq.s32.totalorder %s28, 1
      %p382 = scmp.ne.s32.totalorder %s377, %s379
      %p383 = scmp.eq.s32.totalorder %s28, 0
      %p384 = por %p382, %p383
      %p385 = scmp.ne.s32.totalorder %s377, %s379
      %p386 = scmp.eq.s32.totalorder %s33, 1
      %p387 = por %p385, %p386
      %p388 = scmp.ne.s32.totalorder %s379, %s380
      %p389 = scmp.eq.s32.totalorder %s33, 0
      %p390 = por %p388, %p389
      %p391 = scmp.ne.s32.totalorder %s379, %s380
      %p392 = scmp.eq.s32.totalorder %s34, 1
      %p393 = por %p391, %p392
      %p395 = scmp.ne.s32.totalorder %s380, %s394
      %p396 = scmp.eq.s32.totalorder %s34, 0
      %p397 = por %p395, %p396
      %s398 = ssub.s32 %s28, %s35
      %p399 = scmp.eq.s32.totalorder %s398, 0
      %s401 = sadd.s32 %s400, 1
      %s402 = scalar_select %p399, %s400, %s401
      %p405 = pneg %p399
      %p406 = scmp.eq.s32.totalorder %s28, 1
      %p407 = por %p405, %p406
      %p408 = scmp.ne.s32.totalorder %s400, %s403
      %p409 = scmp.eq.s32.totalorder %s28, 0
      %p410 = por %p408, %p409
      %p411 = scmp.ne.s32.totalorder %s400, %s403
      %p412 = scmp.eq.s32.totalorder %s33, 1
      %p413 = por %p411, %p412
      %p414 = scmp.ne.s32.totalorder %s403, %s404
      %p415 = scmp.eq.s32.totalorder %s33, 0
      %p416 = por %p414, %p415
      %p417 = scmp.ne.s32.totalorder %s403, %s404
      %p418 = scmp.eq.s32.totalorder %s34, 1
      %p419 = por %p417, %p418
      %p421 = scmp.ne.s32.totalorder %s404, %s420
      %p422 = scmp.eq.s32.totalorder %s34, 0
      %p423 = por %p421, %p422
      %p424 = scmp.le.s32.totalorder 1, %s28
      %p425 = scmp.lt.s32.totalorder %s28, 3
      %p426 = pnand %p424, %p425
      %p427 = pneg %p426
      // Predicated region
      $region9: #{tpu_custom_call.1} parent=5 // pred_check
        _
      $region10: #{tpu_custom_call.1} parent=5 // pred_check_branch
        %429 = sbr.rel (%p426) target = $region12
      $region11: #{tpu_custom_call.1} parent=5 // pred_region
        %s430 = ssub.s32 %s28, 1
        // Predicated region
        $region13: #{tpu_custom_call.1} parent=11 // pred_check
          %p431 = pneg %p75
        $region14: #{tpu_custom_call.1} parent=11 // pred_check_branch
          %433 = sbr.rel (%p431) target = $region16
        $region15: #{tpu_custom_call.1} parent=11 // pred_region
          _
        $region16: #{tpu_custom_call.1} parent=11 // pred_fallthru
          _
        // Predicated region
        $region17: #{tpu_custom_call.1} parent=11 // pred_check
          %p434 = pneg %p96
        $region18: #{tpu_custom_call.1} parent=11 // pred_check_branch
          %436 = sbr.rel (%p434) target = $region20
        $region19: #{tpu_custom_call.1} parent=11 // pred_region
          _
        $region20: #{tpu_custom_call.1} parent=11 // pred_fallthru
          _
        // Predicated region
        $region21: #{tpu_custom_call.1} parent=11 // pred_check
          %p437 = pneg %p117
        $region22: #{tpu_custom_call.1} parent=11 // pred_check_branch
          %439 = sbr.rel (%p437) target = $region24
        $region23: #{tpu_custom_call.1} parent=11 // pred_region
          _
        $region24: #{tpu_custom_call.1} parent=11 // pred_fallthru
          _
        // Predicated region
        $region25: #{tpu_custom_call.1} parent=11 // pred_check
          %p440 = pneg %p138
        $region26: #{tpu_custom_call.1} parent=11 // pred_check_branch
          %442 = sbr.rel (%p440) target = $region28
        $region27: #{tpu_custom_call.1} parent=11 // pred_region
          _
        $region28: #{tpu_custom_call.1} parent=11 // pred_fallthru
          _
        // Predicated region
        $region29: #{tpu_custom_call.1} parent=11 // pred_check
          %p443 = pneg %p159
        $region30: #{tpu_custom_call.1} parent=11 // pred_check_branch
          %445 = sbr.rel (%p443) target = $region32
        $region31: #{tpu_custom_call.1} parent=11 // pred_region
          %s447 = ssub.s32 512, 512
          %448 = vsyncadd [#allocation3], %s447
          %s449 = sshll.u32 [#allocation2], 4
          %s450 = int_to_ptr.vmem [resolvable:$true] %s449
          %455 = dma.hbm_to_vmem [thread:$0]  %s5, 512, %s450, [#allocation3], 128, 128, 8
        $region32: #{tpu_custom_call.1} parent=11 // pred_fallthru
          _
        // Predicated region
        $region33: #{tpu_custom_call.1} parent=11 // pred_check
          %p456 = pneg %p180
        $region34: #{tpu_custom_call.1} parent=11 // pred_check_branch
          %458 = sbr.rel (%p456) target = $region36
        $region35: #{tpu_custom_call.1} parent=11 // pred_region
          _
        $region36: #{tpu_custom_call.1} parent=11 // pred_fallthru
          _
        // Predicated region
        $region37: #{tpu_custom_call.1} parent=11 // pred_check
          %p459 = pneg %p201
        $region38: #{tpu_custom_call.1} parent=11 // pred_check_branch
          %461 = sbr.rel (%p459) target = $region40
        $region39: #{tpu_custom_call.1} parent=11 // pred_region
          %s463 = ssub.s32 512, 512
          %464 = vsyncadd [#allocation6], %s463
          %s465 = sshll.u32 [#allocation5], 4
          %s466 = int_to_ptr.vmem [resolvable:$true] %s465
          %471 = dma.hbm_to_vmem [thread:$0]  %s7, 512, %s466, [#allocation6], 128, 128, 8
        $region40: #{tpu_custom_call.1} parent=11 // pred_fallthru
          _
        // Predicated region
        $region41: #{tpu_custom_call.1} parent=11 // pred_check
          %p472 = pneg %p222
        $region42: #{tpu_custom_call.1} parent=11 // pred_check_branch
          %474 = sbr.rel (%p472) target = $region44
        $region43: #{tpu_custom_call.1} parent=11 // pred_region
          _
        $region44: #{tpu_custom_call.1} parent=11 // pred_fallthru
          _
        // Predicated region
        $region45: #{tpu_custom_call.1} parent=11 // pred_check
          %p475 = pneg %p243
        $region46: #{tpu_custom_call.1} parent=11 // pred_check_branch
          %477 = sbr.rel (%p475) target = $region48
        $region47: #{tpu_custom_call.1} parent=11 // pred_region
          _
        $region48: #{tpu_custom_call.1} parent=11 // pred_fallthru
          _
        // Predicated region
        $region49: #{tpu_custom_call.1} parent=11 // pred_check
          %p478 = pneg %p264
        $region50: #{tpu_custom_call.1} parent=11 // pred_check_branch
          %480 = sbr.rel (%p478) target = $region52
        $region51: #{tpu_custom_call.1} parent=11 // pred_region
          _
        $region52: #{tpu_custom_call.1} parent=11 // pred_fallthru
          _
        // Predicated region
        $region53: #{tpu_custom_call.1} parent=11 // pred_check
          %p481 = pneg %p285
        $region54: #{tpu_custom_call.1} parent=11 // pred_check_branch
          %483 = sbr.rel (%p481) target = $region56
        $region55: #{tpu_custom_call.1} parent=11 // pred_region
          %s485 = ssub.s32 512, 512
          %486 = vsyncadd [#allocation6], %s485
          %s487 = sshll.u32 [#allocation7], 4
          %s488 = int_to_ptr.vmem [resolvable:$true] %s487
          %493 = dma.hbm_to_vmem [thread:$0]  %s11, 512, %s488, [#allocation6], 128, 128, 8
        $region56: #{tpu_custom_call.1} parent=11 // pred_fallthru
          _
        // Predicated region
        $region57: #{tpu_custom_call.1} parent=11 // pred_check
          %p494 = pneg %p306
        $region58: #{tpu_custom_call.1} parent=11 // pred_check_branch
          %496 = sbr.rel (%p494) target = $region60
        $region59: #{tpu_custom_call.1} parent=11 // pred_region
          _
        $region60: #{tpu_custom_call.1} parent=11 // pred_fallthru
          _
        // Predicated region
        $region61: #{tpu_custom_call.1} parent=11 // pred_check
          %p497 = pneg %p327
        $region62: #{tpu_custom_call.1} parent=11 // pred_check_branch
          %499 = sbr.rel (%p497) target = $region64
        $region63: #{tpu_custom_call.1} parent=11 // pred_region
          _
        $region64: #{tpu_custom_call.1} parent=11 // pred_fallthru
          _
        // Predicated region
        $region65: #{tpu_custom_call.1} parent=11 // pred_check
          %p500 = pneg %p348
        $region66: #{tpu_custom_call.1} parent=11 // pred_check_branch
          %502 = sbr.rel (%p500) target = $region68
        $region67: #{tpu_custom_call.1} parent=11 // pred_region
          _
        $region68: #{tpu_custom_call.1} parent=11 // pred_fallthru
          _
        // Predicated region
        $region69: #{tpu_custom_call.1} parent=11 // pred_check
          %p503 = pneg %p369
        $region70: #{tpu_custom_call.1} parent=11 // pred_check_branch
          %505 = sbr.rel (%p503) target = $region72
        $region71: #{tpu_custom_call.1} parent=11 // pred_region
          _
        $region72: #{tpu_custom_call.1} parent=11 // pred_fallthru
          _
        // Predicated region
        $region73: #{tpu_custom_call.1} parent=11 // pred_check
          %p506 = pneg %p390
        $region74: #{tpu_custom_call.1} parent=11 // pred_check_branch
          %508 = sbr.rel (%p506) target = $region76
        $region75: #{tpu_custom_call.1} parent=11 // pred_region
          _
        $region76: #{tpu_custom_call.1} parent=11 // pred_fallthru
          _
      $region12: #{tpu_custom_call.1} parent=5 // pred_fallthru
        _
      %p509 = scmp.lt.s32.totalorder %s28, 2
      // Predicated region
      $region77: #{tpu_custom_call.1} parent=5 // pred_check
        %p510 = pneg %p509
      $region78: #{tpu_custom_call.1} parent=5 // pred_check_branch
        %512 = sbr.rel (%p510) target = $region80
      $region79: #{tpu_custom_call.1} parent=5 // pred_region
        // Predicated region
        $region81: #{tpu_custom_call.1} parent=79 // pred_check
          %p513 = pneg %p48
        $region82: #{tpu_custom_call.1} parent=79 // pred_check_branch
          %515 = sbr.rel (%p513) target = $region84
        $region83: #{tpu_custom_call.1} parent=79 // pred_region
          %s516 = smul.u32 2, %s28
          %p517 = scmp.lt.s32.totalorder %s516, 3
          %s518 = scalar_select %p517, %s516, 3
          %s519 = smul.addr %s518, 8
          %s520 = scalar_lea.vmem %s0, %s519
          %s521 = smul.u32 2, %s28
        $region84: #{tpu_custom_call.1} parent=79 // pred_fallthru
          _
      $region80: #{tpu_custom_call.1} parent=5 // pred_fallthru
        _
      %p522 = scmp.le.s32.totalorder 1, %s28
      %p523 = scmp.lt.s32.totalorder %s28, 3
      %p524 = pnand %p522, %p523
      %p525 = pneg %p524
      // Predicated region
      $region85: #{tpu_custom_call.1} parent=5 // pred_check
        _
      $region86: #{tpu_custom_call.1} parent=5 // pred_check_branch
        %527 = sbr.rel (%p524) target = $region88
      $region87: #{tpu_custom_call.1} parent=5 // pred_region
        %s528 = ssub.s32 %s28, 1
        // Predicated region
        $region89: #{tpu_custom_call.1} parent=87 // pred_check
          %p529 = pneg %p159
        $region90: #{tpu_custom_call.1} parent=87 // pred_check_branch
          %531 = sbr.rel (%p529) target = $region92
        $region91: #{tpu_custom_call.1} parent=87 // pred_region
          %532 = dma.done [#allocation3], 512
        $region92: #{tpu_custom_call.1} parent=87 // pred_fallthru
          _
        // Predicated region
        $region93: #{tpu_custom_call.1} parent=87 // pred_check
          %p533 = pneg %p201
        $region94: #{tpu_custom_call.1} parent=87 // pred_check_branch
          %535 = sbr.rel (%p533) target = $region96
        $region95: #{tpu_custom_call.1} parent=87 // pred_region
          %536 = dma.done [#allocation6], 512
        $region96: #{tpu_custom_call.1} parent=87 // pred_fallthru
          _
        // Predicated region
        $region97: #{tpu_custom_call.1} parent=87 // pred_check
          %p537 = pneg %p285
        $region98: #{tpu_custom_call.1} parent=87 // pred_check_branch
          %539 = sbr.rel (%p537) target = $region100
        $region99: #{tpu_custom_call.1} parent=87 // pred_region
          %540 = dma.done [#allocation6], 512
        $region100: #{tpu_custom_call.1} parent=87 // pred_fallthru
          _
        %s541 = smul.u32 2, %s33
        %p542 = scmp.lt.s32.totalorder %s541, 3
        %s543 = scalar_select %p542, %s541, 3
        %s544 = smul.addr %s543, 8
        %s545 = scalar_lea.vmem %s0, %s544
        %p546 = pneg %p54
        %p547 = pneg %p51
        %p548 = pneg %p75
        %p549 = pneg %p72
        %p550 = pneg %p96
        %p551 = pneg %p93
        %p552 = pneg %p117
        %p553 = pneg %p114
        %p554 = pneg %p138
        %p555 = pneg %p135
        %p556 = pneg %p159
        %p557 = pneg %p156
        %p558 = pneg %p180
        %p559 = pneg %p177
        %p560 = pneg %p201
        %p561 = pneg %p198
        %p562 = pneg %p222
        %p563 = pneg %p219
        %p564 = pneg %p243
        %p565 = pneg %p240
        %p566 = pneg %p264
        %p567 = pneg %p261
        %p568 = pneg %p285
        %p569 = pneg %p282
        %p570 = pneg %p306
        %p571 = pneg %p303
        %p572 = pneg %p327
        %p573 = pneg %p324
        %p574 = pneg %p348
        %p575 = pneg %p345
        %p576 = pneg %p369
        %p577 = pneg %p366
        %p578 = pneg %p390
        %p579 = pneg %p387
        %p580 = pneg %p416
        %p581 = pneg %p413
        %s582 = sand.u32 %s403, 1
        %s583 = scalar_lea.sflag [#allocation4], %s582
        %s584 = sand.u32 %s403, 1
        %s585 = smul.addr %s584, 16
        %s586 = scalar_lea.vmem [#allocation8], %s585
        %s587 = smul.u32 2, %s33
        %p588 = scmp.lt.s32.totalorder %s587, 3
        %s589 = scalar_select %p588, %s587, 3
        %s590 = smul.addr %s589, 8
        %s591 = scalar_lea.vmem %s0, %s590
        %s592 = smul.u32 2, %s33
        %s593 = smul.u32 2, %s33
        %v594 = vld [vmem:[%s591] sm:$0xff]
        %v595 = vld [vmem:[%s591 + $0x8] sm:$0xff]
        %v596 = vld [vmem:[%s9] sm:$0x1]
        %v597 = vld [vmem:[%s10] sm:$0x1]
        %vm598 = vcmask 261120
        %v599 = vsel %vm598, %v594, 0.0
        %600 = vadd.xlane.f32.xlu0 %v599
        %v601 = vpop.xlane.xlu0 %600
        %v602 = vsel %vm598, %v595, 0.0
        %603 = vadd.xlane.f32.xlu0 %v602
        %v604 = vpop.xlane.xlu0 %603
        %v605 = vrcp.pop 32.0
        %v606 = vmul.f32 %v601, %v605
        %v607 = vmul.f32 %v604, %v605
        %v608 = vsub.f32 %v594, %v606
        %v609 = vsub.f32 %v595, %v607
        %v610 = vmul.f32 %v608, %v608
        %v611 = vmul.f32 %v609, %v609
        %v612 = vsel %vm598, %v610, 0.0
        %613 = vadd.xlane.f32.xlu0 %v612
        %v614 = vpop.xlane.xlu0 %613
        %v615 = vsel %vm598, %v611, 0.0
        %616 = vadd.xlane.f32.xlu0 %v615
        %v617 = vpop.xlane.xlu0 %616
        %v618 = vmul.f32 %v614, %v605
        %v619 = vmul.f32 %v617, %v605
        %v620 = vadd.f32 %v618, 1e-05
        %v621 = vadd.f32 %v619, 1e-05
        %v622 = vrsqrt.pop %v620
        %v623 = vrsqrt.pop %v621
        %v624 = vmul.f32 %v608, %v622
        %v625 = vmul.f32 %v609, %v623
        %v627 = vlaneseq
        %v628 = vshrl.u32 %v627, 7
        %v629 = vsub.s32 0, %v628
        %v630 = vrot.slane %v596, %v629
        %v632 = vmul.f32 %v624, %v630
        %v633 = vmul.f32 %v625, %v630
        %v635 = vlaneseq
        %v636 = vshrl.u32 %v635, 7
        %v637 = vsub.s32 0, %v636
        %v638 = vrot.slane %v597, %v637
        %v640 = vadd.f32 %v632, %v638
        %v641 = vadd.f32 %v633, %v638
        %v642 = vld [vmem:[%s1] sm:$0xff]
        %v643 = vld [vmem:[%s1 + $0x8] sm:$0xff]
        %v644 = vld [vmem:[%s1 + $0x10] sm:$0xff]
        %v645 = vld [vmem:[%s1 + $0x18] sm:$0xff]
        %v646 = vld [vmem:[%s2] sm:$0x1]
        %v648 = vlaneseq
        %v649 = vshrl.u32 %v648, 7
        %v650 = vsub.s32 0, %v649
        %v651 = vrot.slane %v646, %v650
        %v654 = vsel %vm598, %v640, 0
        %v657 = vsel %vm598, %v641, 0
        %659 = vmatprep.subr.mxu0 0.0
        %660 = vmatpush1.msra.mxu0 0.0
        %661 = vmatprep.subr.mxu0 0.0
        %662 = vmatpush1.msra.mxu0 0.0
        %663 = vmatprep.subr.mxu0 0.0
        %664 = vmatpush1.msra.mxu0 0.0
        %665 = vmatprep.subr.mxu0 0.0
        %666 = vmatpush1.msra.mxu0 0.0
        %667 = vmatprep.subr.mxu0 0.0
        %668 = vmatpush1.msra.mxu0 0.0
        %669 = vmatprep.subr.mxu0 0.0
        %670 = vmatpush1.msra.mxu0 0.0
        %671 = vmatprep.subr.mxu0 0.0
        %672 = vmatpush1.msra.mxu0 0.0
        %673 = vmatprep.subr.mxu0 0.0
        %674 = vmatpush1.msra.mxu0 0.0
        %675 = vmatprep.subr.mxu0 0.0
        %676 = vmatpush1.msra.mxu0 0.0
        %677 = vmatprep.subr.mxu0 0.0
        %678 = vmatpush1.msra.mxu0 0.0
        %679 = vmatprep.subr.mxu0 0.0
        %680 = vmatpush1.msra.mxu0 0.0
        %681 = vmatprep.subr.mxu0 0.0
        %682 = vmatpush1.msra.mxu0 0.0
        %683 = vmatprep.subr.mxu0 0.0
        %684 = vmatpush1.msra.mxu0 %v645
        %685 = vmatprep.subr.mxu0 0.0
        %686 = vmatpush1.msra.mxu0 %v644
        %687 = vmatprep.subr.mxu0 0.0
        %688 = vmatpush1.msra.mxu0 %v643
        %689 = vmatprep.subr.mxu0 0.0
        %690 = vmatpush1.msra.mxu0 %v642
        %691 = vmatprep.subr.mxu0 0.0
        %692 = vmatpush2.msra.mxu0 0.0
        %693 = vmatprep.subr.mxu0 0.0
        %694 = vmatpush2.msra.mxu0 0.0
        %695 = vmatprep.subr.mxu0 0.0
        %696 = vmatpush2.msra.mxu0 0.0
        %697 = vmatprep.subr.mxu0 0.0
        %698 = vmatpush2.msra.mxu0 0.0
        %699 = vmatprep.subr.mxu0 0.0
        %700 = vmatpush2.msra.mxu0 0.0
        %701 = vmatprep.subr.mxu0 0.0
        %702 = vmatpush2.msra.mxu0 0.0
        %703 = vmatprep.subr.mxu0 0.0
        %704 = vmatpush2.msra.mxu0 0.0
        %705 = vmatprep.subr.mxu0 0.0
        %706 = vmatpush2.msra.mxu0 0.0
        %707 = vmatprep.subr.mxu0 0.0
        %708 = vmatpush2.msra.mxu0 0.0
        %709 = vmatprep.subr.mxu0 0.0
        %710 = vmatpush2.msra.mxu0 0.0
        %711 = vmatprep.subr.mxu0 0.0
        %712 = vmatpush2.msra.mxu0 0.0
        %713 = vmatprep.subr.mxu0 0.0
        %714 = vmatpush2.msra.mxu0 0.0
        %715 = vmatprep.subr.mxu0 0.0
        %716 = vmatpush2.msra.mxu0 0.0
        %717 = vmatprep.subr.mxu0 0.0
        %718 = vmatpush2.msra.mxu0 0.0
        %719 = vmatprep.subr.mxu0 0.0
        %720 = vmatpush2.msra.mxu0 0.0
        %721 = vmatprep.subr.mxu0 0.0
        %722 = vmatpush2.msra.mxu0 0.0
        %723 = vmatprep.mubr.f32.mxu0 0.0
        %724 = vmatmul.mubr.f32.gmra.mxu0 %v654
        %v725 = vpop.f32.mrf.mxu0
        %v726 = vadd.f32 %v651, %v725
        %v727 = vpop.f32.mrf.mxu0
        %728 = vmatprep.mubr.f32.mxu0 0.0
        %729 = vmatmul.mubr.f32.gmra.mxu0 %v657
        %v730 = vpop.f32.mrf.mxu0
        %v731 = vadd.f32 %v651, %v730
        %v732 = vpop.f32.mrf.mxu0
        %733 = vdwg.mxu0
        %v734 = vld [vmem:[%s3] sm:$0xff]
        %v735 = vld [vmem:[%s3 + $0x8] sm:$0xff]
        %v736 = vld [vmem:[%s3 + $0x10] sm:$0xff]
        %v737 = vld [vmem:[%s3 + $0x18] sm:$0xff]
        %v738 = vld [vmem:[%s4] sm:$0x1]
        %v740 = vlaneseq
        %v741 = vshrl.u32 %v740, 7
        %v742 = vsub.s32 0, %v741
        %v743 = vrot.slane %v738, %v742
        %745 = vmatprep.subr.mxu0 0.0
        %746 = vmatpush1.msra.mxu0 0.0
        %747 = vmatprep.subr.mxu0 0.0
        %748 = vmatpush1.msra.mxu0 0.0
        %749 = vmatprep.subr.mxu0 0.0
        %750 = vmatpush1.msra.mxu0 0.0
        %751 = vmatprep.subr.mxu0 0.0
        %752 = vmatpush1.msra.mxu0 0.0
        %753 = vmatprep.subr.mxu0 0.0
        %754 = vmatpush1.msra.mxu0 0.0
        %755 = vmatprep.subr.mxu0 0.0
        %756 = vmatpush1.msra.mxu0 0.0
        %757 = vmatprep.subr.mxu0 0.0
        %758 = vmatpush1.msra.mxu0 0.0
        %759 = vmatprep.subr.mxu0 0.0
        %760 = vmatpush1.msra.mxu0 0.0
        %761 = vmatprep.subr.mxu0 0.0
        %762 = vmatpush1.msra.mxu0 0.0
        %763 = vmatprep.subr.mxu0 0.0
        %764 = vmatpush1.msra.mxu0 0.0
        %765 = vmatprep.subr.mxu0 0.0
        %766 = vmatpush1.msra.mxu0 0.0
        %767 = vmatprep.subr.mxu0 0.0
        %768 = vmatpush1.msra.mxu0 0.0
        %769 = vmatprep.subr.mxu0 0.0
        %770 = vmatpush1.msra.mxu0 %v737
        %771 = vmatprep.subr.mxu0 0.0
        %772 = vmatpush1.msra.mxu0 %v736
        %773 = vmatprep.subr.mxu0 0.0
        %774 = vmatpush1.msra.mxu0 %v735
        %775 = vmatprep.subr.mxu0 0.0
        %776 = vmatpush1.msra.mxu0 %v734
        %777 = vmatprep.subr.mxu0 0.0
        %778 = vmatpush2.msra.mxu0 0.0
        %779 = vmatprep.subr.mxu0 0.0
        %780 = vmatpush2.msra.mxu0 0.0
        %781 = vmatprep.subr.mxu0 0.0
        %782 = vmatpush2.msra.mxu0 0.0
        %783 = vmatprep.subr.mxu0 0.0
        %784 = vmatpush2.msra.mxu0 0.0
        %785 = vmatprep.subr.mxu0 0.0
        %786 = vmatpush2.msra.mxu0 0.0
        %787 = vmatprep.subr.mxu0 0.0
        %788 = vmatpush2.msra.mxu0 0.0
        %789 = vmatprep.subr.mxu0 0.0
        %790 = vmatpush2.msra.mxu0 0.0
        %791 = vmatprep.subr.mxu0 0.0
        %792 = vmatpush2.msra.mxu0 0.0
        %793 = vmatprep.subr.mxu0 0.0
        %794 = vmatpush2.msra.mxu0 0.0
        %795 = vmatprep.subr.mxu0 0.0
        %796 = vmatpush2.msra.mxu0 0.0
        %797 = vmatprep.subr.mxu0 0.0
        %798 = vmatpush2.msra.mxu0 0.0
        %799 = vmatprep.subr.mxu0 0.0
        %800 = vmatpush2.msra.mxu0 0.0
        %801 = vmatprep.subr.mxu0 0.0
        %802 = vmatpush2.msra.mxu0 0.0
        %803 = vmatprep.subr.mxu0 0.0
        %804 = vmatpush2.msra.mxu0 0.0
        %805 = vmatprep.subr.mxu0 0.0
        %806 = vmatpush2.msra.mxu0 0.0
        %807 = vmatprep.subr.mxu0 0.0
        %808 = vmatpush2.msra.mxu0 0.0
        %809 = vmatprep.mubr.f32.mxu0 0.0
        %810 = vmatmul.mubr.f32.gmra.mxu0 %v654
        %v811 = vpop.f32.mrf.mxu0
        %v812 = vadd.f32 %v743, %v811
        %v813 = vpop.f32.mrf.mxu0
        %814 = vmatprep.mubr.f32.mxu0 0.0
        %815 = vmatmul.mubr.f32.gmra.mxu0 %v657
        %v816 = vpop.f32.mrf.mxu0
        %v817 = vadd.f32 %v743, %v816
        %v818 = vpop.f32.mrf.mxu0
        %819 = vdwg.mxu0
        %v820 = vld [vmem:[#allocation2] sm:$0xff]
        %v821 = vld [vmem:[#allocation2 + $0x8] sm:$0xff]
        %v822 = vld [vmem:[#allocation2 + $0x10] sm:$0xff]
        %v823 = vld [vmem:[#allocation2 + $0x18] sm:$0xff]
        %v824 = vld [vmem:[%s6] sm:$0x1]
        %v826 = vlaneseq
        %v827 = vshrl.u32 %v826, 7
        %v828 = vsub.s32 0, %v827
        %v829 = vrot.slane %v824, %v828
        %831 = vmatprep.subr.mxu0 0.0
        %832 = vmatpush1.msra.mxu0 0.0
        %833 = vmatprep.subr.mxu0 0.0
        %834 = vmatpush1.msra.mxu0 0.0
        %835 = vmatprep.subr.mxu0 0.0
        %836 = vmatpush1.msra.mxu0 0.0
        %837 = vmatprep.subr.mxu0 0.0
        %838 = vmatpush1.msra.mxu0 0.0
        %839 = vmatprep.subr.mxu0 0.0
        %840 = vmatpush1.msra.mxu0 0.0
        %841 = vmatprep.subr.mxu0 0.0
        %842 = vmatpush1.msra.mxu0 0.0
        %843 = vmatprep.subr.mxu0 0.0
        %844 = vmatpush1.msra.mxu0 0.0
        %845 = vmatprep.subr.mxu0 0.0
        %846 = vmatpush1.msra.mxu0 0.0
        %847 = vmatprep.subr.mxu0 0.0
        %848 = vmatpush1.msra.mxu0 0.0
        %849 = vmatprep.subr.mxu0 0.0
        %850 = vmatpush1.msra.mxu0 0.0
        %851 = vmatprep.subr.mxu0 0.0
        %852 = vmatpush1.msra.mxu0 0.0
        %853 = vmatprep.subr.mxu0 0.0
        %854 = vmatpush1.msra.mxu0 0.0
        %855 = vmatprep.subr.mxu0 0.0
        %856 = vmatpush1.msra.mxu0 %v823
        %857 = vmatprep.subr.mxu0 0.0
        %858 = vmatpush1.msra.mxu0 %v822
        %859 = vmatprep.subr.mxu0 0.0
        %860 = vmatpush1.msra.mxu0 %v821
        %861 = vmatprep.subr.mxu0 0.0
        %862 = vmatpush1.msra.mxu0 %v820
        %863 = vmatprep.subr.mxu0 0.0
        %864 = vmatpush2.msra.mxu0 0.0
        %865 = vmatprep.subr.mxu0 0.0
        %866 = vmatpush2.msra.mxu0 0.0
        %867 = vmatprep.subr.mxu0 0.0
        %868 = vmatpush2.msra.mxu0 0.0
        %869 = vmatprep.subr.mxu0 0.0
        %870 = vmatpush2.msra.mxu0 0.0
        %871 = vmatprep.subr.mxu0 0.0
        %872 = vmatpush2.msra.mxu0 0.0
        %873 = vmatprep.subr.mxu0 0.0
        %874 = vmatpush2.msra.mxu0 0.0
        %875 = vmatprep.subr.mxu0 0.0
        %876 = vmatpush2.msra.mxu0 0.0
        %877 = vmatprep.subr.mxu0 0.0
        %878 = vmatpush2.msra.mxu0 0.0
        %879 = vmatprep.subr.mxu0 0.0
        %880 = vmatpush2.msra.mxu0 0.0
        %881 = vmatprep.subr.mxu0 0.0
        %882 = vmatpush2.msra.mxu0 0.0
        %883 = vmatprep.subr.mxu0 0.0
        %884 = vmatpush2.msra.mxu0 0.0
        %885 = vmatprep.subr.mxu0 0.0
        %886 = vmatpush2.msra.mxu0 0.0
        %887 = vmatprep.subr.mxu0 0.0
        %888 = vmatpush2.msra.mxu0 0.0
        %889 = vmatprep.subr.mxu0 0.0
        %890 = vmatpush2.msra.mxu0 0.0
        %891 = vmatprep.subr.mxu0 0.0
        %892 = vmatpush2.msra.mxu0 0.0
        %893 = vmatprep.subr.mxu0 0.0
        %894 = vmatpush2.msra.mxu0 0.0
        %895 = vmatprep.mubr.f32.mxu0 0.0
        %896 = vmatmul.mubr.f32.gmra.mxu0 %v654
        %v897 = vpop.f32.mrf.mxu0
        %v898 = vadd.f32 %v829, %v897
        %v899 = vpop.f32.mrf.mxu0
        %900 = vmatprep.mubr.f32.mxu0 0.0
        %901 = vmatmul.mubr.f32.gmra.mxu0 %v657
        %v902 = vpop.f32.mrf.mxu0
        %v903 = vadd.f32 %v829, %v902
        %v904 = vpop.f32.mrf.mxu0
        %905 = vdwg.mxu0
        %v906 = vmul.f32 %v726, 0.35355338
        %v907 = vmul.f32 %v731, 0.35355338
        %910 = vrot.lane.b32.xlu0 %v906, 120
        %v911 = vpop.permute.xlu0 %910
        %912 = vrot.lane.b32.xlu0 %v907, 120
        %v913 = vpop.permute.xlu0 %912
        %914 = vrot.lane.b32.xlu0 %v906, 112
        %v915 = vpop.permute.xlu0 %914
        %916 = vrot.lane.b32.xlu0 %v907, 112
        %v917 = vpop.permute.xlu0 %916
        %918 = vrot.lane.b32.xlu0 %v906, 104
        %v919 = vpop.permute.xlu0 %918
        %920 = vrot.lane.b32.xlu0 %v907, 104
        %v921 = vpop.permute.xlu0 %920
        %924 = vrot.lane.b32.xlu0 %v812, 120
        %v925 = vpop.permute.xlu0 %924
        %926 = vrot.lane.b32.xlu0 %v817, 120
        %v927 = vpop.permute.xlu0 %926
        %928 = vrot.lane.b32.xlu0 %v812, 112
        %v929 = vpop.permute.xlu0 %928
        %930 = vrot.lane.b32.xlu0 %v817, 112
        %v931 = vpop.permute.xlu0 %930
        %932 = vrot.lane.b32.xlu0 %v812, 104
        %v933 = vpop.permute.xlu0 %932
        %934 = vrot.lane.b32.xlu0 %v817, 104
        %v935 = vpop.permute.xlu0 %934
        %938 = vrot.lane.b32.xlu0 %v898, 120
        %v939 = vpop.permute.xlu0 %938
        %940 = vrot.lane.b32.xlu0 %v903, 120
        %v941 = vpop.permute.xlu0 %940
        %944 = vrot.lane.b32.xlu0 %v898, 112
        %v945 = vpop.permute.xlu0 %944
        %946 = vrot.lane.b32.xlu0 %v903, 112
        %v947 = vpop.permute.xlu0 %946
        %950 = vrot.lane.b32.xlu0 %v898, 104
        %v951 = vpop.permute.xlu0 %950
        %952 = vrot.lane.b32.xlu0 %v903, 104
        %v953 = vpop.permute.xlu0 %952
        %vm956 = vcmask 64512
        %v957 = vsel %vm956, %v906, 0
        %v959 = vsel %vm956, %v812, 0
        %961 = vmatprep.subr.mxu0 0.0
        %962 = vmatpush1.xpose.msra.mxu0 0.0
        %963 = vmatprep.subr.mxu0 0.0
        %964 = vmatpush1.xpose.msra.mxu0 0.0
        %965 = vmatprep.subr.mxu0 0.0
        %966 = vmatpush1.xpose.msra.mxu0 0.0
        %967 = vmatprep.subr.mxu0 0.0
        %968 = vmatpush1.xpose.msra.mxu0 0.0
        %969 = vmatprep.subr.mxu0 0.0
        %970 = vmatpush1.xpose.msra.mxu0 0.0
        %971 = vmatprep.subr.mxu0 0.0
        %972 = vmatpush1.xpose.msra.mxu0 0.0
        %973 = vmatprep.subr.mxu0 0.0
        %974 = vmatpush1.xpose.msra.mxu0 0.0
        %975 = vmatprep.subr.mxu0 0.0
        %976 = vmatpush1.xpose.msra.mxu0 0.0
        %977 = vmatprep.subr.mxu0 0.0
        %978 = vmatpush1.xpose.msra.mxu0 0.0
        %979 = vmatprep.subr.mxu0 0.0
        %980 = vmatpush1.xpose.msra.mxu0 0.0
        %981 = vmatprep.subr.mxu0 0.0
        %982 = vmatpush1.xpose.msra.mxu0 0.0
        %983 = vmatprep.subr.mxu0 0.0
        %984 = vmatpush1.xpose.msra.mxu0 0.0
        %985 = vmatprep.subr.mxu0 0.0
        %986 = vmatpush1.xpose.msra.mxu0 0.0
        %987 = vmatprep.subr.mxu0 0.0
        %988 = vmatpush1.xpose.msra.mxu0 0.0
        %989 = vmatprep.subr.mxu0 0.0
        %990 = vmatpush1.xpose.msra.mxu0 0.0
        %991 = vmatprep.subr.mxu0 0.0
        %992 = vmatpush1.xpose.msra.mxu0 %v959
        %993 = vmatprep.subr.mxu0 0.0
        %994 = vmatpush2.xpose.msra.mxu0 0.0
        %995 = vmatprep.subr.mxu0 0.0
        %996 = vmatpush2.xpose.msra.mxu0 0.0
        %997 = vmatprep.subr.mxu0 0.0
        %998 = vmatpush2.xpose.msra.mxu0 0.0
        %999 = vmatprep.subr.mxu0 0.0
        %1000 = vmatpush2.xpose.msra.mxu0 0.0
        %1001 = vmatprep.subr.mxu0 0.0
        %1002 = vmatpush2.xpose.msra.mxu0 0.0
        %1003 = vmatprep.subr.mxu0 0.0
        %1004 = vmatpush2.xpose.msra.mxu0 0.0
        %1005 = vmatprep.subr.mxu0 0.0
        %1006 = vmatpush2.xpose.msra.mxu0 0.0
        %1007 = vmatprep.subr.mxu0 0.0
        %1008 = vmatpush2.xpose.msra.mxu0 0.0
        %1009 = vmatprep.subr.mxu0 0.0
        %1010 = vmatpush2.xpose.msra.mxu0 0.0
        %1011 = vmatprep.subr.mxu0 0.0
        %1012 = vmatpush2.xpose.msra.mxu0 0.0
        %1013 = vmatprep.subr.mxu0 0.0
        %1014 = vmatpush2.xpose.msra.mxu0 0.0
        %1015 = vmatprep.subr.mxu0 0.0
        %1016 = vmatpush2.xpose.msra.mxu0 0.0
        %1017 = vmatprep.subr.mxu0 0.0
        %1018 = vmatpush2.xpose.msra.mxu0 0.0
        %1019 = vmatprep.subr.mxu0 0.0
        %1020 = vmatpush2.xpose.msra.mxu0 0.0
        %1021 = vmatprep.subr.mxu0 0.0
        %1022 = vmatpush2.xpose.msra.mxu0 0.0
        %1023 = vmatprep.subr.mxu0 0.0
        %1024 = vmatpush2.xpose.msra.mxu0 0.0
        %1025 = vmatprep.mubr.f32.mxu0 0.0
        %1026 = vmatmul.mubr.f32.gmra.mxu0 %v957
        %v1027 = vpop.f32.mrf.mxu0
        %v1028 = vadd.f32 0.0, %v1027
        %v1029 = vpop.f32.mrf.mxu0
        %1030 = vdwg.mxu0
        %v1031 = vsel %vm956, %v907, 0
        %v1033 = vsel %vm956, %v817, 0
        %1035 = vmatprep.subr.mxu0 0.0
        %1036 = vmatpush1.xpose.msra.mxu0 0.0
        %1037 = vmatprep.subr.mxu0 0.0
        %1038 = vmatpush1.xpose.msra.mxu0 0.0
        %1039 = vmatprep.subr.mxu0 0.0
        %1040 = vmatpush1.xpose.msra.mxu0 0.0
        %1041 = vmatprep.subr.mxu0 0.0
        %1042 = vmatpush1.xpose.msra.mxu0 0.0
        %1043 = vmatprep.subr.mxu0 0.0
        %1044 = vmatpush1.xpose.msra.mxu0 0.0
        %1045 = vmatprep.subr.mxu0 0.0
        %1046 = vmatpush1.xpose.msra.mxu0 0.0
        %1047 = vmatprep.subr.mxu0 0.0
        %1048 = vmatpush1.xpose.msra.mxu0 0.0
        %1049 = vmatprep.subr.mxu0 0.0
        %1050 = vmatpush1.xpose.msra.mxu0 0.0
        %1051 = vmatprep.subr.mxu0 0.0
        %1052 = vmatpush1.xpose.msra.mxu0 0.0
        %1053 = vmatprep.subr.mxu0 0.0
        %1054 = vmatpush1.xpose.msra.mxu0 0.0
        %1055 = vmatprep.subr.mxu0 0.0
        %1056 = vmatpush1.xpose.msra.mxu0 0.0
        %1057 = vmatprep.subr.mxu0 0.0
        %1058 = vmatpush1.xpose.msra.mxu0 0.0
        %1059 = vmatprep.subr.mxu0 0.0
        %1060 = vmatpush1.xpose.msra.mxu0 0.0
        %1061 = vmatprep.subr.mxu0 0.0
        %1062 = vmatpush1.xpose.msra.mxu0 0.0
        %1063 = vmatprep.subr.mxu0 0.0
        %1064 = vmatpush1.xpose.msra.mxu0 0.0
        %1065 = vmatprep.subr.mxu0 0.0
        %1066 = vmatpush1.xpose.msra.mxu0 %v1033
        %1067 = vmatprep.subr.mxu0 0.0
        %1068 = vmatpush2.xpose.msra.mxu0 0.0
        %1069 = vmatprep.subr.mxu0 0.0
        %1070 = vmatpush2.xpose.msra.mxu0 0.0
        %1071 = vmatprep.subr.mxu0 0.0
        %1072 = vmatpush2.xpose.msra.mxu0 0.0
        %1073 = vmatprep.subr.mxu0 0.0
        %1074 = vmatpush2.xpose.msra.mxu0 0.0
        %1075 = vmatprep.subr.mxu0 0.0
        %1076 = vmatpush2.xpose.msra.mxu0 0.0
        %1077 = vmatprep.subr.mxu0 0.0
        %1078 = vmatpush2.xpose.msra.mxu0 0.0
        %1079 = vmatprep.subr.mxu0 0.0
        %1080 = vmatpush2.xpose.msra.mxu0 0.0
        %1081 = vmatprep.subr.mxu0 0.0
        %1082 = vmatpush2.xpose.msra.mxu0 0.0
        %1083 = vmatprep.subr.mxu0 0.0
        %1084 = vmatpush2.xpose.msra.mxu0 0.0
        %1085 = vmatprep.subr.mxu0 0.0
        %1086 = vmatpush2.xpose.msra.mxu0 0.0
        %1087 = vmatprep.subr.mxu0 0.0
        %1088 = vmatpush2.xpose.msra.mxu0 0.0
        %1089 = vmatprep.subr.mxu0 0.0
        %1090 = vmatpush2.xpose.msra.mxu0 0.0
        %1091 = vmatprep.subr.mxu0 0.0
        %1092 = vmatpush2.xpose.msra.mxu0 0.0
        %1093 = vmatprep.subr.mxu0 0.0
        %1094 = vmatpush2.xpose.msra.mxu0 0.0
        %1095 = vmatprep.subr.mxu0 0.0
        %1096 = vmatpush2.xpose.msra.mxu0 0.0
        %1097 = vmatprep.subr.mxu0 0.0
        %1098 = vmatpush2.xpose.msra.mxu0 0.0
        %1099 = vmatprep.mubr.f32.mxu0 0.0
        %1100 = vmatmul.mubr.f32.gmra.mxu0 %v1031
        %v1101 = vpop.f32.mrf.mxu0
        %v1102 = vadd.f32 0.0, %v1101
        %v1103 = vpop.f32.mrf.mxu0
        %1104 = vdwg.mxu0
        %v1105 = vsel %vm956, %v911, 0
        %v1107 = vsel %vm956, %v925, 0
        %1109 = vmatprep.subr.mxu0 0.0
        %1110 = vmatpush1.xpose.msra.mxu0 0.0
        %1111 = vmatprep.subr.mxu0 0.0
        %1112 = vmatpush1.xpose.msra.mxu0 0.0
        %1113 = vmatprep.subr.mxu0 0.0
        %1114 = vmatpush1.xpose.msra.mxu0 0.0
        %1115 = vmatprep.subr.mxu0 0.0
        %1116 = vmatpush1.xpose.msra.mxu0 0.0
        %1117 = vmatprep.subr.mxu0 0.0
        %1118 = vmatpush1.xpose.msra.mxu0 0.0
        %1119 = vmatprep.subr.mxu0 0.0
        %1120 = vmatpush1.xpose.msra.mxu0 0.0
        %1121 = vmatprep.subr.mxu0 0.0
        %1122 = vmatpush1.xpose.msra.mxu0 0.0
        %1123 = vmatprep.subr.mxu0 0.0
        %1124 = vmatpush1.xpose.msra.mxu0 0.0
        %1125 = vmatprep.subr.mxu0 0.0
        %1126 = vmatpush1.xpose.msra.mxu0 0.0
        %1127 = vmatprep.subr.mxu0 0.0
        %1128 = vmatpush1.xpose.msra.mxu0 0.0
        %1129 = vmatprep.subr.mxu0 0.0
        %1130 = vmatpush1.xpose.msra.mxu0 0.0
        %1131 = vmatprep.subr.mxu0 0.0
        %1132 = vmatpush1.xpose.msra.mxu0 0.0
        %1133 = vmatprep.subr.mxu0 0.0
        %1134 = vmatpush1.xpose.msra.mxu0 0.0
        %1135 = vmatprep.subr.mxu0 0.0
        %1136 = vmatpush1.xpose.msra.mxu0 0.0
        %1137 = vmatprep.subr.mxu0 0.0
        %1138 = vmatpush1.xpose.msra.mxu0 0.0
        %1139 = vmatprep.subr.mxu0 0.0
        %1140 = vmatpush1.xpose.msra.mxu0 %v1107
        %1141 = vmatprep.subr.mxu0 0.0
        %1142 = vmatpush2.xpose.msra.mxu0 0.0
        %1143 = vmatprep.subr.mxu0 0.0
        %1144 = vmatpush2.xpose.msra.mxu0 0.0
        %1145 = vmatprep.subr.mxu0 0.0
        %1146 = vmatpush2.xpose.msra.mxu0 0.0
        %1147 = vmatprep.subr.mxu0 0.0
        %1148 = vmatpush2.xpose.msra.mxu0 0.0
        %1149 = vmatprep.subr.mxu0 0.0
        %1150 = vmatpush2.xpose.msra.mxu0 0.0
        %1151 = vmatprep.subr.mxu0 0.0
        %1152 = vmatpush2.xpose.msra.mxu0 0.0
        %1153 = vmatprep.subr.mxu0 0.0
        %1154 = vmatpush2.xpose.msra.mxu0 0.0
        %1155 = vmatprep.subr.mxu0 0.0
        %1156 = vmatpush2.xpose.msra.mxu0 0.0
        %1157 = vmatprep.subr.mxu0 0.0
        %1158 = vmatpush2.xpose.msra.mxu0 0.0
        %1159 = vmatprep.subr.mxu0 0.0
        %1160 = vmatpush2.xpose.msra.mxu0 0.0
        %1161 = vmatprep.subr.mxu0 0.0
        %1162 = vmatpush2.xpose.msra.mxu0 0.0
        %1163 = vmatprep.subr.mxu0 0.0
        %1164 = vmatpush2.xpose.msra.mxu0 0.0
        %1165 = vmatprep.subr.mxu0 0.0
        %1166 = vmatpush2.xpose.msra.mxu0 0.0
        %1167 = vmatprep.subr.mxu0 0.0
        %1168 = vmatpush2.xpose.msra.mxu0 0.0
        %1169 = vmatprep.subr.mxu0 0.0
        %1170 = vmatpush2.xpose.msra.mxu0 0.0
        %1171 = vmatprep.subr.mxu0 0.0
        %1172 = vmatpush2.xpose.msra.mxu0 0.0
        %1173 = vmatprep.mubr.f32.mxu0 0.0
        %1174 = vmatmul.mubr.f32.gmra.mxu0 %v1105
        %v1175 = vpop.f32.mrf.mxu0
        %v1176 = vadd.f32 0.0, %v1175
        %v1177 = vpop.f32.mrf.mxu0
        %1178 = vdwg.mxu0
        %v1179 = vsel %vm956, %v913, 0
        %v1181 = vsel %vm956, %v927, 0
        %1183 = vmatprep.subr.mxu0 0.0
        %1184 = vmatpush1.xpose.msra.mxu0 0.0
        %1185 = vmatprep.subr.mxu0 0.0
        %1186 = vmatpush1.xpose.msra.mxu0 0.0
        %1187 = vmatprep.subr.mxu0 0.0
        %1188 = vmatpush1.xpose.msra.mxu0 0.0
        %1189 = vmatprep.subr.mxu0 0.0
        %1190 = vmatpush1.xpose.msra.mxu0 0.0
        %1191 = vmatprep.subr.mxu0 0.0
        %1192 = vmatpush1.xpose.msra.mxu0 0.0
        %1193 = vmatprep.subr.mxu0 0.0
        %1194 = vmatpush1.xpose.msra.mxu0 0.0
        %1195 = vmatprep.subr.mxu0 0.0
        %1196 = vmatpush1.xpose.msra.mxu0 0.0
        %1197 = vmatprep.subr.mxu0 0.0
        %1198 = vmatpush1.xpose.msra.mxu0 0.0
        %1199 = vmatprep.subr.mxu0 0.0
        %1200 = vmatpush1.xpose.msra.mxu0 0.0
        %1201 = vmatprep.subr.mxu0 0.0
        %1202 = vmatpush1.xpose.msra.mxu0 0.0
        %1203 = vmatprep.subr.mxu0 0.0
        %1204 = vmatpush1.xpose.msra.mxu0 0.0
        %1205 = vmatprep.subr.mxu0 0.0
        %1206 = vmatpush1.xpose.msra.mxu0 0.0
        %1207 = vmatprep.subr.mxu0 0.0
        %1208 = vmatpush1.xpose.msra.mxu0 0.0
        %1209 = vmatprep.subr.mxu0 0.0
        %1210 = vmatpush1.xpose.msra.mxu0 0.0
        %1211 = vmatprep.subr.mxu0 0.0
        %1212 = vmatpush1.xpose.msra.mxu0 0.0
        %1213 = vmatprep.subr.mxu0 0.0
        %1214 = vmatpush1.xpose.msra.mxu0 %v1181
        %1215 = vmatprep.subr.mxu0 0.0
        %1216 = vmatpush2.xpose.msra.mxu0 0.0
        %1217 = vmatprep.subr.mxu0 0.0
        %1218 = vmatpush2.xpose.msra.mxu0 0.0
        %1219 = vmatprep.subr.mxu0 0.0
        %1220 = vmatpush2.xpose.msra.mxu0 0.0
        %1221 = vmatprep.subr.mxu0 0.0
        %1222 = vmatpush2.xpose.msra.mxu0 0.0
        %1223 = vmatprep.subr.mxu0 0.0
        %1224 = vmatpush2.xpose.msra.mxu0 0.0
        %1225 = vmatprep.subr.mxu0 0.0
        %1226 = vmatpush2.xpose.msra.mxu0 0.0
        %1227 = vmatprep.subr.mxu0 0.0
        %1228 = vmatpush2.xpose.msra.mxu0 0.0
        %1229 = vmatprep.subr.mxu0 0.0
        %1230 = vmatpush2.xpose.msra.mxu0 0.0
        %1231 = vmatprep.subr.mxu0 0.0
        %1232 = vmatpush2.xpose.msra.mxu0 0.0
        %1233 = vmatprep.subr.mxu0 0.0
        %1234 = vmatpush2.xpose.msra.mxu0 0.0
        %1235 = vmatprep.subr.mxu0 0.0
        %1236 = vmatpush2.xpose.msra.mxu0 0.0
        %1237 = vmatprep.subr.mxu0 0.0
        %1238 = vmatpush2.xpose.msra.mxu0 0.0
        %1239 = vmatprep.subr.mxu0 0.0
        %1240 = vmatpush2.xpose.msra.mxu0 0.0
        %1241 = vmatprep.subr.mxu0 0.0
        %1242 = vmatpush2.xpose.msra.mxu0 0.0
        %1243 = vmatprep.subr.mxu0 0.0
        %1244 = vmatpush2.xpose.msra.mxu0 0.0
        %1245 = vmatprep.subr.mxu0 0.0
        %1246 = vmatpush2.xpose.msra.mxu0 0.0
        %1247 = vmatprep.mubr.f32.mxu0 0.0
        %1248 = vmatmul.mubr.f32.gmra.mxu0 %v1179
        %v1249 = vpop.f32.mrf.mxu0
        %v1250 = vadd.f32 0.0, %v1249
        %v1251 = vpop.f32.mrf.mxu0
        %1252 = vdwg.mxu0
        %v1253 = vsel %vm956, %v915, 0
        %v1255 = vsel %vm956, %v929, 0
        %1257 = vmatprep.subr.mxu0 0.0
        %1258 = vmatpush1.xpose.msra.mxu0 0.0
        %1259 = vmatprep.subr.mxu0 0.0
        %1260 = vmatpush1.xpose.msra.mxu0 0.0
        %1261 = vmatprep.subr.mxu0 0.0
        %1262 = vmatpush1.xpose.msra.mxu0 0.0
        %1263 = vmatprep.subr.mxu0 0.0
        %1264 = vmatpush1.xpose.msra.mxu0 0.0
        %1265 = vmatprep.subr.mxu0 0.0
        %1266 = vmatpush1.xpose.msra.mxu0 0.0
        %1267 = vmatprep.subr.mxu0 0.0
        %1268 = vmatpush1.xpose.msra.mxu0 0.0
        %1269 = vmatprep.subr.mxu0 0.0
        %1270 = vmatpush1.xpose.msra.mxu0 0.0
        %1271 = vmatprep.subr.mxu0 0.0
        %1272 = vmatpush1.xpose.msra.mxu0 0.0
        %1273 = vmatprep.subr.mxu0 0.0
        %1274 = vmatpush1.xpose.msra.mxu0 0.0
        %1275 = vmatprep.subr.mxu0 0.0
        %1276 = vmatpush1.xpose.msra.mxu0 0.0
        %1277 = vmatprep.subr.mxu0 0.0
        %1278 = vmatpush1.xpose.msra.mxu0 0.0
        %1279 = vmatprep.subr.mxu0 0.0
        %1280 = vmatpush1.xpose.msra.mxu0 0.0
        %1281 = vmatprep.subr.mxu0 0.0
        %1282 = vmatpush1.xpose.msra.mxu0 0.0
        %1283 = vmatprep.subr.mxu0 0.0
        %1284 = vmatpush1.xpose.msra.mxu0 0.0
        %1285 = vmatprep.subr.mxu0 0.0
        %1286 = vmatpush1.xpose.msra.mxu0 0.0
        %1287 = vmatprep.subr.mxu0 0.0
        %1288 = vmatpush1.xpose.msra.mxu0 %v1255
        %1289 = vmatprep.subr.mxu0 0.0
        %1290 = vmatpush2.xpose.msra.mxu0 0.0
        %1291 = vmatprep.subr.mxu0 0.0
        %1292 = vmatpush2.xpose.msra.mxu0 0.0
        %1293 = vmatprep.subr.mxu0 0.0
        %1294 = vmatpush2.xpose.msra.mxu0 0.0
        %1295 = vmatprep.subr.mxu0 0.0
        %1296 = vmatpush2.xpose.msra.mxu0 0.0
        %1297 = vmatprep.subr.mxu0 0.0
        %1298 = vmatpush2.xpose.msra.mxu0 0.0
        %1299 = vmatprep.subr.mxu0 0.0
        %1300 = vmatpush2.xpose.msra.mxu0 0.0
        %1301 = vmatprep.subr.mxu0 0.0
        %1302 = vmatpush2.xpose.msra.mxu0 0.0
        %1303 = vmatprep.subr.mxu0 0.0
        %1304 = vmatpush2.xpose.msra.mxu0 0.0
        %1305 = vmatprep.subr.mxu0 0.0
        %1306 = vmatpush2.xpose.msra.mxu0 0.0
        %1307 = vmatprep.subr.mxu0 0.0
        %1308 = vmatpush2.xpose.msra.mxu0 0.0
        %1309 = vmatprep.subr.mxu0 0.0
        %1310 = vmatpush2.xpose.msra.mxu0 0.0
        %1311 = vmatprep.subr.mxu0 0.0
        %1312 = vmatpush2.xpose.msra.mxu0 0.0
        %1313 = vmatprep.subr.mxu0 0.0
        %1314 = vmatpush2.xpose.msra.mxu0 0.0
        %1315 = vmatprep.subr.mxu0 0.0
        %1316 = vmatpush2.xpose.msra.mxu0 0.0
        %1317 = vmatprep.subr.mxu0 0.0
        %1318 = vmatpush2.xpose.msra.mxu0 0.0
        %1319 = vmatprep.subr.mxu0 0.0
        %1320 = vmatpush2.xpose.msra.mxu0 0.0
        %1321 = vmatprep.mubr.f32.mxu0 0.0
        %1322 = vmatmul.mubr.f32.gmra.mxu0 %v1253
        %v1323 = vpop.f32.mrf.mxu0
        %v1324 = vadd.f32 0.0, %v1323
        %v1325 = vpop.f32.mrf.mxu0
        %1326 = vdwg.mxu0
        %v1327 = vsel %vm956, %v917, 0
        %v1329 = vsel %vm956, %v931, 0
        %1331 = vmatprep.subr.mxu0 0.0
        %1332 = vmatpush1.xpose.msra.mxu0 0.0
        %1333 = vmatprep.subr.mxu0 0.0
        %1334 = vmatpush1.xpose.msra.mxu0 0.0
        %1335 = vmatprep.subr.mxu0 0.0
        %1336 = vmatpush1.xpose.msra.mxu0 0.0
        %1337 = vmatprep.subr.mxu0 0.0
        %1338 = vmatpush1.xpose.msra.mxu0 0.0
        %1339 = vmatprep.subr.mxu0 0.0
        %1340 = vmatpush1.xpose.msra.mxu0 0.0
        %1341 = vmatprep.subr.mxu0 0.0
        %1342 = vmatpush1.xpose.msra.mxu0 0.0
        %1343 = vmatprep.subr.mxu0 0.0
        %1344 = vmatpush1.xpose.msra.mxu0 0.0
        %1345 = vmatprep.subr.mxu0 0.0
        %1346 = vmatpush1.xpose.msra.mxu0 0.0
        %1347 = vmatprep.subr.mxu0 0.0
        %1348 = vmatpush1.xpose.msra.mxu0 0.0
        %1349 = vmatprep.subr.mxu0 0.0
        %1350 = vmatpush1.xpose.msra.mxu0 0.0
        %1351 = vmatprep.subr.mxu0 0.0
        %1352 = vmatpush1.xpose.msra.mxu0 0.0
        %1353 = vmatprep.subr.mxu0 0.0
        %1354 = vmatpush1.xpose.msra.mxu0 0.0
        %1355 = vmatprep.subr.mxu0 0.0
        %1356 = vmatpush1.xpose.msra.mxu0 0.0
        %1357 = vmatprep.subr.mxu0 0.0
        %1358 = vmatpush1.xpose.msra.mxu0 0.0
        %1359 = vmatprep.subr.mxu0 0.0
        %1360 = vmatpush1.xpose.msra.mxu0 0.0
        %1361 = vmatprep.subr.mxu0 0.0
        %1362 = vmatpush1.xpose.msra.mxu0 %v1329
        %1363 = vmatprep.subr.mxu0 0.0
        %1364 = vmatpush2.xpose.msra.mxu0 0.0
        %1365 = vmatprep.subr.mxu0 0.0
        %1366 = vmatpush2.xpose.msra.mxu0 0.0
        %1367 = vmatprep.subr.mxu0 0.0
        %1368 = vmatpush2.xpose.msra.mxu0 0.0
        %1369 = vmatprep.subr.mxu0 0.0
        %1370 = vmatpush2.xpose.msra.mxu0 0.0
        %1371 = vmatprep.subr.mxu0 0.0
        %1372 = vmatpush2.xpose.msra.mxu0 0.0
        %1373 = vmatprep.subr.mxu0 0.0
        %1374 = vmatpush2.xpose.msra.mxu0 0.0
        %1375 = vmatprep.subr.mxu0 0.0
        %1376 = vmatpush2.xpose.msra.mxu0 0.0
        %1377 = vmatprep.subr.mxu0 0.0
        %1378 = vmatpush2.xpose.msra.mxu0 0.0
        %1379 = vmatprep.subr.mxu0 0.0
        %1380 = vmatpush2.xpose.msra.mxu0 0.0
        %1381 = vmatprep.subr.mxu0 0.0
        %1382 = vmatpush2.xpose.msra.mxu0 0.0
        %1383 = vmatprep.subr.mxu0 0.0
        %1384 = vmatpush2.xpose.msra.mxu0 0.0
        %1385 = vmatprep.subr.mxu0 0.0
        %1386 = vmatpush2.xpose.msra.mxu0 0.0
        %1387 = vmatprep.subr.mxu0 0.0
        %1388 = vmatpush2.xpose.msra.mxu0 0.0
        %1389 = vmatprep.subr.mxu0 0.0
        %1390 = vmatpush2.xpose.msra.mxu0 0.0
        %1391 = vmatprep.subr.mxu0 0.0
        %1392 = vmatpush2.xpose.msra.mxu0 0.0
        %1393 = vmatprep.subr.mxu0 0.0
        %1394 = vmatpush2.xpose.msra.mxu0 0.0
        %1395 = vmatprep.mubr.f32.mxu0 0.0
        %1396 = vmatmul.mubr.f32.gmra.mxu0 %v1327
        %v1397 = vpop.f32.mrf.mxu0
        %v1398 = vadd.f32 0.0, %v1397
        %v1399 = vpop.f32.mrf.mxu0
        %1400 = vdwg.mxu0
        %v1401 = vsel %vm956, %v919, 0
        %v1403 = vsel %vm956, %v933, 0
        %1405 = vmatprep.subr.mxu0 0.0
        %1406 = vmatpush1.xpose.msra.mxu0 0.0
        %1407 = vmatprep.subr.mxu0 0.0
        %1408 = vmatpush1.xpose.msra.mxu0 0.0
        %1409 = vmatprep.subr.mxu0 0.0
        %1410 = vmatpush1.xpose.msra.mxu0 0.0
        %1411 = vmatprep.subr.mxu0 0.0
        %1412 = vmatpush1.xpose.msra.mxu0 0.0
        %1413 = vmatprep.subr.mxu0 0.0
        %1414 = vmatpush1.xpose.msra.mxu0 0.0
        %1415 = vmatprep.subr.mxu0 0.0
        %1416 = vmatpush1.xpose.msra.mxu0 0.0
        %1417 = vmatprep.subr.mxu0 0.0
        %1418 = vmatpush1.xpose.msra.mxu0 0.0
        %1419 = vmatprep.subr.mxu0 0.0
        %1420 = vmatpush1.xpose.msra.mxu0 0.0
        %1421 = vmatprep.subr.mxu0 0.0
        %1422 = vmatpush1.xpose.msra.mxu0 0.0
        %1423 = vmatprep.subr.mxu0 0.0
        %1424 = vmatpush1.xpose.msra.mxu0 0.0
        %1425 = vmatprep.subr.mxu0 0.0
        %1426 = vmatpush1.xpose.msra.mxu0 0.0
        %1427 = vmatprep.subr.mxu0 0.0
        %1428 = vmatpush1.xpose.msra.mxu0 0.0
        %1429 = vmatprep.subr.mxu0 0.0
        %1430 = vmatpush1.xpose.msra.mxu0 0.0
        %1431 = vmatprep.subr.mxu0 0.0
        %1432 = vmatpush1.xpose.msra.mxu0 0.0
        %1433 = vmatprep.subr.mxu0 0.0
        %1434 = vmatpush1.xpose.msra.mxu0 0.0
        %1435 = vmatprep.subr.mxu0 0.0
        %1436 = vmatpush1.xpose.msra.mxu0 %v1403
        %1437 = vmatprep.subr.mxu0 0.0
        %1438 = vmatpush2.xpose.msra.mxu0 0.0
        %1439 = vmatprep.subr.mxu0 0.0
        %1440 = vmatpush2.xpose.msra.mxu0 0.0
        %1441 = vmatprep.subr.mxu0 0.0
        %1442 = vmatpush2.xpose.msra.mxu0 0.0
        %1443 = vmatprep.subr.mxu0 0.0
        %1444 = vmatpush2.xpose.msra.mxu0 0.0
        %1445 = vmatprep.subr.mxu0 0.0
        %1446 = vmatpush2.xpose.msra.mxu0 0.0
        %1447 = vmatprep.subr.mxu0 0.0
        %1448 = vmatpush2.xpose.msra.mxu0 0.0
        %1449 = vmatprep.subr.mxu0 0.0
        %1450 = vmatpush2.xpose.msra.mxu0 0.0
        %1451 = vmatprep.subr.mxu0 0.0
        %1452 = vmatpush2.xpose.msra.mxu0 0.0
        %1453 = vmatprep.subr.mxu0 0.0
        %1454 = vmatpush2.xpose.msra.mxu0 0.0
        %1455 = vmatprep.subr.mxu0 0.0
        %1456 = vmatpush2.xpose.msra.mxu0 0.0
        %1457 = vmatprep.subr.mxu0 0.0
        %1458 = vmatpush2.xpose.msra.mxu0 0.0
        %1459 = vmatprep.subr.mxu0 0.0
        %1460 = vmatpush2.xpose.msra.mxu0 0.0
        %1461 = vmatprep.subr.mxu0 0.0
        %1462 = vmatpush2.xpose.msra.mxu0 0.0
        %1463 = vmatprep.subr.mxu0 0.0
        %1464 = vmatpush2.xpose.msra.mxu0 0.0
        %1465 = vmatprep.subr.mxu0 0.0
        %1466 = vmatpush2.xpose.msra.mxu0 0.0
        %1467 = vmatprep.subr.mxu0 0.0
        %1468 = vmatpush2.xpose.msra.mxu0 0.0
        %1469 = vmatprep.mubr.f32.mxu0 0.0
        %1470 = vmatmul.mubr.f32.gmra.mxu0 %v1401
        %v1471 = vpop.f32.mrf.mxu0
        %v1472 = vadd.f32 0.0, %v1471
        %v1473 = vpop.f32.mrf.mxu0
        %1474 = vdwg.mxu0
        %v1475 = vsel %vm956, %v921, 0
        %v1477 = vsel %vm956, %v935, 0
        %1479 = vmatprep.subr.mxu0 0.0
        %1480 = vmatpush1.xpose.msra.mxu0 0.0
        %1481 = vmatprep.subr.mxu0 0.0
        %1482 = vmatpush1.xpose.msra.mxu0 0.0
        %1483 = vmatprep.subr.mxu0 0.0
        %1484 = vmatpush1.xpose.msra.mxu0 0.0
        %1485 = vmatprep.subr.mxu0 0.0
        %1486 = vmatpush1.xpose.msra.mxu0 0.0
        %1487 = vmatprep.subr.mxu0 0.0
        %1488 = vmatpush1.xpose.msra.mxu0 0.0
        %1489 = vmatprep.subr.mxu0 0.0
        %1490 = vmatpush1.xpose.msra.mxu0 0.0
        %1491 = vmatprep.subr.mxu0 0.0
        %1492 = vmatpush1.xpose.msra.mxu0 0.0
        %1493 = vmatprep.subr.mxu0 0.0
        %1494 = vmatpush1.xpose.msra.mxu0 0.0
        %1495 = vmatprep.subr.mxu0 0.0
        %1496 = vmatpush1.xpose.msra.mxu0 0.0
        %1497 = vmatprep.subr.mxu0 0.0
        %1498 = vmatpush1.xpose.msra.mxu0 0.0
        %1499 = vmatprep.subr.mxu0 0.0
        %1500 = vmatpush1.xpose.msra.mxu0 0.0
        %1501 = vmatprep.subr.mxu0 0.0
        %1502 = vmatpush1.xpose.msra.mxu0 0.0
        %1503 = vmatprep.subr.mxu0 0.0
        %1504 = vmatpush1.xpose.msra.mxu0 0.0
        %1505 = vmatprep.subr.mxu0 0.0
        %1506 = vmatpush1.xpose.msra.mxu0 0.0
        %1507 = vmatprep.subr.mxu0 0.0
        %1508 = vmatpush1.xpose.msra.mxu0 0.0
        %1509 = vmatprep.subr.mxu0 0.0
        %1510 = vmatpush1.xpose.msra.mxu0 %v1477
        %1511 = vmatprep.subr.mxu0 0.0
        %1512 = vmatpush2.xpose.msra.mxu0 0.0
        %1513 = vmatprep.subr.mxu0 0.0
        %1514 = vmatpush2.xpose.msra.mxu0 0.0
        %1515 = vmatprep.subr.mxu0 0.0
        %1516 = vmatpush2.xpose.msra.mxu0 0.0
        %1517 = vmatprep.subr.mxu0 0.0
        %1518 = vmatpush2.xpose.msra.mxu0 0.0
        %1519 = vmatprep.subr.mxu0 0.0
        %1520 = vmatpush2.xpose.msra.mxu0 0.0
        %1521 = vmatprep.subr.mxu0 0.0
        %1522 = vmatpush2.xpose.msra.mxu0 0.0
        %1523 = vmatprep.subr.mxu0 0.0
        %1524 = vmatpush2.xpose.msra.mxu0 0.0
        %1525 = vmatprep.subr.mxu0 0.0
        %1526 = vmatpush2.xpose.msra.mxu0 0.0
        %1527 = vmatprep.subr.mxu0 0.0
        %1528 = vmatpush2.xpose.msra.mxu0 0.0
        %1529 = vmatprep.subr.mxu0 0.0
        %1530 = vmatpush2.xpose.msra.mxu0 0.0
        %1531 = vmatprep.subr.mxu0 0.0
        %1532 = vmatpush2.xpose.msra.mxu0 0.0
        %1533 = vmatprep.subr.mxu0 0.0
        %1534 = vmatpush2.xpose.msra.mxu0 0.0
        %1535 = vmatprep.subr.mxu0 0.0
        %1536 = vmatpush2.xpose.msra.mxu0 0.0
        %1537 = vmatprep.subr.mxu0 0.0
        %1538 = vmatpush2.xpose.msra.mxu0 0.0
        %1539 = vmatprep.subr.mxu0 0.0
        %1540 = vmatpush2.xpose.msra.mxu0 0.0
        %1541 = vmatprep.subr.mxu0 0.0
        %1542 = vmatpush2.xpose.msra.mxu0 0.0
        %1543 = vmatprep.mubr.f32.mxu0 0.0
        %1544 = vmatmul.mubr.f32.gmra.mxu0 %v1475
        %v1545 = vpop.f32.mrf.mxu0
        %v1546 = vadd.f32 0.0, %v1545
        %v1547 = vpop.f32.mrf.mxu0
        %1548 = vdwg.mxu0
        %v1549 = vsel %vm956, %v1028, -inf
        %1550 = vmax.xlane.f32.xlu0 %v1549
        %v1551 = vpop.xlane.xlu0 %1550
        %v1552 = vsel %vm956, %v1102, -inf
        %1553 = vmax.xlane.f32.xlu0 %v1552
        %v1554 = vpop.xlane.xlu0 %1553
        %v1555 = vsel %vm956, %v1176, -inf
        %1556 = vmax.xlane.f32.xlu0 %v1555
        %v1557 = vpop.xlane.xlu0 %1556
        %v1558 = vsel %vm956, %v1250, -inf
        %1559 = vmax.xlane.f32.xlu0 %v1558
        %v1560 = vpop.xlane.xlu0 %1559
        %v1561 = vsel %vm956, %v1324, -inf
        %1562 = vmax.xlane.f32.xlu0 %v1561
        %v1563 = vpop.xlane.xlu0 %1562
        %v1564 = vsel %vm956, %v1398, -inf
        %1565 = vmax.xlane.f32.xlu0 %v1564
        %v1566 = vpop.xlane.xlu0 %1565
        %v1567 = vsel %vm956, %v1472, -inf
        %1568 = vmax.xlane.f32.xlu0 %v1567
        %v1569 = vpop.xlane.xlu0 %1568
        %v1570 = vsel %vm956, %v1546, -inf
        %1571 = vmax.xlane.f32.xlu0 %v1570
        %v1572 = vpop.xlane.xlu0 %1571
        %v1573 = vsub.f32 -inf, %v1551
        %v1574 = vsub.f32 -inf, %v1554
        %v1575 = vsub.f32 -inf, %v1557
        %v1576 = vsub.f32 -inf, %v1560
        %v1577 = vsub.f32 -inf, %v1563
        %v1578 = vsub.f32 -inf, %v1566
        %v1579 = vsub.f32 -inf, %v1569
        %v1580 = vsub.f32 -inf, %v1572
        %v1581 = vmul.f32 %v1573, 1.442695
        %v1582 = vpow.pop %v1581
        %v1583 = vmul.f32 %v1574, 1.442695
        %v1584 = vpow.pop %v1583
        %v1585 = vmul.f32 %v1575, 1.442695
        %v1586 = vpow.pop %v1585
        %v1587 = vmul.f32 %v1576, 1.442695
        %v1588 = vpow.pop %v1587
        %v1589 = vmul.f32 %v1577, 1.442695
        %v1590 = vpow.pop %v1589
        %v1591 = vmul.f32 %v1578, 1.442695
        %v1592 = vpow.pop %v1591
        %v1593 = vmul.f32 %v1579, 1.442695
        %v1594 = vpow.pop %v1593
        %v1595 = vmul.f32 %v1580, 1.442695
        %v1596 = vpow.pop %v1595
        %v1597 = vsub.f32 %v1028, %v1551
        %v1598 = vsub.f32 %v1102, %v1554
        %v1599 = vsub.f32 %v1176, %v1557
        %v1600 = vsub.f32 %v1250, %v1560
        %v1601 = vsub.f32 %v1324, %v1563
        %v1602 = vsub.f32 %v1398, %v1566
        %v1603 = vsub.f32 %v1472, %v1569
        %v1604 = vsub.f32 %v1546, %v1572
        %v1605 = vmul.f32 %v1597, 1.442695
        %v1606 = vpow.pop %v1605
        %v1607 = vmul.f32 %v1598, 1.442695
        %v1608 = vpow.pop %v1607
        %v1609 = vmul.f32 %v1599, 1.442695
        %v1610 = vpow.pop %v1609
        %v1611 = vmul.f32 %v1600, 1.442695
        %v1612 = vpow.pop %v1611
        %v1613 = vmul.f32 %v1601, 1.442695
        %v1614 = vpow.pop %v1613
        %v1615 = vmul.f32 %v1602, 1.442695
        %v1616 = vpow.pop %v1615
        %v1617 = vmul.f32 %v1603, 1.442695
        %v1618 = vpow.pop %v1617
        %v1619 = vmul.f32 %v1604, 1.442695
        %v1620 = vpow.pop %v1619
        %v1621 = vmul.f32 %v1582, 0.0
        %v1622 = vmul.f32 %v1584, 0.0
        %v1623 = vmul.f32 %v1586, 0.0
        %v1624 = vmul.f32 %v1588, 0.0
        %v1625 = vmul.f32 %v1590, 0.0
        %v1626 = vmul.f32 %v1592, 0.0
        %v1627 = vmul.f32 %v1594, 0.0
        %v1628 = vmul.f32 %v1596, 0.0
        %v1629 = vsel %vm956, %v1606, 0.0
        %1630 = vadd.xlane.f32.xlu0 %v1629
        %v1631 = vpop.xlane.xlu0 %1630
        %v1632 = vsel %vm956, %v1608, 0.0
        %1633 = vadd.xlane.f32.xlu0 %v1632
        %v1634 = vpop.xlane.xlu0 %1633
        %v1635 = vsel %vm956, %v1610, 0.0
        %1636 = vadd.xlane.f32.xlu0 %v1635
        %v1637 = vpop.xlane.xlu0 %1636
        %v1638 = vsel %vm956, %v1612, 0.0
        %1639 = vadd.xlane.f32.xlu0 %v1638
        %v1640 = vpop.xlane.xlu0 %1639
        %v1641 = vsel %vm956, %v1614, 0.0
        %1642 = vadd.xlane.f32.xlu0 %v1641
        %v1643 = vpop.xlane.xlu0 %1642
        %v1644 = vsel %vm956, %v1616, 0.0
        %1645 = vadd.xlane.f32.xlu0 %v1644
        %v1646 = vpop.xlane.xlu0 %1645
        %v1647 = vsel %vm956, %v1618, 0.0
        %1648 = vadd.xlane.f32.xlu0 %v1647
        %v1649 = vpop.xlane.xlu0 %1648
        %v1650 = vsel %vm956, %v1620, 0.0
        %1651 = vadd.xlane.f32.xlu0 %v1650
        %v1652 = vpop.xlane.xlu0 %1651
        %v1653 = vadd.f32 %v1621, %v1631
        %v1654 = vadd.f32 %v1622, %v1634
        %v1655 = vadd.f32 %v1623, %v1637
        %v1656 = vadd.f32 %v1624, %v1640
        %v1657 = vadd.f32 %v1625, %v1643
        %v1658 = vadd.f32 %v1626, %v1646
        %v1659 = vadd.f32 %v1627, %v1649
        %v1660 = vadd.f32 %v1628, %v1652
        %v1662 = vsel %vm956, %v1606, 0
        %1664 = vmatprep.subr.mxu0 0.0
        %1665 = vmatpush1.msra.mxu0 0.0
        %1666 = vmatprep.subr.mxu0 0.0
        %1667 = vmatpush1.msra.mxu0 0.0
        %1668 = vmatprep.subr.mxu0 0.0
        %1669 = vmatpush1.msra.mxu0 0.0
        %1670 = vmatprep.subr.mxu0 0.0
        %1671 = vmatpush1.msra.mxu0 0.0
        %1672 = vmatprep.subr.mxu0 0.0
        %1673 = vmatpush1.msra.mxu0 0.0
        %1674 = vmatprep.subr.mxu0 0.0
        %1675 = vmatpush1.msra.mxu0 0.0
        %1676 = vmatprep.subr.mxu0 0.0
        %1677 = vmatpush1.msra.mxu0 0.0
        %1678 = vmatprep.subr.mxu0 0.0
        %1679 = vmatpush1.msra.mxu0 0.0
        %1680 = vmatprep.subr.mxu0 0.0
        %1681 = vmatpush1.msra.mxu0 0.0
        %1682 = vmatprep.subr.mxu0 0.0
        %1683 = vmatpush1.msra.mxu0 0.0
        %1684 = vmatprep.subr.mxu0 0.0
        %1685 = vmatpush1.msra.mxu0 0.0
        %1686 = vmatprep.subr.mxu0 0.0
        %1687 = vmatpush1.msra.mxu0 0.0
        %1688 = vmatprep.subr.mxu0 0.0
        %1689 = vmatpush1.msra.mxu0 0.0
        %1690 = vmatprep.subr.mxu0 0.0
        %1691 = vmatpush1.msra.mxu0 0.0
        %1692 = vmatprep.subr.mxu0 0.0
        %1693 = vmatpush1.msra.mxu0 0.0
        %1694 = vmatprep.subr.mxu0 0.0
        %1695 = vmatpush1.msra.mxu0 %v898
        %1696 = vmatprep.subr.mxu0 0.0
        %1697 = vmatpush2.msra.mxu0 0.0
        %1698 = vmatprep.subr.mxu0 0.0
        %1699 = vmatpush2.msra.mxu0 0.0
        %1700 = vmatprep.subr.mxu0 0.0
        %1701 = vmatpush2.msra.mxu0 0.0
        %1702 = vmatprep.subr.mxu0 0.0
        %1703 = vmatpush2.msra.mxu0 0.0
        %1704 = vmatprep.subr.mxu0 0.0
        %1705 = vmatpush2.msra.mxu0 0.0
        %1706 = vmatprep.subr.mxu0 0.0
        %1707 = vmatpush2.msra.mxu0 0.0
        %1708 = vmatprep.subr.mxu0 0.0
        %1709 = vmatpush2.msra.mxu0 0.0
        %1710 = vmatprep.subr.mxu0 0.0
        %1711 = vmatpush2.msra.mxu0 0.0
        %1712 = vmatprep.subr.mxu0 0.0
        %1713 = vmatpush2.msra.mxu0 0.0
        %1714 = vmatprep.subr.mxu0 0.0
        %1715 = vmatpush2.msra.mxu0 0.0
        %1716 = vmatprep.subr.mxu0 0.0
        %1717 = vmatpush2.msra.mxu0 0.0
        %1718 = vmatprep.subr.mxu0 0.0
        %1719 = vmatpush2.msra.mxu0 0.0
        %1720 = vmatprep.subr.mxu0 0.0
        %1721 = vmatpush2.msra.mxu0 0.0
        %1722 = vmatprep.subr.mxu0 0.0
        %1723 = vmatpush2.msra.mxu0 0.0
        %1724 = vmatprep.subr.mxu0 0.0
        %1725 = vmatpush2.msra.mxu0 0.0
        %1726 = vmatprep.subr.mxu0 0.0
        %1727 = vmatpush2.msra.mxu0 0.0
        %1728 = vmatprep.mubr.f32.mxu0 0.0
        %1729 = vmatmul.mubr.f32.gmra.mxu0 %v1662
        %v1730 = vpop.f32.mrf.mxu0
        %v1731 = vadd.f32 0.0, %v1730
        %v1732 = vpop.f32.mrf.mxu0
        %1733 = vdwg.mxu0
        %v1735 = vsel %vm956, %v1608, 0
        %1737 = vmatprep.subr.mxu0 0.0
        %1738 = vmatpush1.msra.mxu0 0.0
        %1739 = vmatprep.subr.mxu0 0.0
        %1740 = vmatpush1.msra.mxu0 0.0
        %1741 = vmatprep.subr.mxu0 0.0
        %1742 = vmatpush1.msra.mxu0 0.0
        %1743 = vmatprep.subr.mxu0 0.0
        %1744 = vmatpush1.msra.mxu0 0.0
        %1745 = vmatprep.subr.mxu0 0.0
        %1746 = vmatpush1.msra.mxu0 0.0
        %1747 = vmatprep.subr.mxu0 0.0
        %1748 = vmatpush1.msra.mxu0 0.0
        %1749 = vmatprep.subr.mxu0 0.0
        %1750 = vmatpush1.msra.mxu0 0.0
        %1751 = vmatprep.subr.mxu0 0.0
        %1752 = vmatpush1.msra.mxu0 0.0
        %1753 = vmatprep.subr.mxu0 0.0
        %1754 = vmatpush1.msra.mxu0 0.0
        %1755 = vmatprep.subr.mxu0 0.0
        %1756 = vmatpush1.msra.mxu0 0.0
        %1757 = vmatprep.subr.mxu0 0.0
        %1758 = vmatpush1.msra.mxu0 0.0
        %1759 = vmatprep.subr.mxu0 0.0
        %1760 = vmatpush1.msra.mxu0 0.0
        %1761 = vmatprep.subr.mxu0 0.0
        %1762 = vmatpush1.msra.mxu0 0.0
        %1763 = vmatprep.subr.mxu0 0.0
        %1764 = vmatpush1.msra.mxu0 0.0
        %1765 = vmatprep.subr.mxu0 0.0
        %1766 = vmatpush1.msra.mxu0 0.0
        %1767 = vmatprep.subr.mxu0 0.0
        %1768 = vmatpush1.msra.mxu0 %v903
        %1769 = vmatprep.subr.mxu0 0.0
        %1770 = vmatpush2.msra.mxu0 0.0
        %1771 = vmatprep.subr.mxu0 0.0
        %1772 = vmatpush2.msra.mxu0 0.0
        %1773 = vmatprep.subr.mxu0 0.0
        %1774 = vmatpush2.msra.mxu0 0.0
        %1775 = vmatprep.subr.mxu0 0.0
        %1776 = vmatpush2.msra.mxu0 0.0
        %1777 = vmatprep.subr.mxu0 0.0
        %1778 = vmatpush2.msra.mxu0 0.0
        %1779 = vmatprep.subr.mxu0 0.0
        %1780 = vmatpush2.msra.mxu0 0.0
        %1781 = vmatprep.subr.mxu0 0.0
        %1782 = vmatpush2.msra.mxu0 0.0
        %1783 = vmatprep.subr.mxu0 0.0
        %1784 = vmatpush2.msra.mxu0 0.0
        %1785 = vmatprep.subr.mxu0 0.0
        %1786 = vmatpush2.msra.mxu0 0.0
        %1787 = vmatprep.subr.mxu0 0.0
        %1788 = vmatpush2.msra.mxu0 0.0
        %1789 = vmatprep.subr.mxu0 0.0
        %1790 = vmatpush2.msra.mxu0 0.0
        %1791 = vmatprep.subr.mxu0 0.0
        %1792 = vmatpush2.msra.mxu0 0.0
        %1793 = vmatprep.subr.mxu0 0.0
        %1794 = vmatpush2.msra.mxu0 0.0
        %1795 = vmatprep.subr.mxu0 0.0
        %1796 = vmatpush2.msra.mxu0 0.0
        %1797 = vmatprep.subr.mxu0 0.0
        %1798 = vmatpush2.msra.mxu0 0.0
        %1799 = vmatprep.subr.mxu0 0.0
        %1800 = vmatpush2.msra.mxu0 0.0
        %1801 = vmatprep.mubr.f32.mxu0 0.0
        %1802 = vmatmul.mubr.f32.gmra.mxu0 %v1735
        %v1803 = vpop.f32.mrf.mxu0
        %v1804 = vadd.f32 0.0, %v1803
        %v1805 = vpop.f32.mrf.mxu0
        %1806 = vdwg.mxu0
        %v1808 = vsel %vm956, %v1610, 0
        %1810 = vmatprep.subr.mxu0 0.0
        %1811 = vmatpush1.msra.mxu0 0.0
        %1812 = vmatprep.subr.mxu0 0.0
        %1813 = vmatpush1.msra.mxu0 0.0
        %1814 = vmatprep.subr.mxu0 0.0
        %1815 = vmatpush1.msra.mxu0 0.0
        %1816 = vmatprep.subr.mxu0 0.0
        %1817 = vmatpush1.msra.mxu0 0.0
        %1818 = vmatprep.subr.mxu0 0.0
        %1819 = vmatpush1.msra.mxu0 0.0
        %1820 = vmatprep.subr.mxu0 0.0
        %1821 = vmatpush1.msra.mxu0 0.0
        %1822 = vmatprep.subr.mxu0 0.0
        %1823 = vmatpush1.msra.mxu0 0.0
        %1824 = vmatprep.subr.mxu0 0.0
        %1825 = vmatpush1.msra.mxu0 0.0
        %1826 = vmatprep.subr.mxu0 0.0
        %1827 = vmatpush1.msra.mxu0 0.0
        %1828 = vmatprep.subr.mxu0 0.0
        %1829 = vmatpush1.msra.mxu0 0.0
        %1830 = vmatprep.subr.mxu0 0.0
        %1831 = vmatpush1.msra.mxu0 0.0
        %1832 = vmatprep.subr.mxu0 0.0
        %1833 = vmatpush1.msra.mxu0 0.0
        %1834 = vmatprep.subr.mxu0 0.0
        %1835 = vmatpush1.msra.mxu0 0.0
        %1836 = vmatprep.subr.mxu0 0.0
        %1837 = vmatpush1.msra.mxu0 0.0
        %1838 = vmatprep.subr.mxu0 0.0
        %1839 = vmatpush1.msra.mxu0 0.0
        %1840 = vmatprep.subr.mxu0 0.0
        %1841 = vmatpush1.msra.mxu0 %v939
        %1842 = vmatprep.subr.mxu0 0.0
        %1843 = vmatpush2.msra.mxu0 0.0
        %1844 = vmatprep.subr.mxu0 0.0
        %1845 = vmatpush2.msra.mxu0 0.0
        %1846 = vmatprep.subr.mxu0 0.0
        %1847 = vmatpush2.msra.mxu0 0.0
        %1848 = vmatprep.subr.mxu0 0.0
        %1849 = vmatpush2.msra.mxu0 0.0
        %1850 = vmatprep.subr.mxu0 0.0
        %1851 = vmatpush2.msra.mxu0 0.0
        %1852 = vmatprep.subr.mxu0 0.0
        %1853 = vmatpush2.msra.mxu0 0.0
        %1854 = vmatprep.subr.mxu0 0.0
        %1855 = vmatpush2.msra.mxu0 0.0
        %1856 = vmatprep.subr.mxu0 0.0
        %1857 = vmatpush2.msra.mxu0 0.0
        %1858 = vmatprep.subr.mxu0 0.0
        %1859 = vmatpush2.msra.mxu0 0.0
        %1860 = vmatprep.subr.mxu0 0.0
        %1861 = vmatpush2.msra.mxu0 0.0
        %1862 = vmatprep.subr.mxu0 0.0
        %1863 = vmatpush2.msra.mxu0 0.0
        %1864 = vmatprep.subr.mxu0 0.0
        %1865 = vmatpush2.msra.mxu0 0.0
        %1866 = vmatprep.subr.mxu0 0.0
        %1867 = vmatpush2.msra.mxu0 0.0
        %1868 = vmatprep.subr.mxu0 0.0
        %1869 = vmatpush2.msra.mxu0 0.0
        %1870 = vmatprep.subr.mxu0 0.0
        %1871 = vmatpush2.msra.mxu0 0.0
        %1872 = vmatprep.subr.mxu0 0.0
        %1873 = vmatpush2.msra.mxu0 0.0
        %1874 = vmatprep.mubr.f32.mxu0 0.0
        %1875 = vmatmul.mubr.f32.gmra.mxu0 %v1808
        %v1876 = vpop.f32.mrf.mxu0
        %v1877 = vadd.f32 0.0, %v1876
        %v1878 = vpop.f32.mrf.mxu0
        %1879 = vdwg.mxu0
        %v1881 = vsel %vm956, %v1612, 0
        %1883 = vmatprep.subr.mxu0 0.0
        %1884 = vmatpush1.msra.mxu0 0.0
        %1885 = vmatprep.subr.mxu0 0.0
        %1886 = vmatpush1.msra.mxu0 0.0
        %1887 = vmatprep.subr.mxu0 0.0
        %1888 = vmatpush1.msra.mxu0 0.0
        %1889 = vmatprep.subr.mxu0 0.0
        %1890 = vmatpush1.msra.mxu0 0.0
        %1891 = vmatprep.subr.mxu0 0.0
        %1892 = vmatpush1.msra.mxu0 0.0
        %1893 = vmatprep.subr.mxu0 0.0
        %1894 = vmatpush1.msra.mxu0 0.0
        %1895 = vmatprep.subr.mxu0 0.0
        %1896 = vmatpush1.msra.mxu0 0.0
        %1897 = vmatprep.subr.mxu0 0.0
        %1898 = vmatpush1.msra.mxu0 0.0
        %1899 = vmatprep.subr.mxu0 0.0
        %1900 = vmatpush1.msra.mxu0 0.0
        %1901 = vmatprep.subr.mxu0 0.0
        %1902 = vmatpush1.msra.mxu0 0.0
        %1903 = vmatprep.subr.mxu0 0.0
        %1904 = vmatpush1.msra.mxu0 0.0
        %1905 = vmatprep.subr.mxu0 0.0
        %1906 = vmatpush1.msra.mxu0 0.0
        %1907 = vmatprep.subr.mxu0 0.0
        %1908 = vmatpush1.msra.mxu0 0.0
        %1909 = vmatprep.subr.mxu0 0.0
        %1910 = vmatpush1.msra.mxu0 0.0
        %1911 = vmatprep.subr.mxu0 0.0
        %1912 = vmatpush1.msra.mxu0 0.0
        %1913 = vmatprep.subr.mxu0 0.0
        %1914 = vmatpush1.msra.mxu0 %v941
        %1915 = vmatprep.subr.mxu0 0.0
        %1916 = vmatpush2.msra.mxu0 0.0
        %1917 = vmatprep.subr.mxu0 0.0
        %1918 = vmatpush2.msra.mxu0 0.0
        %1919 = vmatprep.subr.mxu0 0.0
        %1920 = vmatpush2.msra.mxu0 0.0
        %1921 = vmatprep.subr.mxu0 0.0
        %1922 = vmatpush2.msra.mxu0 0.0
        %1923 = vmatprep.subr.mxu0 0.0
        %1924 = vmatpush2.msra.mxu0 0.0
        %1925 = vmatprep.subr.mxu0 0.0
        %1926 = vmatpush2.msra.mxu0 0.0
        %1927 = vmatprep.subr.mxu0 0.0
        %1928 = vmatpush2.msra.mxu0 0.0
        %1929 = vmatprep.subr.mxu0 0.0
        %1930 = vmatpush2.msra.mxu0 0.0
        %1931 = vmatprep.subr.mxu0 0.0
        %1932 = vmatpush2.msra.mxu0 0.0
        %1933 = vmatprep.subr.mxu0 0.0
        %1934 = vmatpush2.msra.mxu0 0.0
        %1935 = vmatprep.subr.mxu0 0.0
        %1936 = vmatpush2.msra.mxu0 0.0
        %1937 = vmatprep.subr.mxu0 0.0
        %1938 = vmatpush2.msra.mxu0 0.0
        %1939 = vmatprep.subr.mxu0 0.0
        %1940 = vmatpush2.msra.mxu0 0.0
        %1941 = vmatprep.subr.mxu0 0.0
        %1942 = vmatpush2.msra.mxu0 0.0
        %1943 = vmatprep.subr.mxu0 0.0
        %1944 = vmatpush2.msra.mxu0 0.0
        %1945 = vmatprep.subr.mxu0 0.0
        %1946 = vmatpush2.msra.mxu0 0.0
        %1947 = vmatprep.mubr.f32.mxu0 0.0
        %1948 = vmatmul.mubr.f32.gmra.mxu0 %v1881
        %v1949 = vpop.f32.mrf.mxu0
        %v1950 = vadd.f32 0.0, %v1949
        %v1951 = vpop.f32.mrf.mxu0
        %1952 = vdwg.mxu0
        %v1954 = vsel %vm956, %v1614, 0
        %1956 = vmatprep.subr.mxu0 0.0
        %1957 = vmatpush1.msra.mxu0 0.0
        %1958 = vmatprep.subr.mxu0 0.0
        %1959 = vmatpush1.msra.mxu0 0.0
        %1960 = vmatprep.subr.mxu0 0.0
        %1961 = vmatpush1.msra.mxu0 0.0
        %1962 = vmatprep.subr.mxu0 0.0
        %1963 = vmatpush1.msra.mxu0 0.0
        %1964 = vmatprep.subr.mxu0 0.0
        %1965 = vmatpush1.msra.mxu0 0.0
        %1966 = vmatprep.subr.mxu0 0.0
        %1967 = vmatpush1.msra.mxu0 0.0
        %1968 = vmatprep.subr.mxu0 0.0
        %1969 = vmatpush1.msra.mxu0 0.0
        %1970 = vmatprep.subr.mxu0 0.0
        %1971 = vmatpush1.msra.mxu0 0.0
        %1972 = vmatprep.subr.mxu0 0.0
        %1973 = vmatpush1.msra.mxu0 0.0
        %1974 = vmatprep.subr.mxu0 0.0
        %1975 = vmatpush1.msra.mxu0 0.0
        %1976 = vmatprep.subr.mxu0 0.0
        %1977 = vmatpush1.msra.mxu0 0.0
        %1978 = vmatprep.subr.mxu0 0.0
        %1979 = vmatpush1.msra.mxu0 0.0
        %1980 = vmatprep.subr.mxu0 0.0
        %1981 = vmatpush1.msra.mxu0 0.0
        %1982 = vmatprep.subr.mxu0 0.0
        %1983 = vmatpush1.msra.mxu0 0.0
        %1984 = vmatprep.subr.mxu0 0.0
        %1985 = vmatpush1.msra.mxu0 0.0
        %1986 = vmatprep.subr.mxu0 0.0
        %1987 = vmatpush1.msra.mxu0 %v945
        %1988 = vmatprep.subr.mxu0 0.0
        %1989 = vmatpush2.msra.mxu0 0.0
        %1990 = vmatprep.subr.mxu0 0.0
        %1991 = vmatpush2.msra.mxu0 0.0
        %1992 = vmatprep.subr.mxu0 0.0
        %1993 = vmatpush2.msra.mxu0 0.0
        %1994 = vmatprep.subr.mxu0 0.0
        %1995 = vmatpush2.msra.mxu0 0.0
        %1996 = vmatprep.subr.mxu0 0.0
        %1997 = vmatpush2.msra.mxu0 0.0
        %1998 = vmatprep.subr.mxu0 0.0
        %1999 = vmatpush2.msra.mxu0 0.0
        %2000 = vmatprep.subr.mxu0 0.0
        %2001 = vmatpush2.msra.mxu0 0.0
        %2002 = vmatprep.subr.mxu0 0.0
        %2003 = vmatpush2.msra.mxu0 0.0
        %2004 = vmatprep.subr.mxu0 0.0
        %2005 = vmatpush2.msra.mxu0 0.0
        %2006 = vmatprep.subr.mxu0 0.0
        %2007 = vmatpush2.msra.mxu0 0.0
        %2008 = vmatprep.subr.mxu0 0.0
        %2009 = vmatpush2.msra.mxu0 0.0
        %2010 = vmatprep.subr.mxu0 0.0
        %2011 = vmatpush2.msra.mxu0 0.0
        %2012 = vmatprep.subr.mxu0 0.0
        %2013 = vmatpush2.msra.mxu0 0.0
        %2014 = vmatprep.subr.mxu0 0.0
        %2015 = vmatpush2.msra.mxu0 0.0
        %2016 = vmatprep.subr.mxu0 0.0
        %2017 = vmatpush2.msra.mxu0 0.0
        %2018 = vmatprep.subr.mxu0 0.0
        %2019 = vmatpush2.msra.mxu0 0.0
        %2020 = vmatprep.mubr.f32.mxu0 0.0
        %2021 = vmatmul.mubr.f32.gmra.mxu0 %v1954
        %v2022 = vpop.f32.mrf.mxu0
        %v2023 = vadd.f32 0.0, %v2022
        %v2024 = vpop.f32.mrf.mxu0
        %2025 = vdwg.mxu0
        %v2027 = vsel %vm956, %v1616, 0
        %2029 = vmatprep.subr.mxu0 0.0
        %2030 = vmatpush1.msra.mxu0 0.0
        %2031 = vmatprep.subr.mxu0 0.0
        %2032 = vmatpush1.msra.mxu0 0.0
        %2033 = vmatprep.subr.mxu0 0.0
        %2034 = vmatpush1.msra.mxu0 0.0
        %2035 = vmatprep.subr.mxu0 0.0
        %2036 = vmatpush1.msra.mxu0 0.0
        %2037 = vmatprep.subr.mxu0 0.0
        %2038 = vmatpush1.msra.mxu0 0.0
        %2039 = vmatprep.subr.mxu0 0.0
        %2040 = vmatpush1.msra.mxu0 0.0
        %2041 = vmatprep.subr.mxu0 0.0
        %2042 = vmatpush1.msra.mxu0 0.0
        %2043 = vmatprep.subr.mxu0 0.0
        %2044 = vmatpush1.msra.mxu0 0.0
        %2045 = vmatprep.subr.mxu0 0.0
        %2046 = vmatpush1.msra.mxu0 0.0
        %2047 = vmatprep.subr.mxu0 0.0
        %2048 = vmatpush1.msra.mxu0 0.0
        %2049 = vmatprep.subr.mxu0 0.0
        %2050 = vmatpush1.msra.mxu0 0.0
        %2051 = vmatprep.subr.mxu0 0.0
        %2052 = vmatpush1.msra.mxu0 0.0
        %2053 = vmatprep.subr.mxu0 0.0
        %2054 = vmatpush1.msra.mxu0 0.0
        %2055 = vmatprep.subr.mxu0 0.0
        %2056 = vmatpush1.msra.mxu0 0.0
        %2057 = vmatprep.subr.mxu0 0.0
        %2058 = vmatpush1.msra.mxu0 0.0
        %2059 = vmatprep.subr.mxu0 0.0
        %2060 = vmatpush1.msra.mxu0 %v947
        %2061 = vmatprep.subr.mxu0 0.0
        %2062 = vmatpush2.msra.mxu0 0.0
        %2063 = vmatprep.subr.mxu0 0.0
        %2064 = vmatpush2.msra.mxu0 0.0
        %2065 = vmatprep.subr.mxu0 0.0
        %2066 = vmatpush2.msra.mxu0 0.0
        %2067 = vmatprep.subr.mxu0 0.0
        %2068 = vmatpush2.msra.mxu0 0.0
        %2069 = vmatprep.subr.mxu0 0.0
        %2070 = vmatpush2.msra.mxu0 0.0
        %2071 = vmatprep.subr.mxu0 0.0
        %2072 = vmatpush2.msra.mxu0 0.0
        %2073 = vmatprep.subr.mxu0 0.0
        %2074 = vmatpush2.msra.mxu0 0.0
        %2075 = vmatprep.subr.mxu0 0.0
        %2076 = vmatpush2.msra.mxu0 0.0
        %2077 = vmatprep.subr.mxu0 0.0
        %2078 = vmatpush2.msra.mxu0 0.0
        %2079 = vmatprep.subr.mxu0 0.0
        %2080 = vmatpush2.msra.mxu0 0.0
        %2081 = vmatprep.subr.mxu0 0.0
        %2082 = vmatpush2.msra.mxu0 0.0
        %2083 = vmatprep.subr.mxu0 0.0
        %2084 = vmatpush2.msra.mxu0 0.0
        %2085 = vmatprep.subr.mxu0 0.0
        %2086 = vmatpush2.msra.mxu0 0.0
        %2087 = vmatprep.subr.mxu0 0.0
        %2088 = vmatpush2.msra.mxu0 0.0
        %2089 = vmatprep.subr.mxu0 0.0
        %2090 = vmatpush2.msra.mxu0 0.0
        %2091 = vmatprep.subr.mxu0 0.0
        %2092 = vmatpush2.msra.mxu0 0.0
        %2093 = vmatprep.mubr.f32.mxu0 0.0
        %2094 = vmatmul.mubr.f32.gmra.mxu0 %v2027
        %v2095 = vpop.f32.mrf.mxu0
        %v2096 = vadd.f32 0.0, %v2095
        %v2097 = vpop.f32.mrf.mxu0
        %2098 = vdwg.mxu0
        %v2100 = vsel %vm956, %v1618, 0
        %2102 = vmatprep.subr.mxu0 0.0
        %2103 = vmatpush1.msra.mxu0 0.0
        %2104 = vmatprep.subr.mxu0 0.0
        %2105 = vmatpush1.msra.mxu0 0.0
        %2106 = vmatprep.subr.mxu0 0.0
        %2107 = vmatpush1.msra.mxu0 0.0
        %2108 = vmatprep.subr.mxu0 0.0
        %2109 = vmatpush1.msra.mxu0 0.0
        %2110 = vmatprep.subr.mxu0 0.0
        %2111 = vmatpush1.msra.mxu0 0.0
        %2112 = vmatprep.subr.mxu0 0.0
        %2113 = vmatpush1.msra.mxu0 0.0
        %2114 = vmatprep.subr.mxu0 0.0
        %2115 = vmatpush1.msra.mxu0 0.0
        %2116 = vmatprep.subr.mxu0 0.0
        %2117 = vmatpush1.msra.mxu0 0.0
        %2118 = vmatprep.subr.mxu0 0.0
        %2119 = vmatpush1.msra.mxu0 0.0
        %2120 = vmatprep.subr.mxu0 0.0
        %2121 = vmatpush1.msra.mxu0 0.0
        %2122 = vmatprep.subr.mxu0 0.0
        %2123 = vmatpush1.msra.mxu0 0.0
        %2124 = vmatprep.subr.mxu0 0.0
        %2125 = vmatpush1.msra.mxu0 0.0
        %2126 = vmatprep.subr.mxu0 0.0
        %2127 = vmatpush1.msra.mxu0 0.0
        %2128 = vmatprep.subr.mxu0 0.0
        %2129 = vmatpush1.msra.mxu0 0.0
        %2130 = vmatprep.subr.mxu0 0.0
        %2131 = vmatpush1.msra.mxu0 0.0
        %2132 = vmatprep.subr.mxu0 0.0
        %2133 = vmatpush1.msra.mxu0 %v951
        %2134 = vmatprep.subr.mxu0 0.0
        %2135 = vmatpush2.msra.mxu0 0.0
        %2136 = vmatprep.subr.mxu0 0.0
        %2137 = vmatpush2.msra.mxu0 0.0
        %2138 = vmatprep.subr.mxu0 0.0
        %2139 = vmatpush2.msra.mxu0 0.0
        %2140 = vmatprep.subr.mxu0 0.0
        %2141 = vmatpush2.msra.mxu0 0.0
        %2142 = vmatprep.subr.mxu0 0.0
        %2143 = vmatpush2.msra.mxu0 0.0
        %2144 = vmatprep.subr.mxu0 0.0
        %2145 = vmatpush2.msra.mxu0 0.0
        %2146 = vmatprep.subr.mxu0 0.0
        %2147 = vmatpush2.msra.mxu0 0.0
        %2148 = vmatprep.subr.mxu0 0.0
        %2149 = vmatpush2.msra.mxu0 0.0
        %2150 = vmatprep.subr.mxu0 0.0
        %2151 = vmatpush2.msra.mxu0 0.0
        %2152 = vmatprep.subr.mxu0 0.0
        %2153 = vmatpush2.msra.mxu0 0.0
        %2154 = vmatprep.subr.mxu0 0.0
        %2155 = vmatpush2.msra.mxu0 0.0
        %2156 = vmatprep.subr.mxu0 0.0
        %2157 = vmatpush2.msra.mxu0 0.0
        %2158 = vmatprep.subr.mxu0 0.0
        %2159 = vmatpush2.msra.mxu0 0.0
        %2160 = vmatprep.subr.mxu0 0.0
        %2161 = vmatpush2.msra.mxu0 0.0
        %2162 = vmatprep.subr.mxu0 0.0
        %2163 = vmatpush2.msra.mxu0 0.0
        %2164 = vmatprep.subr.mxu0 0.0
        %2165 = vmatpush2.msra.mxu0 0.0
        %2166 = vmatprep.mubr.f32.mxu0 0.0
        %2167 = vmatmul.mubr.f32.gmra.mxu0 %v2100
        %v2168 = vpop.f32.mrf.mxu0
        %v2169 = vadd.f32 0.0, %v2168
        %v2170 = vpop.f32.mrf.mxu0
        %2171 = vdwg.mxu0
        %v2173 = vsel %vm956, %v1620, 0
        %2175 = vmatprep.subr.mxu0 0.0
        %2176 = vmatpush1.msra.mxu0 0.0
        %2177 = vmatprep.subr.mxu0 0.0
        %2178 = vmatpush1.msra.mxu0 0.0
        %2179 = vmatprep.subr.mxu0 0.0
        %2180 = vmatpush1.msra.mxu0 0.0
        %2181 = vmatprep.subr.mxu0 0.0
        %2182 = vmatpush1.msra.mxu0 0.0
        %2183 = vmatprep.subr.mxu0 0.0
        %2184 = vmatpush1.msra.mxu0 0.0
        %2185 = vmatprep.subr.mxu0 0.0
        %2186 = vmatpush1.msra.mxu0 0.0
        %2187 = vmatprep.subr.mxu0 0.0
        %2188 = vmatpush1.msra.mxu0 0.0
        %2189 = vmatprep.subr.mxu0 0.0
        %2190 = vmatpush1.msra.mxu0 0.0
        %2191 = vmatprep.subr.mxu0 0.0
        %2192 = vmatpush1.msra.mxu0 0.0
        %2193 = vmatprep.subr.mxu0 0.0
        %2194 = vmatpush1.msra.mxu0 0.0
        %2195 = vmatprep.subr.mxu0 0.0
        %2196 = vmatpush1.msra.mxu0 0.0
        %2197 = vmatprep.subr.mxu0 0.0
        %2198 = vmatpush1.msra.mxu0 0.0
        %2199 = vmatprep.subr.mxu0 0.0
        %2200 = vmatpush1.msra.mxu0 0.0
        %2201 = vmatprep.subr.mxu0 0.0
        %2202 = vmatpush1.msra.mxu0 0.0
        %2203 = vmatprep.subr.mxu0 0.0
        %2204 = vmatpush1.msra.mxu0 0.0
        %2205 = vmatprep.subr.mxu0 0.0
        %2206 = vmatpush1.msra.mxu0 %v953
        %2207 = vmatprep.subr.mxu0 0.0
        %2208 = vmatpush2.msra.mxu0 0.0
        %2209 = vmatprep.subr.mxu0 0.0
        %2210 = vmatpush2.msra.mxu0 0.0
        %2211 = vmatprep.subr.mxu0 0.0
        %2212 = vmatpush2.msra.mxu0 0.0
        %2213 = vmatprep.subr.mxu0 0.0
        %2214 = vmatpush2.msra.mxu0 0.0
        %2215 = vmatprep.subr.mxu0 0.0
        %2216 = vmatpush2.msra.mxu0 0.0
        %2217 = vmatprep.subr.mxu0 0.0
        %2218 = vmatpush2.msra.mxu0 0.0
        %2219 = vmatprep.subr.mxu0 0.0
        %2220 = vmatpush2.msra.mxu0 0.0
        %2221 = vmatprep.subr.mxu0 0.0
        %2222 = vmatpush2.msra.mxu0 0.0
        %2223 = vmatprep.subr.mxu0 0.0
        %2224 = vmatpush2.msra.mxu0 0.0
        %2225 = vmatprep.subr.mxu0 0.0
        %2226 = vmatpush2.msra.mxu0 0.0
        %2227 = vmatprep.subr.mxu0 0.0
        %2228 = vmatpush2.msra.mxu0 0.0
        %2229 = vmatprep.subr.mxu0 0.0
        %2230 = vmatpush2.msra.mxu0 0.0
        %2231 = vmatprep.subr.mxu0 0.0
        %2232 = vmatpush2.msra.mxu0 0.0
        %2233 = vmatprep.subr.mxu0 0.0
        %2234 = vmatpush2.msra.mxu0 0.0
        %2235 = vmatprep.subr.mxu0 0.0
        %2236 = vmatpush2.msra.mxu0 0.0
        %2237 = vmatprep.subr.mxu0 0.0
        %2238 = vmatpush2.msra.mxu0 0.0
        %2239 = vmatprep.mubr.f32.mxu0 0.0
        %2240 = vmatmul.mubr.f32.gmra.mxu0 %v2173
        %v2241 = vpop.f32.mrf.mxu0
        %v2242 = vadd.f32 0.0, %v2241
        %v2243 = vpop.f32.mrf.mxu0
        %2244 = vdwg.mxu0
        %v2245 = vadd.f32 %v1621, %v1731
        %v2246 = vadd.f32 %v1622, %v1804
        %v2247 = vadd.f32 %v1623, %v1877
        %v2248 = vadd.f32 %v1624, %v1950
        %v2249 = vadd.f32 %v1625, %v2023
        %v2250 = vadd.f32 %v1626, %v2096
        %v2251 = vadd.f32 %v1627, %v2169
        %v2252 = vadd.f32 %v1628, %v2242
        %v2253 = vrcp.pop %v1653
        %v2254 = vrcp.pop %v1654
        %v2255 = vrcp.pop %v1655
        %v2256 = vrcp.pop %v1656
        %v2257 = vrcp.pop %v1657
        %v2258 = vrcp.pop %v1658
        %v2259 = vrcp.pop %v1659
        %v2260 = vrcp.pop %v1660
        %v2261 = vmul.f32 %v2245, %v2253
        %v2262 = vmul.f32 %v2246, %v2254
        %v2263 = vmul.f32 %v2247, %v2255
        %v2264 = vmul.f32 %v2248, %v2256
        %v2265 = vmul.f32 %v2249, %v2257
        %v2266 = vmul.f32 %v2250, %v2258
        %v2267 = vmul.f32 %v2251, %v2259
        %v2268 = vmul.f32 %v2252, %v2260
        %2271 = vrot.lane.b32.xlu0 %v2263, 8
        %v2272 = vpop.permute.xlu0 %2271
        %2273 = vrot.lane.b32.xlu0 %v2264, 8
        %v2274 = vpop.permute.xlu0 %2273
        %2279 = vrot.lane.b32.xlu0 %v2265, 16
        %v2280 = vpop.permute.xlu0 %2279
        %2281 = vrot.lane.b32.xlu0 %v2266, 16
        %v2282 = vpop.permute.xlu0 %2281
        %2287 = vrot.lane.b32.xlu0 %v2267, 24
        %v2288 = vpop.permute.xlu0 %2287
        %2289 = vrot.lane.b32.xlu0 %v2268, 24
        %v2290 = vpop.permute.xlu0 %2289
        %v2293 = vsel %vm956, %v2261, %v2272
        %v2294 = vsel %vm956, %v2262, %v2274
        %vm2295 = vcmask 130048
        %v2296 = vsel %vm2295, %v2293, %v2280
        %v2297 = vsel %vm2295, %v2294, %v2282
        %vm2298 = vcmask 195584
        %v2299 = vsel %vm2298, %v2296, %v2288
        %v2300 = vsel %vm2298, %v2297, %v2290
        %v2301 = vld [vmem:[#allocation5] sm:$0xff]
        %v2302 = vld [vmem:[#allocation5 + $0x8] sm:$0xff]
        %v2303 = vld [vmem:[#allocation5 + $0x10] sm:$0xff]
        %v2304 = vld [vmem:[#allocation5 + $0x18] sm:$0xff]
        %v2305 = vld [vmem:[%s8] sm:$0x1]
        %v2307 = vlaneseq
        %v2308 = vshrl.u32 %v2307, 7
        %v2309 = vsub.s32 0, %v2308
        %v2310 = vrot.slane %v2305, %v2309
        %v2313 = vsel %vm598, %v2299, 0
        %v2316 = vsel %vm598, %v2300, 0
        %2318 = vmatprep.subr.mxu0 0.0
        %2319 = vmatpush1.msra.mxu0 0.0
        %2320 = vmatprep.subr.mxu0 0.0
        %2321 = vmatpush1.msra.mxu0 0.0
        %2322 = vmatprep.subr.mxu0 0.0
        %2323 = vmatpush1.msra.mxu0 0.0
        %2324 = vmatprep.subr.mxu0 0.0
        %2325 = vmatpush1.msra.mxu0 0.0
        %2326 = vmatprep.subr.mxu0 0.0
        %2327 = vmatpush1.msra.mxu0 0.0
        %2328 = vmatprep.subr.mxu0 0.0
        %2329 = vmatpush1.msra.mxu0 0.0
        %2330 = vmatprep.subr.mxu0 0.0
        %2331 = vmatpush1.msra.mxu0 0.0
        %2332 = vmatprep.subr.mxu0 0.0
        %2333 = vmatpush1.msra.mxu0 0.0
        %2334 = vmatprep.subr.mxu0 0.0
        %2335 = vmatpush1.msra.mxu0 0.0
        %2336 = vmatprep.subr.mxu0 0.0
        %2337 = vmatpush1.msra.mxu0 0.0
        %2338 = vmatprep.subr.mxu0 0.0
        %2339 = vmatpush1.msra.mxu0 0.0
        %2340 = vmatprep.subr.mxu0 0.0
        %2341 = vmatpush1.msra.mxu0 0.0
        %2342 = vmatprep.subr.mxu0 0.0
        %2343 = vmatpush1.msra.mxu0 %v2304
        %2344 = vmatprep.subr.mxu0 0.0
        %2345 = vmatpush1.msra.mxu0 %v2303
        %2346 = vmatprep.subr.mxu0 0.0
        %2347 = vmatpush1.msra.mxu0 %v2302
        %2348 = vmatprep.subr.mxu0 0.0
        %2349 = vmatpush1.msra.mxu0 %v2301
        %2350 = vmatprep.subr.mxu0 0.0
        %2351 = vmatpush2.msra.mxu0 0.0
        %2352 = vmatprep.subr.mxu0 0.0
        %2353 = vmatpush2.msra.mxu0 0.0
        %2354 = vmatprep.subr.mxu0 0.0
        %2355 = vmatpush2.msra.mxu0 0.0
        %2356 = vmatprep.subr.mxu0 0.0
        %2357 = vmatpush2.msra.mxu0 0.0
        %2358 = vmatprep.subr.mxu0 0.0
        %2359 = vmatpush2.msra.mxu0 0.0
        %2360 = vmatprep.subr.mxu0 0.0
        %2361 = vmatpush2.msra.mxu0 0.0
        %2362 = vmatprep.subr.mxu0 0.0
        %2363 = vmatpush2.msra.mxu0 0.0
        %2364 = vmatprep.subr.mxu0 0.0
        %2365 = vmatpush2.msra.mxu0 0.0
        %2366 = vmatprep.subr.mxu0 0.0
        %2367 = vmatpush2.msra.mxu0 0.0
        %2368 = vmatprep.subr.mxu0 0.0
        %2369 = vmatpush2.msra.mxu0 0.0
        %2370 = vmatprep.subr.mxu0 0.0
        %2371 = vmatpush2.msra.mxu0 0.0
        %2372 = vmatprep.subr.mxu0 0.0
        %2373 = vmatpush2.msra.mxu0 0.0
        %2374 = vmatprep.subr.mxu0 0.0
        %2375 = vmatpush2.msra.mxu0 0.0
        %2376 = vmatprep.subr.mxu0 0.0
        %2377 = vmatpush2.msra.mxu0 0.0
        %2378 = vmatprep.subr.mxu0 0.0
        %2379 = vmatpush2.msra.mxu0 0.0
        %2380 = vmatprep.subr.mxu0 0.0
        %2381 = vmatpush2.msra.mxu0 0.0
        %2382 = vmatprep.mubr.f32.mxu0 0.0
        %2383 = vmatmul.mubr.f32.gmra.mxu0 %v2313
        %v2384 = vpop.f32.mrf.mxu0
        %v2385 = vadd.f32 %v2310, %v2384
        %v2386 = vpop.f32.mrf.mxu0
        %2387 = vmatprep.mubr.f32.mxu0 0.0
        %2388 = vmatmul.mubr.f32.gmra.mxu0 %v2316
        %v2389 = vpop.f32.mrf.mxu0
        %v2390 = vadd.f32 %v2310, %v2389
        %v2391 = vpop.f32.mrf.mxu0
        %2392 = vdwg.mxu0
        %v2393 = vadd.f32 %v594, %v2385
        %v2394 = vadd.f32 %v595, %v2390
        %v2395 = vld [vmem:[%s15] sm:$0x1]
        %v2396 = vld [vmem:[%s16] sm:$0x1]
        %v2397 = vsel %vm598, %v2393, 0.0
        %2398 = vadd.xlane.f32.xlu0 %v2397
        %v2399 = vpop.xlane.xlu0 %2398
        %v2400 = vsel %vm598, %v2394, 0.0
        %2401 = vadd.xlane.f32.xlu0 %v2400
        %v2402 = vpop.xlane.xlu0 %2401
        %v2403 = vmul.f32 %v2399, %v605
        %v2404 = vmul.f32 %v2402, %v605
        %v2405 = vsub.f32 %v2393, %v2403
        %v2406 = vsub.f32 %v2394, %v2404
        %v2407 = vmul.f32 %v2405, %v2405
        %v2408 = vmul.f32 %v2406, %v2406
        %v2409 = vsel %vm598, %v2407, 0.0
        %2410 = vadd.xlane.f32.xlu0 %v2409
        %v2411 = vpop.xlane.xlu0 %2410
        %v2412 = vsel %vm598, %v2408, 0.0
        %2413 = vadd.xlane.f32.xlu0 %v2412
        %v2414 = vpop.xlane.xlu0 %2413
        %v2415 = vmul.f32 %v2411, %v605
        %v2416 = vmul.f32 %v2414, %v605
        %v2417 = vadd.f32 %v2415, 1e-05
        %v2418 = vadd.f32 %v2416, 1e-05
        %v2419 = vrsqrt.pop %v2417
        %v2420 = vrsqrt.pop %v2418
        %v2421 = vmul.f32 %v2405, %v2419
        %v2422 = vmul.f32 %v2406, %v2420
        %v2424 = vlaneseq
        %v2425 = vshrl.u32 %v2424, 7
        %v2426 = vsub.s32 0, %v2425
        %v2427 = vrot.slane %v2395, %v2426
        %v2429 = vmul.f32 %v2421, %v2427
        %v2430 = vmul.f32 %v2422, %v2427
        %v2432 = vlaneseq
        %v2433 = vshrl.u32 %v2432, 7
        %v2434 = vsub.s32 0, %v2433
        %v2435 = vrot.slane %v2396, %v2434
        %v2437 = vadd.f32 %v2429, %v2435
        %v2438 = vadd.f32 %v2430, %v2435
        %v2439 = vld [vmem:[%s12] sm:$0x1]
        %v2440 = vld [vmem:[#allocation7] sm:$0xff]
        %v2441 = vld [vmem:[#allocation7 + $0x8] sm:$0xff]
        %v2442 = vld [vmem:[#allocation7 + $0x10] sm:$0xff]
        %v2443 = vld [vmem:[#allocation7 + $0x18] sm:$0xff]
        %v2445 = vlaneseq
        %v2446 = vshrl.u32 %v2445, 7
        %v2447 = vsub.s32 0, %v2446
        %v2448 = vrot.slane %v2439, %v2447
        %v2451 = vsel %vm598, %v2437, 0
        %v2454 = vsel %vm598, %v2438, 0
        %2456 = vmatprep.subr.mxu0 0.0
        %2457 = vmatpush1.msra.mxu0 0.0
        %2458 = vmatprep.subr.mxu0 0.0
        %2459 = vmatpush1.msra.mxu0 0.0
        %2460 = vmatprep.subr.mxu0 0.0
        %2461 = vmatpush1.msra.mxu0 0.0
        %2462 = vmatprep.subr.mxu0 0.0
        %2463 = vmatpush1.msra.mxu0 0.0
        %2464 = vmatprep.subr.mxu0 0.0
        %2465 = vmatpush1.msra.mxu0 0.0
        %2466 = vmatprep.subr.mxu0 0.0
        %2467 = vmatpush1.msra.mxu0 0.0
        %2468 = vmatprep.subr.mxu0 0.0
        %2469 = vmatpush1.msra.mxu0 0.0
        %2470 = vmatprep.subr.mxu0 0.0
        %2471 = vmatpush1.msra.mxu0 0.0
        %2472 = vmatprep.subr.mxu0 0.0
        %2473 = vmatpush1.msra.mxu0 0.0
        %2474 = vmatprep.subr.mxu0 0.0
        %2475 = vmatpush1.msra.mxu0 0.0
        %2476 = vmatprep.subr.mxu0 0.0
        %2477 = vmatpush1.msra.mxu0 0.0
        %2478 = vmatprep.subr.mxu0 0.0
        %2479 = vmatpush1.msra.mxu0 0.0
        %2480 = vmatprep.subr.mxu0 0.0
        %2481 = vmatpush1.msra.mxu0 %v2443
        %2482 = vmatprep.subr.mxu0 0.0
        %2483 = vmatpush1.msra.mxu0 %v2442
        %2484 = vmatprep.subr.mxu0 0.0
        %2485 = vmatpush1.msra.mxu0 %v2441
        %2486 = vmatprep.subr.mxu0 0.0
        %2487 = vmatpush1.msra.mxu0 %v2440
        %2488 = vmatprep.subr.mxu0 0.0
        %2489 = vmatpush2.msra.mxu0 0.0
        %2490 = vmatprep.subr.mxu0 0.0
        %2491 = vmatpush2.msra.mxu0 0.0
        %2492 = vmatprep.subr.mxu0 0.0
        %2493 = vmatpush2.msra.mxu0 0.0
        %2494 = vmatprep.subr.mxu0 0.0
        %2495 = vmatpush2.msra.mxu0 0.0
        %2496 = vmatprep.subr.mxu0 0.0
        %2497 = vmatpush2.msra.mxu0 0.0
        %2498 = vmatprep.subr.mxu0 0.0
        %2499 = vmatpush2.msra.mxu0 0.0
        %2500 = vmatprep.subr.mxu0 0.0
        %2501 = vmatpush2.msra.mxu0 0.0
        %2502 = vmatprep.subr.mxu0 0.0
        %2503 = vmatpush2.msra.mxu0 0.0
        %2504 = vmatprep.subr.mxu0 0.0
        %2505 = vmatpush2.msra.mxu0 0.0
        %2506 = vmatprep.subr.mxu0 0.0
        %2507 = vmatpush2.msra.mxu0 0.0
        %2508 = vmatprep.subr.mxu0 0.0
        %2509 = vmatpush2.msra.mxu0 0.0
        %2510 = vmatprep.subr.mxu0 0.0
        %2511 = vmatpush2.msra.mxu0 0.0
        %2512 = vmatprep.subr.mxu0 0.0
        %2513 = vmatpush2.msra.mxu0 0.0
        %2514 = vmatprep.subr.mxu0 0.0
        %2515 = vmatpush2.msra.mxu0 0.0
        %2516 = vmatprep.subr.mxu0 0.0
        %2517 = vmatpush2.msra.mxu0 0.0
        %2518 = vmatprep.subr.mxu0 0.0
        %2519 = vmatpush2.msra.mxu0 0.0
        %2520 = vmatprep.mubr.f32.mxu0 0.0
        %2521 = vmatmul.mubr.f32.gmra.mxu0 %v2451
        %v2522 = vpop.f32.mrf.mxu0
        %v2523 = vadd.f32 %v2448, %v2522
        %v2524 = vpop.f32.mrf.mxu0
        %2525 = vmatprep.mubr.f32.mxu0 0.0
        %2526 = vmatmul.mubr.f32.gmra.mxu0 %v2454
        %v2527 = vpop.f32.mrf.mxu0
        %v2528 = vadd.f32 %v2448, %v2527
        %v2529 = vpop.f32.mrf.mxu0
        %2530 = vdwg.mxu0
        %v2531 = vmax.f32 %v2523, 0.0
        %v2532 = vmax.f32 %v2528, 0.0
        %v2533 = vld [vmem:[%s13] sm:$0xff]
        %v2534 = vld [vmem:[%s13 + $0x8] sm:$0xff]
        %v2535 = vld [vmem:[%s13 + $0x10] sm:$0xff]
        %v2536 = vld [vmem:[%s13 + $0x18] sm:$0xff]
        %v2537 = vld [vmem:[%s13 + $0x20] sm:$0xff]
        %v2538 = vld [vmem:[%s13 + $0x28] sm:$0xff]
        %v2539 = vld [vmem:[%s13 + $0x30] sm:$0xff]
        %v2540 = vld [vmem:[%s13 + $0x38] sm:$0xff]
        %v2541 = vld [vmem:[%s14] sm:$0x1]
        %v2543 = vlaneseq
        %v2544 = vshrl.u32 %v2543, 7
        %v2545 = vsub.s32 0, %v2544
        %v2546 = vrot.slane %v2541, %v2545
        %vm2548 = vcmask 523264
        %v2550 = vsel %vm2548, %v2531, 0
        %v2553 = vsel %vm2548, %v2532, 0
        %2555 = vmatprep.subr.mxu0 0.0
        %2556 = vmatpush1.msra.mxu0 0.0
        %2557 = vmatprep.subr.mxu0 0.0
        %2558 = vmatpush1.msra.mxu0 0.0
        %2559 = vmatprep.subr.mxu0 0.0
        %2560 = vmatpush1.msra.mxu0 0.0
        %2561 = vmatprep.subr.mxu0 0.0
        %2562 = vmatpush1.msra.mxu0 0.0
        %2563 = vmatprep.subr.mxu0 0.0
        %2564 = vmatpush1.msra.mxu0 0.0
        %2565 = vmatprep.subr.mxu0 0.0
        %2566 = vmatpush1.msra.mxu0 0.0
        %2567 = vmatprep.subr.mxu0 0.0
        %2568 = vmatpush1.msra.mxu0 0.0
        %2569 = vmatprep.subr.mxu0 0.0
        %2570 = vmatpush1.msra.mxu0 0.0
        %2571 = vmatprep.subr.mxu0 0.0
        %2572 = vmatpush1.msra.mxu0 %v2540
        %2573 = vmatprep.subr.mxu0 0.0
        %2574 = vmatpush1.msra.mxu0 %v2539
        %2575 = vmatprep.subr.mxu0 0.0
        %2576 = vmatpush1.msra.mxu0 %v2538
        %2577 = vmatprep.subr.mxu0 0.0
        %2578 = vmatpush1.msra.mxu0 %v2537
        %2579 = vmatprep.subr.mxu0 0.0
        %2580 = vmatpush1.msra.mxu0 %v2536
        %2581 = vmatprep.subr.mxu0 0.0
        %2582 = vmatpush1.msra.mxu0 %v2535
        %2583 = vmatprep.subr.mxu0 0.0
        %2584 = vmatpush1.msra.mxu0 %v2534
        %2585 = vmatprep.subr.mxu0 0.0
        %2586 = vmatpush1.msra.mxu0 %v2533
        %2587 = vmatprep.subr.mxu0 0.0
        %2588 = vmatpush2.msra.mxu0 0.0
        %2589 = vmatprep.subr.mxu0 0.0
        %2590 = vmatpush2.msra.mxu0 0.0
        %2591 = vmatprep.subr.mxu0 0.0
        %2592 = vmatpush2.msra.mxu0 0.0
        %2593 = vmatprep.subr.mxu0 0.0
        %2594 = vmatpush2.msra.mxu0 0.0
        %2595 = vmatprep.subr.mxu0 0.0
        %2596 = vmatpush2.msra.mxu0 0.0
        %2597 = vmatprep.subr.mxu0 0.0
        %2598 = vmatpush2.msra.mxu0 0.0
        %2599 = vmatprep.subr.mxu0 0.0
        %2600 = vmatpush2.msra.mxu0 0.0
        %2601 = vmatprep.subr.mxu0 0.0
        %2602 = vmatpush2.msra.mxu0 0.0
        %2603 = vmatprep.subr.mxu0 0.0
        %2604 = vmatpush2.msra.mxu0 0.0
        %2605 = vmatprep.subr.mxu0 0.0
        %2606 = vmatpush2.msra.mxu0 0.0
        %2607 = vmatprep.subr.mxu0 0.0
        %2608 = vmatpush2.msra.mxu0 0.0
        %2609 = vmatprep.subr.mxu0 0.0
        %2610 = vmatpush2.msra.mxu0 0.0
        %2611 = vmatprep.subr.mxu0 0.0
        %2612 = vmatpush2.msra.mxu0 0.0
        %2613 = vmatprep.subr.mxu0 0.0
        %2614 = vmatpush2.msra.mxu0 0.0
        %2615 = vmatprep.subr.mxu0 0.0
        %2616 = vmatpush2.msra.mxu0 0.0
        %2617 = vmatprep.subr.mxu0 0.0
        %2618 = vmatpush2.msra.mxu0 0.0
        %2619 = vmatprep.mubr.f32.mxu0 0.0
        %2620 = vmatmul.mubr.f32.gmra.mxu0 %v2550
        %v2621 = vpop.f32.mrf.mxu0
        %v2622 = vadd.f32 %v2546, %v2621
        %v2623 = vpop.f32.mrf.mxu0
        %2624 = vmatprep.mubr.f32.mxu0 0.0
        %2625 = vmatmul.mubr.f32.gmra.mxu0 %v2553
        %v2626 = vpop.f32.mrf.mxu0
        %v2627 = vadd.f32 %v2546, %v2626
        %v2628 = vpop.f32.mrf.mxu0
        %2629 = vdwg.mxu0
        %v2630 = vadd.f32 %v2393, %v2622
        %v2631 = vadd.f32 %v2394, %v2627
        %2632 = vst.msk [vmem:[%s586] sm:$0xff] %vm598, %v2630
        %2633 = vst.msk [vmem:[%s586 + $0x8] sm:$0xff] %vm598, %v2631
        %s2634 = sand.u32 %s403, 1
        %s2635 = scalar_lea.sflag [#allocation4], %s2634
        %s2636 = sand.u32 %s403, 1
        %s2637 = smul.addr %s2636, 16
        %s2638 = scalar_lea.vmem [#allocation8], %s2637
        // Predicated region
        $region101: #{tpu_custom_call.1} parent=87 // pred_check
          %p2639 = pneg %p413
        $region102: #{tpu_custom_call.1} parent=87 // pred_check_branch
          %2641 = sbr.rel (%p2639) target = $region104
        $region103: #{tpu_custom_call.1} parent=87 // pred_region
          %s2642 = smul.u32 2, %s33
          %s2644 = ssub.s32 256, 256
          %2645 = vsyncadd %s2635, %s2644
          %s2646 = smul.addr %s2642, 128
          %s2647 = scalar_lea.hbm %s17, %s2646
          %s2648 = sshll.u32 %s2638, 4
          %s2649 = int_to_ptr.vmem [resolvable:$true] %s2648
          %2654 = dma.vmem_to_hbm [thread:$0]  %s2649, 256, %s2647, %s2635, 128, 128, 8
        $region104: #{tpu_custom_call.1} parent=87 // pred_fallthru
          _
      $region88: #{tpu_custom_call.1} parent=5 // pred_fallthru
        _
      %p2655 = scmp.le.s32.totalorder 2, %s28
      // Predicated region
      $region105: #{tpu_custom_call.1} parent=5 // pred_check
        %p2656 = pneg %p2655
      $region106: #{tpu_custom_call.1} parent=5 // pred_check_branch
        %2658 = sbr.rel (%p2656) target = $region108
      $region107: #{tpu_custom_call.1} parent=5 // pred_region
        %s2659 = ssub.s32 %s28, 2
        // Predicated region
        $region109: #{tpu_custom_call.1} parent=107 // pred_check
          %p2660 = pneg %p419
        $region110: #{tpu_custom_call.1} parent=107 // pred_check_branch
          %2662 = sbr.rel (%p2660) target = $region112
        $region111: #{tpu_custom_call.1} parent=107 // pred_region
          %s2663 = sand.u32 %s404, 1
          %s2664 = scalar_lea.sflag [#allocation4], %s2663
          %s2665 = sand.u32 %s404, 1
          %s2666 = smul.addr %s2665, 16
          %s2667 = scalar_lea.vmem [#allocation8], %s2666
          %2668 = dma.done %s2664, 256
        $region112: #{tpu_custom_call.1} parent=107 // pred_fallthru
          _
      $region108: #{tpu_custom_call.1} parent=5 // pred_fallthru
        _
    $region6: #{tpu_custom_call.1} parent=1 // loop_footer
      %s32 = sadd.s32 1, %s28
    $region7: #{tpu_custom_call.1} parent=1 // loop_footer_branch
      %27 = sbr.rel target = $region3
    $region8: #{tpu_custom_call.1} parent=1 // loop_exit
      _
    %2669 = vsyncpa [#allocation3], 1
    %s2670 = scalar_lea.sflag [#allocation3], 1
    %2671 = vsyncpa %s2670, 1
    %2672 = vsyncpa [#allocation6], 1
    %2673 = vsyncpa [#allocation4], 1
    %s2674 = scalar_lea.sflag [#allocation4], 1
    %2675 = vsyncpa %s2674, 1

</llo_original>
